<compile_context>
chip_gen: v7x
topology: tpu7x:2x2x1
jax: 0.10.0
libtpu: 0.0.40
codegen_flags: <defaults>
</compile_context>

<pallas_src>
import numpy as np
import jax
import jax.numpy as jnp
from jax.experimental import pallas as pl
from jax.experimental.pallas import tpu as pltpu


CONV_CH = [3, 64, 128, 256, 512]
MLP_CH = [512, 256, 64, 1]
LRELU_SLOPE = 0.01          # PyTorch LeakyReLU default negative_slope
BN_EPS = 1e-5

PARAM_ORDER = ('w1', 'b1', 'w2', 'b2', 'w3', 'b3', 'w4', 'b4',
               'mw1', 'mb1', 'mw2', 'mb2', 'mw3', 'mb3')


# ----------------------------------------------------------------------------
# Deterministic synthetic parameters (PyTorch layout) + inference-mode BN fold
# ----------------------------------------------------------------------------
def init_params(key):
    keys = iter(jax.random.split(key, 64))

    def nrm(shape, s=0.1):
        return s * jax.random.normal(next(keys), shape, dtype=jnp.float32)

    def bn(C):
        gamma = 1.0 + 0.1 * jax.random.normal(next(keys), (C,), dtype=jnp.float32)
        beta = 0.1 * jax.random.normal(next(keys), (C,), dtype=jnp.float32)
        mean = 0.1 * jax.random.normal(next(keys), (C,), dtype=jnp.float32)
        var = 1.0 + 0.1 * jnp.abs(jax.random.normal(next(keys), (C,), dtype=jnp.float32))
        return gamma, beta, mean, var

    P = {}
    for i in range(4):
        cin, cout = CONV_CH[i], CONV_CH[i + 1]
        P[f'c{i+1}_w'] = nrm((cout, cin, 1))        # Conv1d weight [Cout, Cin, 1]
        P[f'c{i+1}_b'] = nrm((cout,))
        P[f'bn{i+1}'] = bn(cout)
    for i in range(3):
        cin, cout = MLP_CH[i], MLP_CH[i + 1]
        P[f'm{i+1}_w'] = nrm((cout, cin))           # Linear weight [Cout, Cin]
        P[f'm{i+1}_b'] = nrm((cout,))
    return P


def fold_params(P):
    """Fold eval-mode BatchNorm into the 1x1 convs; transpose weights to [Cin, Cout]."""
    # TODO(synk): BatchNorm training-mode batch statistics are not modeled; BN is
    # evaluated in inference mode (running stats folded into scale/shift).
    fp = {}
    for i in range(4):
        W = P[f'c{i+1}_w'][:, :, 0]                          # [Cout, Cin]
        b = P[f'c{i+1}_b']
        gamma, beta, mean, var = P[f'bn{i+1}']
        s = gamma / jnp.sqrt(var + BN_EPS)
        fp[f'w{i+1}'] = (W * s[:, None]).T                   # [Cin, Cout]
        fp[f'b{i+1}'] = ((b - mean) * s + beta)[None, :]     # [1, Cout]
    fp['mw1'] = P['m1_w'].T                                  # [512, 256]
    fp['mb1'] = P['m1_b'][None, :]                           # [1, 256]
    fp['mw2'] = P['m2_w'].T                                  # [256, 64]
    fp['mb2'] = P['m2_b'][None, :]                           # [1, 64]
    fp['mw3'] = P['m3_w']                                    # [1, 64]  (row form)
    fp['mb3'] = P['m3_b'][None, :]                           # [1, 1]
    return fp


# ----------------------------------------------------------------------------
# Fused Pallas kernel: conv stack + running maxpool + MLP head
#   grid = (batch, point_tiles); point tiles accumulate into a [1, 512] scratch.
# ----------------------------------------------------------------------------
def _pdisc_kernel(x_ref,                       # [1, TN, 3]
                  w1, b1, w2, b2, w3, b3, w4, b4,
                  mw1, mb1, mw2, mb2, mw3, mb3,
                  out_ref,                     # [1, 1, 1]
                  vmax_ref):                   # VMEM scratch [1, 512]
    t = pl.program_id(1)
    nt = pl.num_programs(1)

    def lrelu(v):
        return jnp.maximum(v, LRELU_SLOPE * v)

    h = x_ref[0]                                                                     # [TN, 3]
    # 1x1 Conv + (folded) BN + LeakyReLU chain, each as one big MXU matmul.
    h = lrelu(jnp.dot(h, w1[...], preferred_element_type=jnp.float32) + b1[...])     # [TN, 64]
    h = lrelu(jnp.dot(h, w2[...], preferred_element_type=jnp.float32) + b2[...])     # [TN, 128]
    h = lrelu(jnp.dot(h, w3[...], preferred_element_type=jnp.float32) + b3[...])     # [TN, 256]
    h = lrelu(jnp.dot(h, w4[...], preferred_element_type=jnp.float32) + b4[...])     # [TN, 512]

    # MaxPool1d over points: per-tile sublane reduce, accumulated across point tiles.
    tile_max = jnp.max(h, axis=0, keepdims=True)                                     # [1, 512]

    @pl.when(t == 0)
    def _():
        vmax_ref[...] = tile_max

    @pl.when(t > 0)
    def _():
        vmax_ref[...] = jnp.maximum(vmax_ref[...], tile_max)

    # On the last point tile of this batch element: MLP head 512 -> 256 -> 64 -> 1.
    @pl.when(t == nt - 1)
    def _():
        v = vmax_ref[...]                                                            # [1, 512]
        v = lrelu(jnp.dot(v, mw1[...], preferred_element_type=jnp.float32) + mb1[...])  # [1, 256]
        v = lrelu(jnp.dot(v, mw2[...], preferred_element_type=jnp.float32) + mb2[...])  # [1, 64]
        y = jnp.sum(v * mw3[...], axis=-1, keepdims=True) + mb3[...]                 # [1, 1]
        out_ref[0] = y


def _pick_point_tile(N):
    for t in (1024, 512, 256, 128, 64, 32, 16, 8):
        if N % t == 0:
            return t
    return N


def point_discriminator_forward(x, fp):
    """x: [B, 3, N] (N must equal num_point, as the PyTorch module requires)."""
    B, _, N = x.shape
    TN = _pick_point_tile(N)
    n_tiles = N // TN
    x_rows = jnp.transpose(x, (0, 2, 1))       # [B, N, 3]: points on sublanes

    args = [fp[k] for k in PARAM_ORDER]
    in_specs = [pl.BlockSpec((1, TN, 3), lambda b, t: (b, t, 0))]
    for a in args:
        in_specs.append(pl.BlockSpec(a.shape, lambda b, t, _n=a.ndim: (0,) * _n))

    out = pl.pallas_call(
        _pdisc_kernel,
        out_shape=jax.ShapeDtypeStruct((B, 1, 1), jnp.float32),
        grid=(B, n_tiles),
        in_specs=in_specs,
        out_specs=pl.BlockSpec((1, 1, 1), lambda b, t: (b, 0, 0)),
        scratch_shapes=[pltpu.VMEM((1, 512), jnp.float32)],
        compiler_params=pltpu.CompilerParams(
            dimension_semantics=("parallel", "arbitrary")),
    )(x_rows, *args)
    return out.reshape(B, 1)


# ----------------------------------------------------------------------------
# Pure-JAX reference following the PyTorch op sequence (for verification)
# ----------------------------------------------------------------------------
def reference_forward(x, P):
    hp = jax.lax.Precision.HIGHEST

    def lrelu(t):
        return jnp.where(t >= 0, t, LRELU_SLOPE * t)

    h = x                                                              # [B, 3, N]
    for i in range(1, 5):
        W = P[f'c{i}_w'][:, :, 0]
        b = P[f'c{i}_b']
        gamma, beta, mean, var = P[f'bn{i}']
        y = jnp.einsum('oc,bcn->bon', W, h, precision=hp) + b[None, :, None]
        y = (y - mean[None, :, None]) / jnp.sqrt(var + BN_EPS)[None, :, None] \
            * gamma[None, :, None] + beta[None, :, None]
        h = lrelu(y)
    v = jnp.max(h, axis=2)                                             # MaxPool1d(num_point)
    v = lrelu(jnp.einsum('bi,oi->bo', v, P['m1_w'], precision=hp) + P['m1_b'][None, :])
    v = lrelu(jnp.einsum('bi,oi->bo', v, P['m2_w'], precision=hp) + P['m2_b'][None, :])
    v = jnp.einsum('bi,oi->bo', v, P['m3_w'], precision=hp) + P['m3_b'][None, :]
    return v                                                           # [B, 1]


# ----------------------------------------------------------------------------
if __name__ == "__main__":
    key = jax.random.PRNGKey(0)
    B, num_point = 2, 256            # small, consistent shapes: x is [B, 3, num_point]
    kx, kp = jax.random.split(key)
    x = jax.random.normal(kx, (B, 3, num_point), dtype=jnp.float32)
    P = init_params(kp)
    fp = fold_params(P)

    out = point_discriminator_forward(x, fp)
    out = jax.block_until_ready(out)
    assert out.shape == (B, 1), out.shape

    ref = jax.block_until_ready(reference_forward(x, P))
    err = float(np.max(np.abs(np.asarray(out) - np.asarray(ref))))
    if not np.allclose(np.asarray(out), np.asarray(ref), rtol=2e-3, atol=2e-3):
        raise AssertionError(f"Pallas output mismatch vs reference, max abs err {err}")

    print("KERNEL_OK")
</pallas_src>

<mosaic_0001>
module attributes {stable_mosaic.version = 11 : i64} {
  func.func @_pdisc_kernel(%arg0: i32, %arg1: i32, %arg2: memref<1x256x3xf32, #tpu.memory_space<vmem>>, %arg3: memref<3x64xf32, #tpu.memory_space<vmem>>, %arg4: memref<1x64xf32, #tpu.memory_space<vmem>>, %arg5: memref<64x128xf32, #tpu.memory_space<vmem>>, %arg6: memref<1x128xf32, #tpu.memory_space<vmem>>, %arg7: memref<128x256xf32, #tpu.memory_space<vmem>>, %arg8: memref<1x256xf32, #tpu.memory_space<vmem>>, %arg9: memref<256x512xf32, #tpu.memory_space<vmem>>, %arg10: memref<1x512xf32, #tpu.memory_space<vmem>>, %arg11: memref<512x256xf32, #tpu.memory_space<vmem>>, %arg12: memref<1x256xf32, #tpu.memory_space<vmem>>, %arg13: memref<256x64xf32, #tpu.memory_space<vmem>>, %arg14: memref<1x64xf32, #tpu.memory_space<vmem>>, %arg15: memref<1x64xf32, #tpu.memory_space<vmem>>, %arg16: memref<1x1xf32, #tpu.memory_space<vmem>>, %arg17: memref<1x1x1xf32, #tpu.memory_space<vmem>>, %arg18: memref<1x512xf32, #tpu.memory_space<vmem>>) attributes {dimension_semantics = [#tpu.dimension_semantics<parallel>, #tpu.dimension_semantics<arbitrary>], iteration_bounds = array<i64: 2, 1>, scalar_prefetch = 0 : i64, scratch_operands = 1 : i64, tpu.core_type = #tpu.core_type<tc>, window_params = [{transform_indices = @transform_0, window_bounds = array<i64: 1, 256, 3>}, {pipeline_mode = #tpu.pipeline_mode<synchronous>, transform_indices = @transform_1, window_bounds = array<i64: 3, 64>}, {pipeline_mode = #tpu.pipeline_mode<synchronous>, transform_indices = @transform_2, window_bounds = array<i64: 1, 64>}, {pipeline_mode = #tpu.pipeline_mode<synchronous>, transform_indices = @transform_3, window_bounds = array<i64: 64, 128>}, {pipeline_mode = #tpu.pipeline_mode<synchronous>, transform_indices = @transform_4, window_bounds = array<i64: 1, 128>}, {pipeline_mode = #tpu.pipeline_mode<synchronous>, transform_indices = @transform_5, window_bounds = array<i64: 128, 256>}, {pipeline_mode = #tpu.pipeline_mode<synchronous>, transform_indices = @transform_6, window_bounds = array<i64: 1, 256>}, {pipeline_mode = #tpu.pipeline_mode<synchronous>, transform_indices = @transform_7, window_bounds = array<i64: 256, 512>}, {pipeline_mode = #tpu.pipeline_mode<synchronous>, transform_indices = @transform_8, window_bounds = array<i64: 1, 512>}, {pipeline_mode = #tpu.pipeline_mode<synchronous>, transform_indices = @transform_9, window_bounds = array<i64: 512, 256>}, {pipeline_mode = #tpu.pipeline_mode<synchronous>, transform_indices = @transform_10, window_bounds = array<i64: 1, 256>}, {pipeline_mode = #tpu.pipeline_mode<synchronous>, transform_indices = @transform_11, window_bounds = array<i64: 256, 64>}, {pipeline_mode = #tpu.pipeline_mode<synchronous>, transform_indices = @transform_12, window_bounds = array<i64: 1, 64>}, {pipeline_mode = #tpu.pipeline_mode<synchronous>, transform_indices = @transform_13, window_bounds = array<i64: 1, 64>}, {pipeline_mode = #tpu.pipeline_mode<synchronous>, transform_indices = @transform_14, window_bounds = array<i64: 1, 1>}, {transform_indices = @transform_15, window_bounds = array<i64: 1, 1, 1>}]} {
    %c0 = arith.constant 0 : index
    %c0_0 = arith.constant 0 : index
    %c0_1 = arith.constant 0 : index
    %0 = vector.load %arg2[%c0, %c0_0, %c0_1] : memref<1x256x3xf32, #tpu.memory_space<vmem>>, vector<1x256x3xf32>
    %1 = vector.shape_cast %0 : vector<1x256x3xf32> to vector<256x3xf32>
    %c0_2 = arith.constant 0 : index
    %c0_3 = arith.constant 0 : index
    %2 = vector.load %arg3[%c0_2, %c0_3] : memref<3x64xf32, #tpu.memory_space<vmem>>, vector<3x64xf32>
    %cst = arith.constant dense<0.000000e+00> : vector<256x64xf32>
    %3 = tpu.matmul %1, %2, %cst {dimension_numbers = #tpu.dot_dimension_numbers<[1], [0], [0], [1], [0, 0, 1, 1], [], []>} : vector<256x3xf32>, vector<3x64xf32>, vector<256x64xf32> -> vector<256x64xf32>
    %c0_4 = arith.constant 0 : index
    %c0_5 = arith.constant 0 : index
    %4 = vector.load %arg4[%c0_4, %c0_5] : memref<1x64xf32, #tpu.memory_space<vmem>>, vector<1x64xf32>
    %5 = vector.broadcast %4 : vector<1x64xf32> to vector<256x64xf32>
    %6 = arith.addf %3, %5 : vector<256x64xf32>
    %cst_6 = arith.constant 0.00999999977 : f32
    %7 = vector.broadcast %cst_6 : f32 to vector<256x64xf32>
    %8 = arith.mulf %7, %6 : vector<256x64xf32>
    %9 = arith.maximumf %6, %8 : vector<256x64xf32>
    %c0_7 = arith.constant 0 : index
    %c0_8 = arith.constant 0 : index
    %10 = vector.load %arg5[%c0_7, %c0_8] : memref<64x128xf32, #tpu.memory_space<vmem>>, vector<64x128xf32>
    %cst_9 = arith.constant dense<0.000000e+00> : vector<256x128xf32>
    %11 = tpu.matmul %9, %10, %cst_9 {dimension_numbers = #tpu.dot_dimension_numbers<[1], [0], [0], [1], [0, 0, 1, 1], [], []>} : vector<256x64xf32>, vector<64x128xf32>, vector<256x128xf32> -> vector<256x128xf32>
    %c0_10 = arith.constant 0 : index
    %c0_11 = arith.constant 0 : index
    %12 = vector.load %arg6[%c0_10, %c0_11] : memref<1x128xf32, #tpu.memory_space<vmem>>, vector<1x128xf32>
    %13 = vector.broadcast %12 : vector<1x128xf32> to vector<256x128xf32>
    %14 = arith.addf %11, %13 : vector<256x128xf32>
    %cst_12 = arith.constant 0.00999999977 : f32
    %15 = vector.broadcast %cst_12 : f32 to vector<256x128xf32>
    %16 = arith.mulf %15, %14 : vector<256x128xf32>
    %17 = arith.maximumf %14, %16 : vector<256x128xf32>
    %c0_13 = arith.constant 0 : index
    %c0_14 = arith.constant 0 : index
    %18 = vector.load %arg7[%c0_13, %c0_14] : memref<128x256xf32, #tpu.memory_space<vmem>>, vector<128x256xf32>
    %cst_15 = arith.constant dense<0.000000e+00> : vector<256x256xf32>
    %19 = tpu.matmul %17, %18, %cst_15 {dimension_numbers = #tpu.dot_dimension_numbers<[1], [0], [0], [1], [0, 0, 1, 1], [], []>} : vector<256x128xf32>, vector<128x256xf32>, vector<256x256xf32> -> vector<256x256xf32>
    %c0_16 = arith.constant 0 : index
    %c0_17 = arith.constant 0 : index
    %20 = vector.load %arg8[%c0_16, %c0_17] : memref<1x256xf32, #tpu.memory_space<vmem>>, vector<1x256xf32>
    %21 = vector.broadcast %20 : vector<1x256xf32> to vector<256x256xf32>
    %22 = arith.addf %19, %21 : vector<256x256xf32>
    %cst_18 = arith.constant 0.00999999977 : f32
    %23 = vector.broadcast %cst_18 : f32 to vector<256x256xf32>
    %24 = arith.mulf %23, %22 : vector<256x256xf32>
    %25 = arith.maximumf %22, %24 : vector<256x256xf32>
    %c0_19 = arith.constant 0 : index
    %c0_20 = arith.constant 0 : index
    %26 = vector.load %arg9[%c0_19, %c0_20] : memref<256x512xf32, #tpu.memory_space<vmem>>, vector<256x512xf32>
    %cst_21 = arith.constant dense<0.000000e+00> : vector<256x512xf32>
    %27 = tpu.matmul %25, %26, %cst_21 {dimension_numbers = #tpu.dot_dimension_numbers<[1], [0], [0], [1], [0, 0, 1, 1], [], []>} : vector<256x256xf32>, vector<256x512xf32>, vector<256x512xf32> -> vector<256x512xf32>
    %c0_22 = arith.constant 0 : index
    %c0_23 = arith.constant 0 : index
    %28 = vector.load %arg10[%c0_22, %c0_23] : memref<1x512xf32, #tpu.memory_space<vmem>>, vector<1x512xf32>
    %29 = vector.broadcast %28 : vector<1x512xf32> to vector<256x512xf32>
    %30 = arith.addf %27, %29 : vector<256x512xf32>
    %cst_24 = arith.constant 0.00999999977 : f32
    %31 = vector.broadcast %cst_24 : f32 to vector<256x512xf32>
    %32 = arith.mulf %31, %30 : vector<256x512xf32>
    %33 = arith.maximumf %30, %32 : vector<256x512xf32>
    %cst_25 = arith.constant dense<0xFF800000> : vector<512xf32>
    %34 = vector.multi_reduction <maximumf>, %33, %cst_25 [0] : vector<256x512xf32> to vector<512xf32>
    %35 = vector.shape_cast %34 : vector<512xf32> to vector<1x512xf32>
    %c0_i32 = arith.constant 0 : i32
    %36 = arith.cmpi eq, %arg1, %c0_i32 : i32
    %37 = arith.extui %36 : i1 to i32
    %c0_i32_26 = arith.constant 0 : i32
    %38 = arith.cmpi ne, %37, %c0_i32_26 : i32
    scf.if %38 {
      %c0_31 = arith.constant 0 : index
      %c0_32 = arith.constant 0 : index
      %45 = vector.load %arg18[%c0_31, %c0_32] : memref<1x512xf32, #tpu.memory_space<vmem>>, vector<1x512xf32>
      tpu.vector_store %arg18[%c0_31, %c0_32], %35 {strides = array<i32>} : memref<1x512xf32, #tpu.memory_space<vmem>>, vector<1x512xf32>,
    } else {
    }
    %c0_i32_27 = arith.constant 0 : i32
    %39 = arith.cmpi sgt, %arg1, %c0_i32_27 : i32
    %40 = arith.extui %39 : i1 to i32
    %c0_i32_28 = arith.constant 0 : i32
    %41 = arith.cmpi ne, %40, %c0_i32_28 : i32
    scf.if %41 {
      %c0_31 = arith.constant 0 : index
      %c0_32 = arith.constant 0 : index
      %45 = vector.load %arg18[%c0_31, %c0_32] : memref<1x512xf32, #tpu.memory_space<vmem>>, vector<1x512xf32>
      %46 = arith.maximumf %45, %35 : vector<1x512xf32>
      %c0_33 = arith.constant 0 : index
      %c0_34 = arith.constant 0 : index
      %47 = vector.load %arg18[%c0_33, %c0_34] : memref<1x512xf32, #tpu.memory_space<vmem>>, vector<1x512xf32>
      tpu.vector_store %arg18[%c0_33, %c0_34], %46 {strides = array<i32>} : memref<1x512xf32, #tpu.memory_space<vmem>>, vector<1x512xf32>,
    } else {
    }
    %c0_i32_29 = arith.constant 0 : i32
    %42 = arith.cmpi eq, %arg1, %c0_i32_29 : i32
    %43 = arith.extui %42 : i1 to i32
    %c0_i32_30 = arith.constant 0 : i32
    %44 = arith.cmpi ne, %43, %c0_i32_30 : i32
    scf.if %44 {
      %c0_31 = arith.constant 0 : index
      %c0_32 = arith.constant 0 : index
      %45 = vector.load %arg18[%c0_31, %c0_32] : memref<1x512xf32, #tpu.memory_space<vmem>>, vector<1x512xf32>
      %c0_33 = arith.constant 0 : index
      %c0_34 = arith.constant 0 : index
      %46 = vector.load %arg11[%c0_33, %c0_34] : memref<512x256xf32, #tpu.memory_space<vmem>>, vector<512x256xf32>
      %cst_35 = arith.constant dense<0.000000e+00> : vector<1x256xf32>
      %47 = tpu.matmul %45, %46, %cst_35 {dimension_numbers = #tpu.dot_dimension_numbers<[1], [0], [0], [1], [0, 0, 1, 1], [], []>} : vector<1x512xf32>, vector<512x256xf32>, vector<1x256xf32> -> vector<1x256xf32>
      %c0_36 = arith.constant 0 : index
      %c0_37 = arith.constant 0 : index
      %48 = vector.load %arg12[%c0_36, %c0_37] : memref<1x256xf32, #tpu.memory_space<vmem>>, vector<1x256xf32>
      %49 = arith.addf %47, %48 : vector<1x256xf32>
      %cst_38 = arith.constant 0.00999999977 : f32
      %50 = vector.broadcast %cst_38 : f32 to vector<1x256xf32>
      %51 = arith.mulf %50, %49 : vector<1x256xf32>
      %52 = arith.maximumf %49, %51 : vector<1x256xf32>
      %c0_39 = arith.constant 0 : index
      %c0_40 = arith.constant 0 : index
      %53 = vector.load %arg13[%c0_39, %c0_40] : memref<256x64xf32, #tpu.memory_space<vmem>>, vector<256x64xf32>
      %cst_41 = arith.constant dense<0.000000e+00> : vector<1x64xf32>
      %54 = tpu.matmul %52, %53, %cst_41 {dimension_numbers = #tpu.dot_dimension_numbers<[1], [0], [0], [1], [0, 0, 1, 1], [], []>} : vector<1x256xf32>, vector<256x64xf32>, vector<1x64xf32> -> vector<1x64xf32>
      %c0_42 = arith.constant 0 : index
      %c0_43 = arith.constant 0 : index
      %55 = vector.load %arg14[%c0_42, %c0_43] : memref<1x64xf32, #tpu.memory_space<vmem>>, vector<1x64xf32>
      %56 = arith.addf %54, %55 : vector<1x64xf32>
      %cst_44 = arith.constant 0.00999999977 : f32
      %57 = vector.broadcast %cst_44 : f32 to vector<1x64xf32>
      %58 = arith.mulf %57, %56 : vector<1x64xf32>
      %59 = arith.maximumf %56, %58 : vector<1x64xf32>
      %c0_45 = arith.constant 0 : index
      %c0_46 = arith.constant 0 : index
      %60 = vector.load %arg15[%c0_45, %c0_46] : memref<1x64xf32, #tpu.memory_space<vmem>>, vector<1x64xf32>
      %61 = arith.mulf %59, %60 : vector<1x64xf32>
      %cst_47 = arith.constant dense<0.000000e+00> : vector<1xf32>
      %62 = vector.multi_reduction <add>, %61, %cst_47 [1] : vector<1x64xf32> to vector<1xf32>
      %63 = vector.shape_cast %62 : vector<1xf32> to vector<1x1xf32>
      %c0_48 = arith.constant 0 : index
      %c0_49 = arith.constant 0 : index
      %64 = vector.load %arg16[%c0_48, %c0_49] : memref<1x1xf32, #tpu.memory_space<vmem>>, vector<1x1xf32>
      %65 = arith.addf %63, %64 : vector<1x1xf32>
      %c0_50 = arith.constant 0 : index
      %c0_51 = arith.constant 0 : index
      %c0_52 = arith.constant 0 : index
      %66 = vector.load %arg17[%c0_50, %c0_51, %c0_52] : memref<1x1x1xf32, #tpu.memory_space<vmem>>, vector<1x1x1xf32>
      %67 = vector.shape_cast %66 : vector<1x1x1xf32> to vector<1x1xf32>
      %68 = vector.shape_cast %65 : vector<1x1xf32> to vector<1x1x1xf32>
      tpu.vector_store %arg17[%c0_50, %c0_51, %c0_52], %68 {strides = array<i32>} : memref<1x1x1xf32, #tpu.memory_space<vmem>>, vector<1x1x1xf32>,
    } else {
    }
    return
  }
  func.func @transform_0(%arg0: i32, %arg1: i32) -> (i32, i32, i32) {
    %c0_i32 = arith.constant 0 : i32
    %c0_i32_0 = arith.constant 0 : i32
    return %arg0, %arg1, %c0_i32 : i32, i32, i32
  }
  func.func @transform_1(%arg0: i32, %arg1: i32) -> (i32, i32) {
    %c0_i32 = arith.constant 0 : i32
    %c0_i32_0 = arith.constant 0 : i32
    %c0_i32_1 = arith.constant 0 : i32
    return %c0_i32, %c0_i32_0 : i32, i32
  }
  func.func @transform_2(%arg0: i32, %arg1: i32) -> (i32, i32) {
    %c0_i32 = arith.constant 0 : i32
    %c0_i32_0 = arith.constant 0 : i32
    %c0_i32_1 = arith.constant 0 : i32
    return %c0_i32, %c0_i32_0 : i32, i32
  }
  func.func @transform_3(%arg0: i32, %arg1: i32) -> (i32, i32) {
    %c0_i32 = arith.constant 0 : i32
    %c0_i32_0 = arith.constant 0 : i32
    %c0_i32_1 = arith.constant 0 : i32
    return %c0_i32, %c0_i32_0 : i32, i32
  }
  func.func @transform_4(%arg0: i32, %arg1: i32) -> (i32, i32) {
    %c0_i32 = arith.constant 0 : i32
    %c0_i32_0 = arith.constant 0 : i32
    %c0_i32_1 = arith.constant 0 : i32
    return %c0_i32, %c0_i32_0 : i32, i32
  }
  func.func @transform_5(%arg0: i32, %arg1: i32) -> (i32, i32) {
    %c0_i32 = arith.constant 0 : i32
    %c0_i32_0 = arith.constant 0 : i32
    %c0_i32_1 = arith.constant 0 : i32
    return %c0_i32, %c0_i32_0 : i32, i32
  }
  func.func @transform_6(%arg0: i32, %arg1: i32) -> (i32, i32) {
    %c0_i32 = arith.constant 0 : i32
    %c0_i32_0 = arith.constant 0 : i32
    %c0_i32_1 = arith.constant 0 : i32
    return %c0_i32, %c0_i32_0 : i32, i32
  }
  func.func @transform_7(%arg0: i32, %arg1: i32) -> (i32, i32) {
    %c0_i32 = arith.constant 0 : i32
    %c0_i32_0 = arith.constant 0 : i32
    %c0_i32_1 = arith.constant 0 : i32
    return %c0_i32, %c0_i32_0 : i32, i32
  }
  func.func @transform_8(%arg0: i32, %arg1: i32) -> (i32, i32) {
    %c0_i32 = arith.constant 0 : i32
    %c0_i32_0 = arith.constant 0 : i32
    %c0_i32_1 = arith.constant 0 : i32
    return %c0_i32, %c0_i32_0 : i32, i32
  }
  func.func @transform_9(%arg0: i32, %arg1: i32) -> (i32, i32) {
    %c0_i32 = arith.constant 0 : i32
    %c0_i32_0 = arith.constant 0 : i32
    %c0_i32_1 = arith.constant 0 : i32
    return %c0_i32, %c0_i32_0 : i32, i32
  }
  func.func @transform_10(%arg0: i32, %arg1: i32) -> (i32, i32) {
    %c0_i32 = arith.constant 0 : i32
    %c0_i32_0 = arith.constant 0 : i32
    %c0_i32_1 = arith.constant 0 : i32
    return %c0_i32, %c0_i32_0 : i32, i32
  }
  func.func @transform_11(%arg0: i32, %arg1: i32) -> (i32, i32) {
    %c0_i32 = arith.constant 0 : i32
    %c0_i32_0 = arith.constant 0 : i32
    %c0_i32_1 = arith.constant 0 : i32
    return %c0_i32, %c0_i32_0 : i32, i32
  }
  func.func @transform_12(%arg0: i32, %arg1: i32) -> (i32, i32) {
    %c0_i32 = arith.constant 0 : i32
    %c0_i32_0 = arith.constant 0 : i32
    %c0_i32_1 = arith.constant 0 : i32
    return %c0_i32, %c0_i32_0 : i32, i32
  }
  func.func @transform_13(%arg0: i32, %arg1: i32) -> (i32, i32) {
    %c0_i32 = arith.constant 0 : i32
    %c0_i32_0 = arith.constant 0 : i32
    %c0_i32_1 = arith.constant 0 : i32
    return %c0_i32, %c0_i32_0 : i32, i32
  }
  func.func @transform_14(%arg0: i32, %arg1: i32) -> (i32, i32) {
    %c0_i32 = arith.constant 0 : i32
    %c0_i32_0 = arith.constant 0 : i32
    %c0_i32_1 = arith.constant 0 : i32
    return %c0_i32, %c0_i32_0 : i32, i32
  }
  func.func @transform_15(%arg0: i32, %arg1: i32) -> (i32, i32, i32) {
    %c0_i32 = arith.constant 0 : i32
    %c0_i32_0 = arith.constant 0 : i32
    %c0_i32_1 = arith.constant 0 : i32
    return %arg0, %c0_i32, %c0_i32_0 : i32, i32, i32
  }
}

</mosaic_0001>

<llo_original>
// kernel: tpu_custom_call.1
$region0: #{tpu_custom_call.1}
  #allocation0 [shape = 'u32[]', space=smem, size = 0x4, offset = 0x4, fixed_abs, tag = 'smem constant byte address 0x4 - core index']
  #allocation1 [shape = 'u32[144,128]{1,0:T(1,128)}', space=vmem, size = 0x12000, scoped, tag = 'internal scratch']
  #allocation2 [shape = 'f32[1,512]{1,0:T(1,128)}', space=vmem, size = 0x800, scoped, tag = 'scratch operand']
  #allocation3 [shape = 'f32[1,1]{1,0:T(1,128)S(1)}', space=vmem, size = 0x200, scoped, tag = 'scoped memory for tpu_custom_call.1']
  %s0 = inlined_call_operand.vmem [shape: f32[2,256,3], index: 0, kind: input, shape index: {}]
  %s1 = inlined_call_operand.vmem [shape: f32[3,64], index: 1, kind: input, shape index: {}]
  %s2 = inlined_call_operand.vmem [shape: f32[1,64], index: 2, kind: input, shape index: {}]
  %s3 = inlined_call_operand.vmem [shape: f32[64,128], index: 3, kind: input, shape index: {}]
  %s4 = inlined_call_operand.vmem [shape: f32[1,128], index: 4, kind: input, shape index: {}]
  %s5 = inlined_call_operand.vmem [shape: f32[128,256], index: 5, kind: input, shape index: {}]
  %s6 = inlined_call_operand.vmem [shape: f32[1,256], index: 6, kind: input, shape index: {}]
  %s7 = inlined_call_operand.hbm [shape: f32[256,512], index: 7, kind: input, shape index: {}]
  %s8 = inlined_call_operand.vmem [shape: f32[1,512], index: 8, kind: input, shape index: {}]
  %s9 = inlined_call_operand.hbm [shape: f32[512,256], index: 9, kind: input, shape index: {}]
  %s10 = inlined_call_operand.vmem [shape: f32[1,256], index: 10, kind: input, shape index: {}]
  %s11 = inlined_call_operand.vmem [shape: f32[256,64], index: 11, kind: input, shape index: {}]
  %s12 = inlined_call_operand.vmem [shape: f32[1,64], index: 12, kind: input, shape index: {}]
  %s13 = inlined_call_operand.vmem [shape: f32[1,64], index: 13, kind: input, shape index: {}]
  %s14 = inlined_call_operand.<no memory space> [shape: f32[1,1], index: 14, kind: input, shape index: {}]
  %s15 = inlined_call_operand.vmem [shape: f32[2,1,1], index: 15, kind: output, shape index: {}]
  %s16 = sld [smem:[#allocation0]]
  $region113: #{tpu_custom_call.1} parent=0
    _
  %s18 = ssub.s32 1, %s16
  %s19 = scalar_select 0, %s18, %s16
  %v20 = vstv %s14
  %21 = vst [vmem:[#allocation3] sm:$0x1] %v20
  $region1: #{tpu_custom_call.1} parent=0
    #allocation4 [shape = 'u8[524288]{0}', space=vmem, size = 0x80000, scoped, tag = 'input window, operand 7, single buffered']
    #allocation5 [shape = 's32[2]{0}', space=sflag, size = 0x8, scoped, tag = 'scoped memory for tpu_custom_call.1']
    #allocation6 [shape = 'u8[524288]{0}', space=vmem, size = 0x80000, scoped, tag = 'input window, operand 9, single buffered']
    #allocation7 [shape = 's32[1]{0}', space=sflag, size = 0x4, scoped, tag = 'scoped memory for tpu_custom_call.1']
    %22 = vsyncpa [#allocation5], 0
    %23 = vsyncpa [#allocation7], 0
    loop: start=0, step=1, limit=4
    $region2: #{tpu_custom_call.1} parent=1 // loop_pre_header
      _
    $region3: #{tpu_custom_call.1} parent=1 // loop_header
      %s25 = sphi 0, %s29
      %p26 = scmp.ge.s32.totalorder %s25, 4
      %s32 = sphi 0, %s44
      %s33 = sphi 0, %s40
      %s34 = sphi 0, %s32
      %s35 = sphi 0, %s33
      %s36 = sphi 0, %s34
      %s37 = sphi 0, %s35
      %s49 = sphi 0, %s51
      %s52 = sphi 0, %s49
      %s53 = sphi 0, %s52
      %s69 = sphi 0, %s53
      %s73 = sphi 0, %s73
      %s75 = sphi 0, %s73
      %s76 = sphi 0, %s75
      %s90 = sphi 0, %s76
      %s94 = sphi 0, %s94
      %s96 = sphi 0, %s94
      %s97 = sphi 0, %s96
      %s111 = sphi 0, %s97
      %s115 = sphi 0, %s115
      %s117 = sphi 0, %s115
      %s118 = sphi 0, %s117
      %s132 = sphi 0, %s118
      %s136 = sphi 0, %s136
      %s138 = sphi 0, %s136
      %s139 = sphi 0, %s138
      %s153 = sphi 0, %s139
      %s157 = sphi 0, %s157
      %s159 = sphi 0, %s157
      %s160 = sphi 0, %s159
      %s174 = sphi 0, %s160
      %s178 = sphi 0, %s178
      %s180 = sphi 0, %s178
      %s181 = sphi 0, %s180
      %s195 = sphi 0, %s181
      %s199 = sphi 0, %s199
      %s201 = sphi 0, %s199
      %s202 = sphi 0, %s201
      %s216 = sphi 0, %s202
      %s220 = sphi 0, %s220
      %s222 = sphi 0, %s220
      %s223 = sphi 0, %s222
      %s237 = sphi 0, %s223
      %s241 = sphi 0, %s241
      %s243 = sphi 0, %s241
      %s244 = sphi 0, %s243
      %s258 = sphi 0, %s244
      %s262 = sphi 0, %s262
      %s264 = sphi 0, %s262
      %s265 = sphi 0, %s264
      %s279 = sphi 0, %s265
      %s283 = sphi 0, %s283
      %s285 = sphi 0, %s283
      %s286 = sphi 0, %s285
      %s300 = sphi 0, %s286
      %s304 = sphi 0, %s304
      %s306 = sphi 0, %s304
      %s307 = sphi 0, %s306
      %s321 = sphi 0, %s307
      %s325 = sphi 0, %s325
      %s327 = sphi 0, %s325
      %s328 = sphi 0, %s327
      %s342 = sphi 0, %s328
      %s346 = sphi 0, %s346
      %s348 = sphi 0, %s346
      %s349 = sphi 0, %s348
      %s363 = sphi 0, %s349
      %s369 = sphi 0, %s371
      %s372 = sphi 0, %s369
      %s373 = sphi 0, %s372
      %s389 = sphi 0, %s373
    $region4: #{tpu_custom_call.1} parent=1 // loop_header_branch
      %28 = sbr.rel (%p26) target = $region8
    $region5: #{tpu_custom_call.1} parent=1 // loop_body
      %s30 = ssub.s32 %s25, 1
      %s31 = ssub.s32 %s25, 2
      %s38 = sadd.s32 1, %s33
      %p39 = scmp.ge.s32.totalorder %s38, 1
      %s40 = scalar_select %p39, 0, %s38
      %s41 = sadd.s32 1, %s32
      %s42 = scalar_select %p39, %s41, %s32
      %p43 = scmp.ge.s32.totalorder %s42, 2
      %s44 = scalar_select %p43, 0, %s42
      %s45 = ssub.s32 %s32, %s44
      %s46 = ssub.s32 %s33, %s40
      %s47 = sor.u32 %s45, %s46
      %p48 = scmp.eq.s32.totalorder %s47, 0
      %s50 = sadd.s32 %s49, 1
      %s51 = scalar_select %p48, %s49, %s50
      %p54 = pneg %p48
      %p55 = scmp.eq.s32.totalorder %s25, 1
      %p56 = por %p54, %p55
      %p57 = scmp.ne.s32.totalorder %s49, %s52
      %p58 = scmp.eq.s32.totalorder %s25, 0
      %p59 = por %p57, %p58
      %p60 = scmp.ne.s32.totalorder %s49, %s52
      %p61 = scmp.eq.s32.totalorder %s30, 1
      %p62 = por %p60, %p61
      %p63 = scmp.ne.s32.totalorder %s52, %s53
      %p64 = scmp.eq.s32.totalorder %s30, 0
      %p65 = por %p63, %p64
      %p66 = scmp.ne.s32.totalorder %s52, %s53
      %p67 = scmp.eq.s32.totalorder %s31, 1
      %p68 = por %p66, %p67
      %p70 = scmp.ne.s32.totalorder %s53, %s69
      %p71 = scmp.eq.s32.totalorder %s31, 0
      %p72 = por %p70, %p71
      %s74 = sadd.s32 %s73, 1
      %p77 = scmp.eq.s32.totalorder %s25, 1
      %p78 = scmp.ne.s32.totalorder %s73, %s75
      %p79 = scmp.eq.s32.totalorder %s25, 0
      %p80 = por %p78, %p79
      %p81 = scmp.ne.s32.totalorder %s73, %s75
      %p82 = scmp.eq.s32.totalorder %s30, 1
      %p83 = por %p81, %p82
      %p84 = scmp.ne.s32.totalorder %s75, %s76
      %p85 = scmp.eq.s32.totalorder %s30, 0
      %p86 = por %p84, %p85
      %p87 = scmp.ne.s32.totalorder %s75, %s76
      %p88 = scmp.eq.s32.totalorder %s31, 1
      %p89 = por %p87, %p88
      %p91 = scmp.ne.s32.totalorder %s76, %s90
      %p92 = scmp.eq.s32.totalorder %s31, 0
      %p93 = por %p91, %p92
      %s95 = sadd.s32 %s94, 1
      %p98 = scmp.eq.s32.totalorder %s25, 1
      %p99 = scmp.ne.s32.totalorder %s94, %s96
      %p100 = scmp.eq.s32.totalorder %s25, 0
      %p101 = por %p99, %p100
      %p102 = scmp.ne.s32.totalorder %s94, %s96
      %p103 = scmp.eq.s32.totalorder %s30, 1
      %p104 = por %p102, %p103
      %p105 = scmp.ne.s32.totalorder %s96, %s97
      %p106 = scmp.eq.s32.totalorder %s30, 0
      %p107 = por %p105, %p106
      %p108 = scmp.ne.s32.totalorder %s96, %s97
      %p109 = scmp.eq.s32.totalorder %s31, 1
      %p110 = por %p108, %p109
      %p112 = scmp.ne.s32.totalorder %s97, %s111
      %p113 = scmp.eq.s32.totalorder %s31, 0
      %p114 = por %p112, %p113
      %s116 = sadd.s32 %s115, 1
      %p119 = scmp.eq.s32.totalorder %s25, 1
      %p120 = scmp.ne.s32.totalorder %s115, %s117
      %p121 = scmp.eq.s32.totalorder %s25, 0
      %p122 = por %p120, %p121
      %p123 = scmp.ne.s32.totalorder %s115, %s117
      %p124 = scmp.eq.s32.totalorder %s30, 1
      %p125 = por %p123, %p124
      %p126 = scmp.ne.s32.totalorder %s117, %s118
      %p127 = scmp.eq.s32.totalorder %s30, 0
      %p128 = por %p126, %p127
      %p129 = scmp.ne.s32.totalorder %s117, %s118
      %p130 = scmp.eq.s32.totalorder %s31, 1
      %p131 = por %p129, %p130
      %p133 = scmp.ne.s32.totalorder %s118, %s132
      %p134 = scmp.eq.s32.totalorder %s31, 0
      %p135 = por %p133, %p134
      %s137 = sadd.s32 %s136, 1
      %p140 = scmp.eq.s32.totalorder %s25, 1
      %p141 = scmp.ne.s32.totalorder %s136, %s138
      %p142 = scmp.eq.s32.totalorder %s25, 0
      %p143 = por %p141, %p142
      %p144 = scmp.ne.s32.totalorder %s136, %s138
      %p145 = scmp.eq.s32.totalorder %s30, 1
      %p146 = por %p144, %p145
      %p147 = scmp.ne.s32.totalorder %s138, %s139
      %p148 = scmp.eq.s32.totalorder %s30, 0
      %p149 = por %p147, %p148
      %p150 = scmp.ne.s32.totalorder %s138, %s139
      %p151 = scmp.eq.s32.totalorder %s31, 1
      %p152 = por %p150, %p151
      %p154 = scmp.ne.s32.totalorder %s139, %s153
      %p155 = scmp.eq.s32.totalorder %s31, 0
      %p156 = por %p154, %p155
      %s158 = sadd.s32 %s157, 1
      %p161 = scmp.eq.s32.totalorder %s25, 1
      %p162 = scmp.ne.s32.totalorder %s157, %s159
      %p163 = scmp.eq.s32.totalorder %s25, 0
      %p164 = por %p162, %p163
      %p165 = scmp.ne.s32.totalorder %s157, %s159
      %p166 = scmp.eq.s32.totalorder %s30, 1
      %p167 = por %p165, %p166
      %p168 = scmp.ne.s32.totalorder %s159, %s160
      %p169 = scmp.eq.s32.totalorder %s30, 0
      %p170 = por %p168, %p169
      %p171 = scmp.ne.s32.totalorder %s159, %s160
      %p172 = scmp.eq.s32.totalorder %s31, 1
      %p173 = por %p171, %p172
      %p175 = scmp.ne.s32.totalorder %s160, %s174
      %p176 = scmp.eq.s32.totalorder %s31, 0
      %p177 = por %p175, %p176
      %s179 = sadd.s32 %s178, 1
      %p182 = scmp.eq.s32.totalorder %s25, 1
      %p183 = scmp.ne.s32.totalorder %s178, %s180
      %p184 = scmp.eq.s32.totalorder %s25, 0
      %p185 = por %p183, %p184
      %p186 = scmp.ne.s32.totalorder %s178, %s180
      %p187 = scmp.eq.s32.totalorder %s30, 1
      %p188 = por %p186, %p187
      %p189 = scmp.ne.s32.totalorder %s180, %s181
      %p190 = scmp.eq.s32.totalorder %s30, 0
      %p191 = por %p189, %p190
      %p192 = scmp.ne.s32.totalorder %s180, %s181
      %p193 = scmp.eq.s32.totalorder %s31, 1
      %p194 = por %p192, %p193
      %p196 = scmp.ne.s32.totalorder %s181, %s195
      %p197 = scmp.eq.s32.totalorder %s31, 0
      %p198 = por %p196, %p197
      %s200 = sadd.s32 %s199, 1
      %p203 = scmp.eq.s32.totalorder %s25, 1
      %p204 = scmp.ne.s32.totalorder %s199, %s201
      %p205 = scmp.eq.s32.totalorder %s25, 0
      %p206 = por %p204, %p205
      %p207 = scmp.ne.s32.totalorder %s199, %s201
      %p208 = scmp.eq.s32.totalorder %s30, 1
      %p209 = por %p207, %p208
      %p210 = scmp.ne.s32.totalorder %s201, %s202
      %p211 = scmp.eq.s32.totalorder %s30, 0
      %p212 = por %p210, %p211
      %p213 = scmp.ne.s32.totalorder %s201, %s202
      %p214 = scmp.eq.s32.totalorder %s31, 1
      %p215 = por %p213, %p214
      %p217 = scmp.ne.s32.totalorder %s202, %s216
      %p218 = scmp.eq.s32.totalorder %s31, 0
      %p219 = por %p217, %p218
      %s221 = sadd.s32 %s220, 1
      %p224 = scmp.eq.s32.totalorder %s25, 1
      %p225 = scmp.ne.s32.totalorder %s220, %s222
      %p226 = scmp.eq.s32.totalorder %s25, 0
      %p227 = por %p225, %p226
      %p228 = scmp.ne.s32.totalorder %s220, %s222
      %p229 = scmp.eq.s32.totalorder %s30, 1
      %p230 = por %p228, %p229
      %p231 = scmp.ne.s32.totalorder %s222, %s223
      %p232 = scmp.eq.s32.totalorder %s30, 0
      %p233 = por %p231, %p232
      %p234 = scmp.ne.s32.totalorder %s222, %s223
      %p235 = scmp.eq.s32.totalorder %s31, 1
      %p236 = por %p234, %p235
      %p238 = scmp.ne.s32.totalorder %s223, %s237
      %p239 = scmp.eq.s32.totalorder %s31, 0
      %p240 = por %p238, %p239
      %s242 = sadd.s32 %s241, 1
      %p245 = scmp.eq.s32.totalorder %s25, 1
      %p246 = scmp.ne.s32.totalorder %s241, %s243
      %p247 = scmp.eq.s32.totalorder %s25, 0
      %p248 = por %p246, %p247
      %p249 = scmp.ne.s32.totalorder %s241, %s243
      %p250 = scmp.eq.s32.totalorder %s30, 1
      %p251 = por %p249, %p250
      %p252 = scmp.ne.s32.totalorder %s243, %s244
      %p253 = scmp.eq.s32.totalorder %s30, 0
      %p254 = por %p252, %p253
      %p255 = scmp.ne.s32.totalorder %s243, %s244
      %p256 = scmp.eq.s32.totalorder %s31, 1
      %p257 = por %p255, %p256
      %p259 = scmp.ne.s32.totalorder %s244, %s258
      %p260 = scmp.eq.s32.totalorder %s31, 0
      %p261 = por %p259, %p260
      %s263 = sadd.s32 %s262, 1
      %p266 = scmp.eq.s32.totalorder %s25, 1
      %p267 = scmp.ne.s32.totalorder %s262, %s264
      %p268 = scmp.eq.s32.totalorder %s25, 0
      %p269 = por %p267, %p268
      %p270 = scmp.ne.s32.totalorder %s262, %s264
      %p271 = scmp.eq.s32.totalorder %s30, 1
      %p272 = por %p270, %p271
      %p273 = scmp.ne.s32.totalorder %s264, %s265
      %p274 = scmp.eq.s32.totalorder %s30, 0
      %p275 = por %p273, %p274
      %p276 = scmp.ne.s32.totalorder %s264, %s265
      %p277 = scmp.eq.s32.totalorder %s31, 1
      %p278 = por %p276, %p277
      %p280 = scmp.ne.s32.totalorder %s265, %s279
      %p281 = scmp.eq.s32.totalorder %s31, 0
      %p282 = por %p280, %p281
      %s284 = sadd.s32 %s283, 1
      %p287 = scmp.eq.s32.totalorder %s25, 1
      %p288 = scmp.ne.s32.totalorder %s283, %s285
      %p289 = scmp.eq.s32.totalorder %s25, 0
      %p290 = por %p288, %p289
      %p291 = scmp.ne.s32.totalorder %s283, %s285
      %p292 = scmp.eq.s32.totalorder %s30, 1
      %p293 = por %p291, %p292
      %p294 = scmp.ne.s32.totalorder %s285, %s286
      %p295 = scmp.eq.s32.totalorder %s30, 0
      %p296 = por %p294, %p295
      %p297 = scmp.ne.s32.totalorder %s285, %s286
      %p298 = scmp.eq.s32.totalorder %s31, 1
      %p299 = por %p297, %p298
      %p301 = scmp.ne.s32.totalorder %s286, %s300
      %p302 = scmp.eq.s32.totalorder %s31, 0
      %p303 = por %p301, %p302
      %s305 = sadd.s32 %s304, 1
      %p308 = scmp.eq.s32.totalorder %s25, 1
      %p309 = scmp.ne.s32.totalorder %s304, %s306
      %p310 = scmp.eq.s32.totalorder %s25, 0
      %p311 = por %p309, %p310
      %p312 = scmp.ne.s32.totalorder %s304, %s306
      %p313 = scmp.eq.s32.totalorder %s30, 1
      %p314 = por %p312, %p313
      %p315 = scmp.ne.s32.totalorder %s306, %s307
      %p316 = scmp.eq.s32.totalorder %s30, 0
      %p317 = por %p315, %p316
      %p318 = scmp.ne.s32.totalorder %s306, %s307
      %p319 = scmp.eq.s32.totalorder %s31, 1
      %p320 = por %p318, %p319
      %p322 = scmp.ne.s32.totalorder %s307, %s321
      %p323 = scmp.eq.s32.totalorder %s31, 0
      %p324 = por %p322, %p323
      %s326 = sadd.s32 %s325, 1
      %p329 = scmp.eq.s32.totalorder %s25, 1
      %p330 = scmp.ne.s32.totalorder %s325, %s327
      %p331 = scmp.eq.s32.totalorder %s25, 0
      %p332 = por %p330, %p331
      %p333 = scmp.ne.s32.totalorder %s325, %s327
      %p334 = scmp.eq.s32.totalorder %s30, 1
      %p335 = por %p333, %p334
      %p336 = scmp.ne.s32.totalorder %s327, %s328
      %p337 = scmp.eq.s32.totalorder %s30, 0
      %p338 = por %p336, %p337
      %p339 = scmp.ne.s32.totalorder %s327, %s328
      %p340 = scmp.eq.s32.totalorder %s31, 1
      %p341 = por %p339, %p340
      %p343 = scmp.ne.s32.totalorder %s328, %s342
      %p344 = scmp.eq.s32.totalorder %s31, 0
      %p345 = por %p343, %p344
      %s347 = sadd.s32 %s346, 1
      %p350 = scmp.eq.s32.totalorder %s25, 1
      %p351 = scmp.ne.s32.totalorder %s346, %s348
      %p352 = scmp.eq.s32.totalorder %s25, 0
      %p353 = por %p351, %p352
      %p354 = scmp.ne.s32.totalorder %s346, %s348
      %p355 = scmp.eq.s32.totalorder %s30, 1
      %p356 = por %p354, %p355
      %p357 = scmp.ne.s32.totalorder %s348, %s349
      %p358 = scmp.eq.s32.totalorder %s30, 0
      %p359 = por %p357, %p358
      %p360 = scmp.ne.s32.totalorder %s348, %s349
      %p361 = scmp.eq.s32.totalorder %s31, 1
      %p362 = por %p360, %p361
      %p364 = scmp.ne.s32.totalorder %s349, %s363
      %p365 = scmp.eq.s32.totalorder %s31, 0
      %p366 = por %p364, %p365
      %s367 = ssub.s32 %s32, %s44
      %p368 = scmp.eq.s32.totalorder %s367, 0
      %s370 = sadd.s32 %s369, 1
      %s371 = scalar_select %p368, %s369, %s370
      %p374 = pneg %p368
      %p375 = scmp.eq.s32.totalorder %s25, 1
      %p376 = por %p374, %p375
      %p377 = scmp.ne.s32.totalorder %s369, %s372
      %p378 = scmp.eq.s32.totalorder %s25, 0
      %p379 = por %p377, %p378
      %p380 = scmp.ne.s32.totalorder %s369, %s372
      %p381 = scmp.eq.s32.totalorder %s30, 1
      %p382 = por %p380, %p381
      %p383 = scmp.ne.s32.totalorder %s372, %s373
      %p384 = scmp.eq.s32.totalorder %s30, 0
      %p385 = por %p383, %p384
      %p386 = scmp.ne.s32.totalorder %s372, %s373
      %p387 = scmp.eq.s32.totalorder %s31, 1
      %p388 = por %p386, %p387
      %p390 = scmp.ne.s32.totalorder %s373, %s389
      %p391 = scmp.eq.s32.totalorder %s31, 0
      %p392 = por %p390, %p391
      %p393 = scmp.le.s32.totalorder 1, %s25
      %p394 = scmp.lt.s32.totalorder %s25, 3
      %p395 = pnand %p393, %p394
      %p396 = pneg %p395
      // Predicated region
      $region9: #{tpu_custom_call.1} parent=5 // pred_check
        _
      $region10: #{tpu_custom_call.1} parent=5 // pred_check_branch
        %398 = sbr.rel (%p395) target = $region12
      $region11: #{tpu_custom_call.1} parent=5 // pred_region
        %s399 = ssub.s32 %s25, 1
        // Predicated region
        $region13: #{tpu_custom_call.1} parent=11 // pred_check
          %p400 = pneg %p86
        $region14: #{tpu_custom_call.1} parent=11 // pred_check_branch
          %402 = sbr.rel (%p400) target = $region16
        $region15: #{tpu_custom_call.1} parent=11 // pred_region
          _
        $region16: #{tpu_custom_call.1} parent=11 // pred_fallthru
          _
        // Predicated region
        $region17: #{tpu_custom_call.1} parent=11 // pred_check
          %p403 = pneg %p107
        $region18: #{tpu_custom_call.1} parent=11 // pred_check_branch
          %405 = sbr.rel (%p403) target = $region20
        $region19: #{tpu_custom_call.1} parent=11 // pred_region
          _
        $region20: #{tpu_custom_call.1} parent=11 // pred_fallthru
          _
        // Predicated region
        $region21: #{tpu_custom_call.1} parent=11 // pred_check
          %p406 = pneg %p128
        $region22: #{tpu_custom_call.1} parent=11 // pred_check_branch
          %408 = sbr.rel (%p406) target = $region24
        $region23: #{tpu_custom_call.1} parent=11 // pred_region
          _
        $region24: #{tpu_custom_call.1} parent=11 // pred_fallthru
          _
        // Predicated region
        $region25: #{tpu_custom_call.1} parent=11 // pred_check
          %p409 = pneg %p149
        $region26: #{tpu_custom_call.1} parent=11 // pred_check_branch
          %411 = sbr.rel (%p409) target = $region28
        $region27: #{tpu_custom_call.1} parent=11 // pred_region
          _
        $region28: #{tpu_custom_call.1} parent=11 // pred_fallthru
          _
        // Predicated region
        $region29: #{tpu_custom_call.1} parent=11 // pred_check
          %p412 = pneg %p170
        $region30: #{tpu_custom_call.1} parent=11 // pred_check_branch
          %414 = sbr.rel (%p412) target = $region32
        $region31: #{tpu_custom_call.1} parent=11 // pred_region
          _
        $region32: #{tpu_custom_call.1} parent=11 // pred_fallthru
          _
        // Predicated region
        $region33: #{tpu_custom_call.1} parent=11 // pred_check
          %p415 = pneg %p191
        $region34: #{tpu_custom_call.1} parent=11 // pred_check_branch
          %417 = sbr.rel (%p415) target = $region36
        $region35: #{tpu_custom_call.1} parent=11 // pred_region
          _
        $region36: #{tpu_custom_call.1} parent=11 // pred_fallthru
          _
        // Predicated region
        $region37: #{tpu_custom_call.1} parent=11 // pred_check
          %p418 = pneg %p212
        $region38: #{tpu_custom_call.1} parent=11 // pred_check_branch
          %420 = sbr.rel (%p418) target = $region40
        $region39: #{tpu_custom_call.1} parent=11 // pred_region
          %s422 = ssub.s32 16384, 16384
          %423 = vsyncadd [#allocation5], %s422
          %s424 = sshll.u32 [#allocation4], 4
          %s425 = int_to_ptr.vmem [resolvable:$true] %s424
          %430 = dma.hbm_to_vmem [thread:$0]  %s7, 16384, %s425, [#allocation5], 512, 512, 32
        $region40: #{tpu_custom_call.1} parent=11 // pred_fallthru
          _
        // Predicated region
        $region41: #{tpu_custom_call.1} parent=11 // pred_check
          %p431 = pneg %p233
        $region42: #{tpu_custom_call.1} parent=11 // pred_check_branch
          %433 = sbr.rel (%p431) target = $region44
        $region43: #{tpu_custom_call.1} parent=11 // pred_region
          _
        $region44: #{tpu_custom_call.1} parent=11 // pred_fallthru
          _
        // Predicated region
        $region45: #{tpu_custom_call.1} parent=11 // pred_check
          %p434 = pneg %p254
        $region46: #{tpu_custom_call.1} parent=11 // pred_check_branch
          %436 = sbr.rel (%p434) target = $region48
        $region47: #{tpu_custom_call.1} parent=11 // pred_region
          %s438 = ssub.s32 16384, 16384
          %439 = vsyncadd [#allocation7], %s438
          %s440 = sshll.u32 [#allocation6], 4
          %s441 = int_to_ptr.vmem [resolvable:$true] %s440
          %446 = dma.hbm_to_vmem [thread:$0]  %s9, 16384, %s441, [#allocation7], 256, 256, 16
        $region48: #{tpu_custom_call.1} parent=11 // pred_fallthru
          _
        // Predicated region
        $region49: #{tpu_custom_call.1} parent=11 // pred_check
          %p447 = pneg %p275
        $region50: #{tpu_custom_call.1} parent=11 // pred_check_branch
          %449 = sbr.rel (%p447) target = $region52
        $region51: #{tpu_custom_call.1} parent=11 // pred_region
          _
        $region52: #{tpu_custom_call.1} parent=11 // pred_fallthru
          _
        // Predicated region
        $region53: #{tpu_custom_call.1} parent=11 // pred_check
          %p450 = pneg %p296
        $region54: #{tpu_custom_call.1} parent=11 // pred_check_branch
          %452 = sbr.rel (%p450) target = $region56
        $region55: #{tpu_custom_call.1} parent=11 // pred_region
          _
        $region56: #{tpu_custom_call.1} parent=11 // pred_fallthru
          _
        // Predicated region
        $region57: #{tpu_custom_call.1} parent=11 // pred_check
          %p453 = pneg %p317
        $region58: #{tpu_custom_call.1} parent=11 // pred_check_branch
          %455 = sbr.rel (%p453) target = $region60
        $region59: #{tpu_custom_call.1} parent=11 // pred_region
          _
        $region60: #{tpu_custom_call.1} parent=11 // pred_fallthru
          _
        // Predicated region
        $region61: #{tpu_custom_call.1} parent=11 // pred_check
          %p456 = pneg %p338
        $region62: #{tpu_custom_call.1} parent=11 // pred_check_branch
          %458 = sbr.rel (%p456) target = $region64
        $region63: #{tpu_custom_call.1} parent=11 // pred_region
          _
        $region64: #{tpu_custom_call.1} parent=11 // pred_fallthru
          _
        // Predicated region
        $region65: #{tpu_custom_call.1} parent=11 // pred_check
          %p459 = pneg %p359
        $region66: #{tpu_custom_call.1} parent=11 // pred_check_branch
          %461 = sbr.rel (%p459) target = $region68
        $region67: #{tpu_custom_call.1} parent=11 // pred_region
          _
        $region68: #{tpu_custom_call.1} parent=11 // pred_fallthru
          _
      $region12: #{tpu_custom_call.1} parent=5 // pred_fallthru
        _
      %p462 = scmp.lt.s32.totalorder %s25, 2
      // Predicated region
      $region69: #{tpu_custom_call.1} parent=5 // pred_check
        %p463 = pneg %p462
      $region70: #{tpu_custom_call.1} parent=5 // pred_check_branch
        %465 = sbr.rel (%p463) target = $region72
      $region71: #{tpu_custom_call.1} parent=5 // pred_region
        // Predicated region
        $region73: #{tpu_custom_call.1} parent=71 // pred_check
          %p466 = pneg %p59
        $region74: #{tpu_custom_call.1} parent=71 // pred_check_branch
          %468 = sbr.rel (%p466) target = $region76
        $region75: #{tpu_custom_call.1} parent=71 // pred_region
          %s469 = smul.u32 32, %s33
          %p470 = scmp.lt.s32.totalorder %s32, 1
          %s471 = scalar_select %p470, %s32, 1
          %p472 = scmp.lt.s32.totalorder %s469, 31
          %s473 = scalar_select %p472, %s469, 31
          %s474 = smul.addr %s471, 32
          %s475 = sadd.s32 %s473, %s474
          %s476 = smul.addr %s475, 8
          %s477 = scalar_lea.vmem %s0, %s476
          %s478 = smul.u32 32, %s33
        $region76: #{tpu_custom_call.1} parent=71 // pred_fallthru
          _
      $region72: #{tpu_custom_call.1} parent=5 // pred_fallthru
        _
      %p479 = scmp.le.s32.totalorder 1, %s25
      %p480 = scmp.lt.s32.totalorder %s25, 3
      %p481 = pnand %p479, %p480
      %p482 = pneg %p481
      // Predicated region
      $region77: #{tpu_custom_call.1} parent=5 // pred_check
        _
      $region78: #{tpu_custom_call.1} parent=5 // pred_check_branch
        %484 = sbr.rel (%p481) target = $region80
      $region79: #{tpu_custom_call.1} parent=5 // pred_region
        %s485 = ssub.s32 %s25, 1
        // Predicated region
        $region81: #{tpu_custom_call.1} parent=79 // pred_check
          %p486 = pneg %p212
        $region82: #{tpu_custom_call.1} parent=79 // pred_check_branch
          %488 = sbr.rel (%p486) target = $region84
        $region83: #{tpu_custom_call.1} parent=79 // pred_region
          %489 = dma.done [#allocation5], 16384
        $region84: #{tpu_custom_call.1} parent=79 // pred_fallthru
          _
        // Predicated region
        $region85: #{tpu_custom_call.1} parent=79 // pred_check
          %p490 = pneg %p254
        $region86: #{tpu_custom_call.1} parent=79 // pred_check_branch
          %492 = sbr.rel (%p490) target = $region88
        $region87: #{tpu_custom_call.1} parent=79 // pred_region
          %493 = dma.done [#allocation7], 16384
        $region88: #{tpu_custom_call.1} parent=79 // pred_fallthru
          _
        %s494 = smul.u32 32, %s35
        %p495 = scmp.lt.s32.totalorder %s34, 1
        %s496 = scalar_select %p495, %s34, 1
        %p497 = scmp.lt.s32.totalorder %s494, 31
        %s498 = scalar_select %p497, %s494, 31
        %s499 = smul.addr %s496, 32
        %s500 = sadd.s32 %s498, %s499
        %s501 = smul.addr %s500, 8
        %s502 = scalar_lea.vmem %s0, %s501
        %p503 = pneg %p65
        %p504 = pneg %p62
        %p505 = pneg %p86
        %p506 = pneg %p83
        %p507 = pneg %p107
        %p508 = pneg %p104
        %p509 = pneg %p128
        %p510 = pneg %p125
        %p511 = pneg %p149
        %p512 = pneg %p146
        %p513 = pneg %p170
        %p514 = pneg %p167
        %p515 = pneg %p191
        %p516 = pneg %p188
        %p517 = pneg %p212
        %p518 = pneg %p209
        %p519 = pneg %p233
        %p520 = pneg %p230
        %p521 = pneg %p254
        %p522 = pneg %p251
        %p523 = pneg %p275
        %p524 = pneg %p272
        %p525 = pneg %p296
        %p526 = pneg %p293
        %p527 = pneg %p317
        %p528 = pneg %p314
        %p529 = pneg %p338
        %p530 = pneg %p335
        %p531 = pneg %p359
        %p532 = pneg %p356
        %p533 = pneg %p385
        %p534 = pneg %p382
        %p535 = scmp.lt.s32.totalorder %s34, 1
        %s536 = scalar_select %p535, %s34, 1
        %s537 = scalar_lea.vmem %s15, %s536
        %s538 = smul.u32 32, %s35
        %p539 = scmp.lt.s32.totalorder %s34, 1
        %s540 = scalar_select %p539, %s34, 1
        %p541 = scmp.lt.s32.totalorder %s538, 31
        %s542 = scalar_select %p541, %s538, 31
        %s543 = smul.addr %s540, 32
        %s544 = sadd.s32 %s542, %s543
        %s545 = smul.addr %s544, 8
        %s546 = scalar_lea.vmem %s0, %s545
        %s547 = smul.u32 32, %s35
        %p548 = scmp.lt.s32.totalorder %s34, 1
        %s549 = scalar_select %p548, %s34, 1
        %s550 = scalar_lea.vmem %s15, %s549
        %v551 = vld [vmem:[%s546] sm:$0xff]
        %v552 = vld [vmem:[%s546 + $0x8] sm:$0xff]
        %v553 = vld [vmem:[%s546 + $0x10] sm:$0xff]
        %v554 = vld [vmem:[%s546 + $0x18] sm:$0xff]
        %v555 = vld [vmem:[%s546 + $0x20] sm:$0xff]
        %v556 = vld [vmem:[%s546 + $0x28] sm:$0xff]
        %v557 = vld [vmem:[%s546 + $0x30] sm:$0xff]
        %v558 = vld [vmem:[%s546 + $0x38] sm:$0xff]
        %v559 = vld [vmem:[%s546 + $0x40] sm:$0xff]
        %v560 = vld [vmem:[%s546 + $0x48] sm:$0xff]
        %v561 = vld [vmem:[%s546 + $0x50] sm:$0xff]
        %v562 = vld [vmem:[%s546 + $0x58] sm:$0xff]
        %v563 = vld [vmem:[%s546 + $0x60] sm:$0xff]
        %v564 = vld [vmem:[%s546 + $0x68] sm:$0xff]
        %v565 = vld [vmem:[%s546 + $0x70] sm:$0xff]
        %v566 = vld [vmem:[%s546 + $0x78] sm:$0xff]
        %v567 = vld [vmem:[%s546 + $0x80] sm:$0xff]
        %v568 = vld [vmem:[%s546 + $0x88] sm:$0xff]
        %v569 = vld [vmem:[%s546 + $0x90] sm:$0xff]
        %v570 = vld [vmem:[%s546 + $0x98] sm:$0xff]
        %v571 = vld [vmem:[%s546 + $0xa0] sm:$0xff]
        %v572 = vld [vmem:[%s546 + $0xa8] sm:$0xff]
        %v573 = vld [vmem:[%s546 + $0xb0] sm:$0xff]
        %v574 = vld [vmem:[%s546 + $0xb8] sm:$0xff]
        %v575 = vld [vmem:[%s546 + $0xc0] sm:$0xff]
        %v576 = vld [vmem:[%s546 + $0xc8] sm:$0xff]
        %v577 = vld [vmem:[%s546 + $0xd0] sm:$0xff]
        %v578 = vld [vmem:[%s546 + $0xd8] sm:$0xff]
        %v579 = vld [vmem:[%s546 + $0xe0] sm:$0xff]
        %v580 = vld [vmem:[%s546 + $0xe8] sm:$0xff]
        %v581 = vld [vmem:[%s546 + $0xf0] sm:$0xff]
        %v582 = vld [vmem:[%s546 + $0xf8] sm:$0xff]
        %v583 = vld [vmem:[%s1] sm:$0x7]
        %v584 = vld [vmem:[%s2] sm:$0x1]
        %v586 = vlaneseq
        %v587 = vshrl.u32 %v586, 7
        %v588 = vsub.s32 0, %v587
        %v589 = vrot.slane %v584, %v588
        %vm591 = vcmask 23552
        %v593 = vsel %vm591, %v551, 0
        %v596 = vsel %vm591, %v552, 0
        %v599 = vsel %vm591, %v553, 0
        %v602 = vsel %vm591, %v554, 0
        %v605 = vsel %vm591, %v555, 0
        %v608 = vsel %vm591, %v556, 0
        %v611 = vsel %vm591, %v557, 0
        %v614 = vsel %vm591, %v558, 0
        %v617 = vsel %vm591, %v559, 0
        %v620 = vsel %vm591, %v560, 0
        %v623 = vsel %vm591, %v561, 0
        %v626 = vsel %vm591, %v562, 0
        %v629 = vsel %vm591, %v563, 0
        %v632 = vsel %vm591, %v564, 0
        %v635 = vsel %vm591, %v565, 0
        %v638 = vsel %vm591, %v566, 0
        %v641 = vsel %vm591, %v567, 0
        %v644 = vsel %vm591, %v568, 0
        %v647 = vsel %vm591, %v569, 0
        %v650 = vsel %vm591, %v570, 0
        %v653 = vsel %vm591, %v571, 0
        %v656 = vsel %vm591, %v572, 0
        %v659 = vsel %vm591, %v573, 0
        %v662 = vsel %vm591, %v574, 0
        %v665 = vsel %vm591, %v575, 0
        %v668 = vsel %vm591, %v576, 0
        %v671 = vsel %vm591, %v577, 0
        %v674 = vsel %vm591, %v578, 0
        %v677 = vsel %vm591, %v579, 0
        %v680 = vsel %vm591, %v580, 0
        %v683 = vsel %vm591, %v581, 0
        %v686 = vsel %vm591, %v582, 0
        %vm688 = vcmask 1042432
        %v690 = vsel %vm688, %v583, 0
        %692 = vmatprep.subr.mxu0 0.0
        %693 = vmatpush1.msra.mxu0 %v690
        %694 = vmatprep.subr.mxu0 0.0
        %695 = vmatpush1.msra.mxu0 0.0
        %696 = vmatprep.subr.mxu0 0.0
        %697 = vmatpush1.msra.mxu0 0.0
        %698 = vmatprep.subr.mxu0 0.0
        %699 = vmatpush1.msra.mxu0 0.0
        %700 = vmatprep.subr.mxu0 0.0
        %701 = vmatpush1.msra.mxu0 0.0
        %702 = vmatprep.subr.mxu0 0.0
        %703 = vmatpush1.msra.mxu0 0.0
        %704 = vmatprep.subr.mxu0 0.0
        %705 = vmatpush1.msra.mxu0 0.0
        %706 = vmatprep.subr.mxu0 0.0
        %707 = vmatpush1.msra.mxu0 0.0
        %708 = vmatprep.subr.mxu0 0.0
        %709 = vmatpush1.msra.mxu0 0.0
        %710 = vmatprep.subr.mxu0 0.0
        %711 = vmatpush1.msra.mxu0 0.0
        %712 = vmatprep.subr.mxu0 0.0
        %713 = vmatpush1.msra.mxu0 0.0
        %714 = vmatprep.subr.mxu0 0.0
        %715 = vmatpush1.msra.mxu0 0.0
        %716 = vmatprep.subr.mxu0 0.0
        %717 = vmatpush1.msra.mxu0 0.0
        %718 = vmatprep.subr.mxu0 0.0
        %719 = vmatpush1.msra.mxu0 0.0
        %720 = vmatprep.subr.mxu0 0.0
        %721 = vmatpush1.msra.mxu0 0.0
        %722 = vmatprep.subr.mxu0 0.0
        %723 = vmatpush1.msra.mxu0 0.0
        %724 = vmatprep.subr.mxu0 0.0
        %725 = vmatpush1.msra.mxu0 0.0
        %726 = vmatprep.subr.mxu0 0.0
        %727 = vmatpush1.msra.mxu0 0.0
        %728 = vmatprep.subr.mxu0 0.0
        %729 = vmatpush1.msra.mxu0 0.0
        %730 = vmatprep.subr.mxu0 0.0
        %731 = vmatpush1.msra.mxu0 0.0
        %732 = vmatprep.subr.mxu0 0.0
        %733 = vmatpush1.msra.mxu0 0.0
        %734 = vmatprep.subr.mxu0 0.0
        %735 = vmatpush1.msra.mxu0 0.0
        %736 = vmatprep.subr.mxu0 0.0
        %737 = vmatpush1.msra.mxu0 0.0
        %738 = vmatprep.subr.mxu0 0.0
        %739 = vmatpush1.msra.mxu0 0.0
        %740 = vmatprep.subr.mxu0 0.0
        %741 = vmatpush1.msra.mxu0 0.0
        %742 = vmatprep.subr.mxu0 0.0
        %743 = vmatpush1.msra.mxu0 0.0
        %744 = vmatprep.subr.mxu0 0.0
        %745 = vmatpush1.msra.mxu0 0.0
        %746 = vmatprep.subr.mxu0 0.0
        %747 = vmatpush1.msra.mxu0 0.0
        %748 = vmatprep.subr.mxu0 0.0
        %749 = vmatpush1.msra.mxu0 0.0
        %750 = vmatprep.subr.mxu0 0.0
        %751 = vmatpush1.msra.mxu0 0.0
        %752 = vmatprep.subr.mxu0 0.0
        %753 = vmatpush1.msra.mxu0 0.0
        %754 = vmatprep.subr.mxu0 0.0
        %755 = vmatpush1.msra.mxu0 0.0
        %756 = vmatprep.mubr.f32.mxu0 0.0
        %757 = vmatmul.mubr.f32.gmra.mrb[0].mxu0 %v593
        %v758 = vpop.f32.mrb[0].mxu0
        %v759 = vadd.f32 %v589, %v758
        %v760 = vpop.f32.mrb[0].mxu0
        %761 = vmatprep.mubr.f32.mxu0 0.0
        %762 = vmatmul.mubr.f32.gmra.mrb[0].mxu0 %v596
        %v763 = vpop.f32.mrb[0].mxu0
        %v764 = vadd.f32 %v589, %v763
        %v765 = vpop.f32.mrb[0].mxu0
        %766 = vmatprep.mubr.f32.mxu0 0.0
        %767 = vmatmul.mubr.f32.gmra.mrb[0].mxu0 %v599
        %v768 = vpop.f32.mrb[0].mxu0
        %v769 = vadd.f32 %v589, %v768
        %v770 = vpop.f32.mrb[0].mxu0
        %771 = vmatprep.mubr.f32.mxu0 0.0
        %772 = vmatmul.mubr.f32.gmra.mrb[0].mxu0 %v602
        %v773 = vpop.f32.mrb[0].mxu0
        %v774 = vadd.f32 %v589, %v773
        %v775 = vpop.f32.mrb[0].mxu0
        %776 = vmatprep.mubr.f32.mxu0 0.0
        %777 = vmatmul.mubr.f32.gmra.mrb[0].mxu0 %v605
        %v778 = vpop.f32.mrb[0].mxu0
        %v779 = vadd.f32 %v589, %v778
        %v780 = vpop.f32.mrb[0].mxu0
        %781 = vmatprep.mubr.f32.mxu0 0.0
        %782 = vmatmul.mubr.f32.gmra.mrb[0].mxu0 %v608
        %v783 = vpop.f32.mrb[0].mxu0
        %v784 = vadd.f32 %v589, %v783
        %v785 = vpop.f32.mrb[0].mxu0
        %786 = vmatprep.mubr.f32.mxu0 0.0
        %787 = vmatmul.mubr.f32.gmra.mrb[0].mxu0 %v611
        %v788 = vpop.f32.mrb[0].mxu0
        %v789 = vadd.f32 %v589, %v788
        %v790 = vpop.f32.mrb[0].mxu0
        %791 = vmatprep.mubr.f32.mxu0 0.0
        %792 = vmatmul.mubr.f32.gmra.mrb[0].mxu0 %v614
        %v793 = vpop.f32.mrb[0].mxu0
        %v794 = vadd.f32 %v589, %v793
        %v795 = vpop.f32.mrb[0].mxu0
        %796 = vmatprep.mubr.f32.mxu0 0.0
        %797 = vmatmul.mubr.f32.gmra.mrb[0].mxu0 %v617
        %v798 = vpop.f32.mrb[0].mxu0
        %v799 = vadd.f32 %v589, %v798
        %v800 = vpop.f32.mrb[0].mxu0
        %801 = vmatprep.mubr.f32.mxu0 0.0
        %802 = vmatmul.mubr.f32.gmra.mrb[0].mxu0 %v620
        %v803 = vpop.f32.mrb[0].mxu0
        %v804 = vadd.f32 %v589, %v803
        %v805 = vpop.f32.mrb[0].mxu0
        %806 = vmatprep.mubr.f32.mxu0 0.0
        %807 = vmatmul.mubr.f32.gmra.mrb[0].mxu0 %v623
        %v808 = vpop.f32.mrb[0].mxu0
        %v809 = vadd.f32 %v589, %v808
        %v810 = vpop.f32.mrb[0].mxu0
        %811 = vmatprep.mubr.f32.mxu0 0.0
        %812 = vmatmul.mubr.f32.gmra.mrb[0].mxu0 %v626
        %v813 = vpop.f32.mrb[0].mxu0
        %v814 = vadd.f32 %v589, %v813
        %v815 = vpop.f32.mrb[0].mxu0
        %816 = vmatprep.mubr.f32.mxu0 0.0
        %817 = vmatmul.mubr.f32.gmra.mrb[0].mxu0 %v629
        %v818 = vpop.f32.mrb[0].mxu0
        %v819 = vadd.f32 %v589, %v818
        %v820 = vpop.f32.mrb[0].mxu0
        %821 = vmatprep.mubr.f32.mxu0 0.0
        %822 = vmatmul.mubr.f32.gmra.mrb[0].mxu0 %v632
        %v823 = vpop.f32.mrb[0].mxu0
        %v824 = vadd.f32 %v589, %v823
        %v825 = vpop.f32.mrb[0].mxu0
        %826 = vmatprep.mubr.f32.mxu0 0.0
        %827 = vmatmul.mubr.f32.gmra.mrb[0].mxu0 %v635
        %v828 = vpop.f32.mrb[0].mxu0
        %v829 = vadd.f32 %v589, %v828
        %v830 = vpop.f32.mrb[0].mxu0
        %831 = vmatprep.mubr.f32.mxu0 0.0
        %832 = vmatmul.mubr.f32.gmra.mrb[0].mxu0 %v638
        %v833 = vpop.f32.mrb[0].mxu0
        %v834 = vadd.f32 %v589, %v833
        %v835 = vpop.f32.mrb[0].mxu0
        %836 = vmatprep.mubr.f32.mxu0 0.0
        %837 = vmatmul.mubr.f32.gmra.mrb[0].mxu0 %v641
        %v838 = vpop.f32.mrb[0].mxu0
        %v839 = vadd.f32 %v589, %v838
        %v840 = vpop.f32.mrb[0].mxu0
        %841 = vmatprep.mubr.f32.mxu0 0.0
        %842 = vmatmul.mubr.f32.gmra.mrb[0].mxu0 %v644
        %v843 = vpop.f32.mrb[0].mxu0
        %v844 = vadd.f32 %v589, %v843
        %v845 = vpop.f32.mrb[0].mxu0
        %846 = vmatprep.mubr.f32.mxu0 0.0
        %847 = vmatmul.mubr.f32.gmra.mrb[0].mxu0 %v647
        %v848 = vpop.f32.mrb[0].mxu0
        %v849 = vadd.f32 %v589, %v848
        %v850 = vpop.f32.mrb[0].mxu0
        %851 = vmatprep.mubr.f32.mxu0 0.0
        %852 = vmatmul.mubr.f32.gmra.mrb[0].mxu0 %v650
        %v853 = vpop.f32.mrb[0].mxu0
        %v854 = vadd.f32 %v589, %v853
        %v855 = vpop.f32.mrb[0].mxu0
        %856 = vmatprep.mubr.f32.mxu0 0.0
        %857 = vmatmul.mubr.f32.gmra.mrb[0].mxu0 %v653
        %v858 = vpop.f32.mrb[0].mxu0
        %v859 = vadd.f32 %v589, %v858
        %v860 = vpop.f32.mrb[0].mxu0
        %861 = vmatprep.mubr.f32.mxu0 0.0
        %862 = vmatmul.mubr.f32.gmra.mrb[0].mxu0 %v656
        %v863 = vpop.f32.mrb[0].mxu0
        %v864 = vadd.f32 %v589, %v863
        %v865 = vpop.f32.mrb[0].mxu0
        %866 = vmatprep.mubr.f32.mxu0 0.0
        %867 = vmatmul.mubr.f32.gmra.mrb[0].mxu0 %v659
        %v868 = vpop.f32.mrb[0].mxu0
        %v869 = vadd.f32 %v589, %v868
        %v870 = vpop.f32.mrb[0].mxu0
        %871 = vmatprep.mubr.f32.mxu0 0.0
        %872 = vmatmul.mubr.f32.gmra.mrb[0].mxu0 %v662
        %v873 = vpop.f32.mrb[0].mxu0
        %v874 = vadd.f32 %v589, %v873
        %v875 = vpop.f32.mrb[0].mxu0
        %876 = vmatprep.mubr.f32.mxu0 0.0
        %877 = vmatmul.mubr.f32.gmra.mrb[0].mxu0 %v665
        %v878 = vpop.f32.mrb[0].mxu0
        %v879 = vadd.f32 %v589, %v878
        %v880 = vpop.f32.mrb[0].mxu0
        %881 = vmatprep.mubr.f32.mxu0 0.0
        %882 = vmatmul.mubr.f32.gmra.mrb[0].mxu0 %v668
        %v883 = vpop.f32.mrb[0].mxu0
        %v884 = vadd.f32 %v589, %v883
        %v885 = vpop.f32.mrb[0].mxu0
        %886 = vmatprep.mubr.f32.mxu0 0.0
        %887 = vmatmul.mubr.f32.gmra.mrb[0].mxu0 %v671
        %v888 = vpop.f32.mrb[0].mxu0
        %v889 = vadd.f32 %v589, %v888
        %v890 = vpop.f32.mrb[0].mxu0
        %891 = vmatprep.mubr.f32.mxu0 0.0
        %892 = vmatmul.mubr.f32.gmra.mrb[0].mxu0 %v674
        %v893 = vpop.f32.mrb[0].mxu0
        %v894 = vadd.f32 %v589, %v893
        %v895 = vpop.f32.mrb[0].mxu0
        %896 = vmatprep.mubr.f32.mxu0 0.0
        %897 = vmatmul.mubr.f32.gmra.mrb[0].mxu0 %v677
        %v898 = vpop.f32.mrb[0].mxu0
        %v899 = vadd.f32 %v589, %v898
        %v900 = vpop.f32.mrb[0].mxu0
        %901 = vmatprep.mubr.f32.mxu0 0.0
        %902 = vmatmul.mubr.f32.gmra.mrb[0].mxu0 %v680
        %v903 = vpop.f32.mrb[0].mxu0
        %v904 = vadd.f32 %v589, %v903
        %v905 = vpop.f32.mrb[0].mxu0
        %906 = vmatprep.mubr.f32.mxu0 0.0
        %907 = vmatmul.mubr.f32.gmra.mrb[0].mxu0 %v683
        %v908 = vpop.f32.mrb[0].mxu0
        %v909 = vadd.f32 %v589, %v908
        %v910 = vpop.f32.mrb[0].mxu0
        %911 = vmatprep.mubr.f32.mxu0 0.0
        %912 = vmatmul.mubr.f32.gmra.mrb[0].mxu0 %v686
        %v913 = vpop.f32.mrb[0].mxu0
        %v914 = vadd.f32 %v589, %v913
        %v915 = vpop.f32.mrb[0].mxu0
        %916 = vdwg.mxu0
        %v917 = vmul.f32 %v759, 0.01
        %v918 = vmul.f32 %v764, 0.01
        %v919 = vmul.f32 %v769, 0.01
        %v920 = vmul.f32 %v774, 0.01
        %v921 = vmul.f32 %v779, 0.01
        %v922 = vmul.f32 %v784, 0.01
        %v923 = vmul.f32 %v789, 0.01
        %v924 = vmul.f32 %v794, 0.01
        %v925 = vmul.f32 %v799, 0.01
        %v926 = vmul.f32 %v804, 0.01
        %v927 = vmul.f32 %v809, 0.01
        %v928 = vmul.f32 %v814, 0.01
        %v929 = vmul.f32 %v819, 0.01
        %v930 = vmul.f32 %v824, 0.01
        %v931 = vmul.f32 %v829, 0.01
        %v932 = vmul.f32 %v834, 0.01
        %v933 = vmul.f32 %v839, 0.01
        %v934 = vmul.f32 %v844, 0.01
        %v935 = vmul.f32 %v849, 0.01
        %v936 = vmul.f32 %v854, 0.01
        %v937 = vmul.f32 %v859, 0.01
        %v938 = vmul.f32 %v864, 0.01
        %v939 = vmul.f32 %v869, 0.01
        %v940 = vmul.f32 %v874, 0.01
        %v941 = vmul.f32 %v879, 0.01
        %v942 = vmul.f32 %v884, 0.01
        %v943 = vmul.f32 %v889, 0.01
        %v944 = vmul.f32 %v894, 0.01
        %v945 = vmul.f32 %v899, 0.01
        %v946 = vmul.f32 %v904, 0.01
        %v947 = vmul.f32 %v909, 0.01
        %v948 = vmul.f32 %v914, 0.01
        %v949 = vmax.f32 %v759, %v917
        %v950 = vmax.f32 %v764, %v918
        %v951 = vmax.f32 %v769, %v919
        %v952 = vmax.f32 %v774, %v920
        %v953 = vmax.f32 %v779, %v921
        %v954 = vmax.f32 %v784, %v922
        %v955 = vmax.f32 %v789, %v923
        %v956 = vmax.f32 %v794, %v924
        %v957 = vmax.f32 %v799, %v925
        %v958 = vmax.f32 %v804, %v926
        %v959 = vmax.f32 %v809, %v927
        %v960 = vmax.f32 %v814, %v928
        %v961 = vmax.f32 %v819, %v929
        %v962 = vmax.f32 %v824, %v930
        %v963 = vmax.f32 %v829, %v931
        %v964 = vmax.f32 %v834, %v932
        %v965 = vmax.f32 %v839, %v933
        %v966 = vmax.f32 %v844, %v934
        %v967 = vmax.f32 %v849, %v935
        %v968 = vmax.f32 %v854, %v936
        %v969 = vmax.f32 %v859, %v937
        %v970 = vmax.f32 %v864, %v938
        %v971 = vmax.f32 %v869, %v939
        %v972 = vmax.f32 %v874, %v940
        %v973 = vmax.f32 %v879, %v941
        %v974 = vmax.f32 %v884, %v942
        %v975 = vmax.f32 %v889, %v943
        %v976 = vmax.f32 %v894, %v944
        %v977 = vmax.f32 %v899, %v945
        %v978 = vmax.f32 %v904, %v946
        %v979 = vmax.f32 %v909, %v947
        %v980 = vmax.f32 %v914, %v948
        %v981 = vld [vmem:[%s3] sm:$0xff]
        %v982 = vld [vmem:[%s3 + $0x8] sm:$0xff]
        %v983 = vld [vmem:[%s3 + $0x10] sm:$0xff]
        %v984 = vld [vmem:[%s3 + $0x18] sm:$0xff]
        %v985 = vld [vmem:[%s3 + $0x20] sm:$0xff]
        %v986 = vld [vmem:[%s3 + $0x28] sm:$0xff]
        %v987 = vld [vmem:[%s3 + $0x30] sm:$0xff]
        %v988 = vld [vmem:[%s3 + $0x38] sm:$0xff]
        %v989 = vld [vmem:[%s4] sm:$0x1]
        %v991 = vlaneseq
        %v992 = vshrl.u32 %v991, 7
        %v993 = vsub.s32 0, %v992
        %v994 = vrot.slane %v989, %v993
        %vm996 = vcmask 523264
        %v998 = vsel %vm996, %v949, 0
        %v1001 = vsel %vm996, %v950, 0
        %v1004 = vsel %vm996, %v951, 0
        %v1007 = vsel %vm996, %v952, 0
        %v1010 = vsel %vm996, %v953, 0
        %v1013 = vsel %vm996, %v954, 0
        %v1016 = vsel %vm996, %v955, 0
        %v1019 = vsel %vm996, %v956, 0
        %v1022 = vsel %vm996, %v957, 0
        %v1025 = vsel %vm996, %v958, 0
        %v1028 = vsel %vm996, %v959, 0
        %v1031 = vsel %vm996, %v960, 0
        %v1034 = vsel %vm996, %v961, 0
        %v1037 = vsel %vm996, %v962, 0
        %v1040 = vsel %vm996, %v963, 0
        %v1043 = vsel %vm996, %v964, 0
        %v1046 = vsel %vm996, %v965, 0
        %v1049 = vsel %vm996, %v966, 0
        %v1052 = vsel %vm996, %v967, 0
        %v1055 = vsel %vm996, %v968, 0
        %v1058 = vsel %vm996, %v969, 0
        %v1061 = vsel %vm996, %v970, 0
        %v1064 = vsel %vm996, %v971, 0
        %v1067 = vsel %vm996, %v972, 0
        %v1070 = vsel %vm996, %v973, 0
        %v1073 = vsel %vm996, %v974, 0
        %v1076 = vsel %vm996, %v975, 0
        %v1079 = vsel %vm996, %v976, 0
        %v1082 = vsel %vm996, %v977, 0
        %v1085 = vsel %vm996, %v978, 0
        %v1088 = vsel %vm996, %v979, 0
        %v1091 = vsel %vm996, %v980, 0
        %1093 = vmatprep.subr.mxu0 0.0
        %1094 = vmatpush1.msra.mxu0 %v981
        %1095 = vmatprep.subr.mxu0 0.0
        %1096 = vmatpush1.msra.mxu0 %v982
        %1097 = vmatprep.subr.mxu0 0.0
        %1098 = vmatpush1.msra.mxu0 %v983
        %1099 = vmatprep.subr.mxu0 0.0
        %1100 = vmatpush1.msra.mxu0 %v984
        %1101 = vmatprep.subr.mxu0 0.0
        %1102 = vmatpush1.msra.mxu0 %v985
        %1103 = vmatprep.subr.mxu0 0.0
        %1104 = vmatpush1.msra.mxu0 %v986
        %1105 = vmatprep.subr.mxu0 0.0
        %1106 = vmatpush1.msra.mxu0 %v987
        %1107 = vmatprep.subr.mxu0 0.0
        %1108 = vmatpush1.msra.mxu0 %v988
        %1109 = vmatprep.subr.mxu0 0.0
        %1110 = vmatpush1.msra.mxu0 0.0
        %1111 = vmatprep.subr.mxu0 0.0
        %1112 = vmatpush1.msra.mxu0 0.0
        %1113 = vmatprep.subr.mxu0 0.0
        %1114 = vmatpush1.msra.mxu0 0.0
        %1115 = vmatprep.subr.mxu0 0.0
        %1116 = vmatpush1.msra.mxu0 0.0
        %1117 = vmatprep.subr.mxu0 0.0
        %1118 = vmatpush1.msra.mxu0 0.0
        %1119 = vmatprep.subr.mxu0 0.0
        %1120 = vmatpush1.msra.mxu0 0.0
        %1121 = vmatprep.subr.mxu0 0.0
        %1122 = vmatpush1.msra.mxu0 0.0
        %1123 = vmatprep.subr.mxu0 0.0
        %1124 = vmatpush1.msra.mxu0 0.0
        %1125 = vmatprep.subr.mxu0 0.0
        %1126 = vmatpush1.msra.mxu0 0.0
        %1127 = vmatprep.subr.mxu0 0.0
        %1128 = vmatpush1.msra.mxu0 0.0
        %1129 = vmatprep.subr.mxu0 0.0
        %1130 = vmatpush1.msra.mxu0 0.0
        %1131 = vmatprep.subr.mxu0 0.0
        %1132 = vmatpush1.msra.mxu0 0.0
        %1133 = vmatprep.subr.mxu0 0.0
        %1134 = vmatpush1.msra.mxu0 0.0
        %1135 = vmatprep.subr.mxu0 0.0
        %1136 = vmatpush1.msra.mxu0 0.0
        %1137 = vmatprep.subr.mxu0 0.0
        %1138 = vmatpush1.msra.mxu0 0.0
        %1139 = vmatprep.subr.mxu0 0.0
        %1140 = vmatpush1.msra.mxu0 0.0
        %1141 = vmatprep.subr.mxu0 0.0
        %1142 = vmatpush1.msra.mxu0 0.0
        %1143 = vmatprep.subr.mxu0 0.0
        %1144 = vmatpush1.msra.mxu0 0.0
        %1145 = vmatprep.subr.mxu0 0.0
        %1146 = vmatpush1.msra.mxu0 0.0
        %1147 = vmatprep.subr.mxu0 0.0
        %1148 = vmatpush1.msra.mxu0 0.0
        %1149 = vmatprep.subr.mxu0 0.0
        %1150 = vmatpush1.msra.mxu0 0.0
        %1151 = vmatprep.subr.mxu0 0.0
        %1152 = vmatpush1.msra.mxu0 0.0
        %1153 = vmatprep.subr.mxu0 0.0
        %1154 = vmatpush1.msra.mxu0 0.0
        %1155 = vmatprep.subr.mxu0 0.0
        %1156 = vmatpush1.msra.mxu0 0.0
        %1157 = vmatprep.mubr.f32.mxu0 0.0
        %1158 = vmatmul.mubr.f32.gmra.mrb[0].mxu0 %v998
        %v1159 = vpop.f32.mrb[0].mxu0
        %v1160 = vadd.f32 %v994, %v1159
        %v1161 = vpop.f32.mrb[0].mxu0
        %1162 = vmatprep.mubr.f32.mxu0 0.0
        %1163 = vmatmul.mubr.f32.gmra.mrb[0].mxu0 %v1001
        %v1164 = vpop.f32.mrb[0].mxu0
        %v1165 = vadd.f32 %v994, %v1164
        %v1166 = vpop.f32.mrb[0].mxu0
        %1167 = vmatprep.mubr.f32.mxu0 0.0
        %1168 = vmatmul.mubr.f32.gmra.mrb[0].mxu0 %v1004
        %v1169 = vpop.f32.mrb[0].mxu0
        %v1170 = vadd.f32 %v994, %v1169
        %v1171 = vpop.f32.mrb[0].mxu0
        %1172 = vmatprep.mubr.f32.mxu0 0.0
        %1173 = vmatmul.mubr.f32.gmra.mrb[0].mxu0 %v1007
        %v1174 = vpop.f32.mrb[0].mxu0
        %v1175 = vadd.f32 %v994, %v1174
        %v1176 = vpop.f32.mrb[0].mxu0
        %1177 = vmatprep.mubr.f32.mxu0 0.0
        %1178 = vmatmul.mubr.f32.gmra.mrb[0].mxu0 %v1010
        %v1179 = vpop.f32.mrb[0].mxu0
        %v1180 = vadd.f32 %v994, %v1179
        %v1181 = vpop.f32.mrb[0].mxu0
        %1182 = vmatprep.mubr.f32.mxu0 0.0
        %1183 = vmatmul.mubr.f32.gmra.mrb[0].mxu0 %v1013
        %v1184 = vpop.f32.mrb[0].mxu0
        %v1185 = vadd.f32 %v994, %v1184
        %v1186 = vpop.f32.mrb[0].mxu0
        %1187 = vmatprep.mubr.f32.mxu0 0.0
        %1188 = vmatmul.mubr.f32.gmra.mrb[0].mxu0 %v1016
        %v1189 = vpop.f32.mrb[0].mxu0
        %v1190 = vadd.f32 %v994, %v1189
        %v1191 = vpop.f32.mrb[0].mxu0
        %1192 = vmatprep.mubr.f32.mxu0 0.0
        %1193 = vmatmul.mubr.f32.gmra.mrb[0].mxu0 %v1019
        %v1194 = vpop.f32.mrb[0].mxu0
        %v1195 = vadd.f32 %v994, %v1194
        %v1196 = vpop.f32.mrb[0].mxu0
        %1197 = vmatprep.mubr.f32.mxu0 0.0
        %1198 = vmatmul.mubr.f32.gmra.mrb[0].mxu0 %v1022
        %v1199 = vpop.f32.mrb[0].mxu0
        %v1200 = vadd.f32 %v994, %v1199
        %v1201 = vpop.f32.mrb[0].mxu0
        %1202 = vmatprep.mubr.f32.mxu0 0.0
        %1203 = vmatmul.mubr.f32.gmra.mrb[0].mxu0 %v1025
        %v1204 = vpop.f32.mrb[0].mxu0
        %v1205 = vadd.f32 %v994, %v1204
        %v1206 = vpop.f32.mrb[0].mxu0
        %1207 = vmatprep.mubr.f32.mxu0 0.0
        %1208 = vmatmul.mubr.f32.gmra.mrb[0].mxu0 %v1028
        %v1209 = vpop.f32.mrb[0].mxu0
        %v1210 = vadd.f32 %v994, %v1209
        %v1211 = vpop.f32.mrb[0].mxu0
        %1212 = vmatprep.mubr.f32.mxu0 0.0
        %1213 = vmatmul.mubr.f32.gmra.mrb[0].mxu0 %v1031
        %v1214 = vpop.f32.mrb[0].mxu0
        %v1215 = vadd.f32 %v994, %v1214
        %v1216 = vpop.f32.mrb[0].mxu0
        %1217 = vmatprep.mubr.f32.mxu0 0.0
        %1218 = vmatmul.mubr.f32.gmra.mrb[0].mxu0 %v1034
        %v1219 = vpop.f32.mrb[0].mxu0
        %v1220 = vadd.f32 %v994, %v1219
        %v1221 = vpop.f32.mrb[0].mxu0
        %1222 = vmatprep.mubr.f32.mxu0 0.0
        %1223 = vmatmul.mubr.f32.gmra.mrb[0].mxu0 %v1037
        %v1224 = vpop.f32.mrb[0].mxu0
        %v1225 = vadd.f32 %v994, %v1224
        %v1226 = vpop.f32.mrb[0].mxu0
        %1227 = vmatprep.mubr.f32.mxu0 0.0
        %1228 = vmatmul.mubr.f32.gmra.mrb[0].mxu0 %v1040
        %v1229 = vpop.f32.mrb[0].mxu0
        %v1230 = vadd.f32 %v994, %v1229
        %v1231 = vpop.f32.mrb[0].mxu0
        %1232 = vmatprep.mubr.f32.mxu0 0.0
        %1233 = vmatmul.mubr.f32.gmra.mrb[0].mxu0 %v1043
        %v1234 = vpop.f32.mrb[0].mxu0
        %v1235 = vadd.f32 %v994, %v1234
        %v1236 = vpop.f32.mrb[0].mxu0
        %1237 = vmatprep.mubr.f32.mxu0 0.0
        %1238 = vmatmul.mubr.f32.gmra.mrb[0].mxu0 %v1046
        %v1239 = vpop.f32.mrb[0].mxu0
        %v1240 = vadd.f32 %v994, %v1239
        %v1241 = vpop.f32.mrb[0].mxu0
        %1242 = vmatprep.mubr.f32.mxu0 0.0
        %1243 = vmatmul.mubr.f32.gmra.mrb[0].mxu0 %v1049
        %v1244 = vpop.f32.mrb[0].mxu0
        %v1245 = vadd.f32 %v994, %v1244
        %v1246 = vpop.f32.mrb[0].mxu0
        %1247 = vmatprep.mubr.f32.mxu0 0.0
        %1248 = vmatmul.mubr.f32.gmra.mrb[0].mxu0 %v1052
        %v1249 = vpop.f32.mrb[0].mxu0
        %v1250 = vadd.f32 %v994, %v1249
        %v1251 = vpop.f32.mrb[0].mxu0
        %1252 = vmatprep.mubr.f32.mxu0 0.0
        %1253 = vmatmul.mubr.f32.gmra.mrb[0].mxu0 %v1055
        %v1254 = vpop.f32.mrb[0].mxu0
        %v1255 = vadd.f32 %v994, %v1254
        %v1256 = vpop.f32.mrb[0].mxu0
        %1257 = vmatprep.mubr.f32.mxu0 0.0
        %1258 = vmatmul.mubr.f32.gmra.mrb[0].mxu0 %v1058
        %v1259 = vpop.f32.mrb[0].mxu0
        %v1260 = vadd.f32 %v994, %v1259
        %v1261 = vpop.f32.mrb[0].mxu0
        %1262 = vmatprep.mubr.f32.mxu0 0.0
        %1263 = vmatmul.mubr.f32.gmra.mrb[0].mxu0 %v1061
        %v1264 = vpop.f32.mrb[0].mxu0
        %v1265 = vadd.f32 %v994, %v1264
        %v1266 = vpop.f32.mrb[0].mxu0
        %1267 = vmatprep.mubr.f32.mxu0 0.0
        %1268 = vmatmul.mubr.f32.gmra.mrb[0].mxu0 %v1064
        %v1269 = vpop.f32.mrb[0].mxu0
        %v1270 = vadd.f32 %v994, %v1269
        %v1271 = vpop.f32.mrb[0].mxu0
        %1272 = vmatprep.mubr.f32.mxu0 0.0
        %1273 = vmatmul.mubr.f32.gmra.mrb[0].mxu0 %v1067
        %v1274 = vpop.f32.mrb[0].mxu0
        %v1275 = vadd.f32 %v994, %v1274
        %v1276 = vpop.f32.mrb[0].mxu0
        %1277 = vmatprep.mubr.f32.mxu0 0.0
        %1278 = vmatmul.mubr.f32.gmra.mrb[0].mxu0 %v1070
        %v1279 = vpop.f32.mrb[0].mxu0
        %v1280 = vadd.f32 %v994, %v1279
        %v1281 = vpop.f32.mrb[0].mxu0
        %1282 = vmatprep.mubr.f32.mxu0 0.0
        %1283 = vmatmul.mubr.f32.gmra.mrb[0].mxu0 %v1073
        %v1284 = vpop.f32.mrb[0].mxu0
        %v1285 = vadd.f32 %v994, %v1284
        %v1286 = vpop.f32.mrb[0].mxu0
        %1287 = vmatprep.mubr.f32.mxu0 0.0
        %1288 = vmatmul.mubr.f32.gmra.mrb[0].mxu0 %v1076
        %v1289 = vpop.f32.mrb[0].mxu0
        %v1290 = vadd.f32 %v994, %v1289
        %v1291 = vpop.f32.mrb[0].mxu0
        %1292 = vmatprep.mubr.f32.mxu0 0.0
        %1293 = vmatmul.mubr.f32.gmra.mrb[0].mxu0 %v1079
        %v1294 = vpop.f32.mrb[0].mxu0
        %v1295 = vadd.f32 %v994, %v1294
        %v1296 = vpop.f32.mrb[0].mxu0
        %1297 = vmatprep.mubr.f32.mxu0 0.0
        %1298 = vmatmul.mubr.f32.gmra.mrb[0].mxu0 %v1082
        %v1299 = vpop.f32.mrb[0].mxu0
        %v1300 = vadd.f32 %v994, %v1299
        %v1301 = vpop.f32.mrb[0].mxu0
        %1302 = vmatprep.mubr.f32.mxu0 0.0
        %1303 = vmatmul.mubr.f32.gmra.mrb[0].mxu0 %v1085
        %v1304 = vpop.f32.mrb[0].mxu0
        %v1305 = vadd.f32 %v994, %v1304
        %v1306 = vpop.f32.mrb[0].mxu0
        %1307 = vmatprep.mubr.f32.mxu0 0.0
        %1308 = vmatmul.mubr.f32.gmra.mrb[0].mxu0 %v1088
        %v1309 = vpop.f32.mrb[0].mxu0
        %v1310 = vadd.f32 %v994, %v1309
        %v1311 = vpop.f32.mrb[0].mxu0
        %1312 = vmatprep.mubr.f32.mxu0 0.0
        %1313 = vmatmul.mubr.f32.gmra.mrb[0].mxu0 %v1091
        %v1314 = vpop.f32.mrb[0].mxu0
        %v1315 = vadd.f32 %v994, %v1314
        %v1316 = vpop.f32.mrb[0].mxu0
        %1317 = vdwg.mxu0
        %v1318 = vmul.f32 %v1160, 0.01
        %v1319 = vmul.f32 %v1165, 0.01
        %v1320 = vmul.f32 %v1170, 0.01
        %v1321 = vmul.f32 %v1175, 0.01
        %v1322 = vmul.f32 %v1180, 0.01
        %v1323 = vmul.f32 %v1185, 0.01
        %v1324 = vmul.f32 %v1190, 0.01
        %v1325 = vmul.f32 %v1195, 0.01
        %v1326 = vmul.f32 %v1200, 0.01
        %v1327 = vmul.f32 %v1205, 0.01
        %v1328 = vmul.f32 %v1210, 0.01
        %v1329 = vmul.f32 %v1215, 0.01
        %v1330 = vmul.f32 %v1220, 0.01
        %v1331 = vmul.f32 %v1225, 0.01
        %v1332 = vmul.f32 %v1230, 0.01
        %v1333 = vmul.f32 %v1235, 0.01
        %v1334 = vmul.f32 %v1240, 0.01
        %v1335 = vmul.f32 %v1245, 0.01
        %v1336 = vmul.f32 %v1250, 0.01
        %v1337 = vmul.f32 %v1255, 0.01
        %v1338 = vmul.f32 %v1260, 0.01
        %v1339 = vmul.f32 %v1265, 0.01
        %v1340 = vmul.f32 %v1270, 0.01
        %v1341 = vmul.f32 %v1275, 0.01
        %v1342 = vmul.f32 %v1280, 0.01
        %v1343 = vmul.f32 %v1285, 0.01
        %v1344 = vmul.f32 %v1290, 0.01
        %v1345 = vmul.f32 %v1295, 0.01
        %v1346 = vmul.f32 %v1300, 0.01
        %v1347 = vmul.f32 %v1305, 0.01
        %v1348 = vmul.f32 %v1310, 0.01
        %v1349 = vmul.f32 %v1315, 0.01
        %v1350 = vmax.f32 %v1160, %v1318
        %v1351 = vmax.f32 %v1165, %v1319
        %v1352 = vmax.f32 %v1170, %v1320
        %v1353 = vmax.f32 %v1175, %v1321
        %v1354 = vmax.f32 %v1180, %v1322
        %v1355 = vmax.f32 %v1185, %v1323
        %v1356 = vmax.f32 %v1190, %v1324
        %v1357 = vmax.f32 %v1195, %v1325
        %v1358 = vmax.f32 %v1200, %v1326
        %v1359 = vmax.f32 %v1205, %v1327
        %v1360 = vmax.f32 %v1210, %v1328
        %v1361 = vmax.f32 %v1215, %v1329
        %v1362 = vmax.f32 %v1220, %v1330
        %v1363 = vmax.f32 %v1225, %v1331
        %v1364 = vmax.f32 %v1230, %v1332
        %v1365 = vmax.f32 %v1235, %v1333
        %v1366 = vmax.f32 %v1240, %v1334
        %v1367 = vmax.f32 %v1245, %v1335
        %v1368 = vmax.f32 %v1250, %v1336
        %v1369 = vmax.f32 %v1255, %v1337
        %v1370 = vmax.f32 %v1260, %v1338
        %v1371 = vmax.f32 %v1265, %v1339
        %v1372 = vmax.f32 %v1270, %v1340
        %v1373 = vmax.f32 %v1275, %v1341
        %v1374 = vmax.f32 %v1280, %v1342
        %v1375 = vmax.f32 %v1285, %v1343
        %v1376 = vmax.f32 %v1290, %v1344
        %v1377 = vmax.f32 %v1295, %v1345
        %v1378 = vmax.f32 %v1300, %v1346
        %v1379 = vmax.f32 %v1305, %v1347
        %v1380 = vmax.f32 %v1310, %v1348
        %v1381 = vmax.f32 %v1315, %v1349
        %v1382 = vld [vmem:[%s5] sm:$0xff]
        %v1383 = vld [vmem:[%s5 + $0x8] sm:$0xff]
        %v1384 = vld [vmem:[%s5 + $0x10] sm:$0xff]
        %v1385 = vld [vmem:[%s5 + $0x18] sm:$0xff]
        %v1386 = vld [vmem:[%s5 + $0x20] sm:$0xff]
        %v1387 = vld [vmem:[%s5 + $0x28] sm:$0xff]
        %v1388 = vld [vmem:[%s5 + $0x30] sm:$0xff]
        %v1389 = vld [vmem:[%s5 + $0x38] sm:$0xff]
        %v1390 = vld [vmem:[%s5 + $0x40] sm:$0xff]
        %v1391 = vld [vmem:[%s5 + $0x48] sm:$0xff]
        %v1392 = vld [vmem:[%s5 + $0x50] sm:$0xff]
        %v1393 = vld [vmem:[%s5 + $0x58] sm:$0xff]
        %v1394 = vld [vmem:[%s5 + $0x60] sm:$0xff]
        %v1395 = vld [vmem:[%s5 + $0x68] sm:$0xff]
        %v1396 = vld [vmem:[%s5 + $0x70] sm:$0xff]
        %v1397 = vld [vmem:[%s5 + $0x78] sm:$0xff]
        %v1398 = vld [vmem:[%s5 + $0x80] sm:$0xff]
        %v1399 = vld [vmem:[%s5 + $0x88] sm:$0xff]
        %v1400 = vld [vmem:[%s5 + $0x90] sm:$0xff]
        %v1401 = vld [vmem:[%s5 + $0x98] sm:$0xff]
        %v1402 = vld [vmem:[%s5 + $0xa0] sm:$0xff]
        %v1403 = vld [vmem:[%s5 + $0xa8] sm:$0xff]
        %v1404 = vld [vmem:[%s5 + $0xb0] sm:$0xff]
        %v1405 = vld [vmem:[%s5 + $0xb8] sm:$0xff]
        %v1406 = vld [vmem:[%s5 + $0xc0] sm:$0xff]
        %v1407 = vld [vmem:[%s5 + $0xc8] sm:$0xff]
        %v1408 = vld [vmem:[%s5 + $0xd0] sm:$0xff]
        %v1409 = vld [vmem:[%s5 + $0xd8] sm:$0xff]
        %v1410 = vld [vmem:[%s5 + $0xe0] sm:$0xff]
        %v1411 = vld [vmem:[%s5 + $0xe8] sm:$0xff]
        %v1412 = vld [vmem:[%s5 + $0xf0] sm:$0xff]
        %v1413 = vld [vmem:[%s5 + $0xf8] sm:$0xff]
        %v1414 = vld [vmem:[%s6] sm:$0x3]
        %v1416 = vlaneseq
        %v1417 = vshrl.u32 %v1416, 7
        %v1418 = vsub.s32 0, %v1417
        %v1419 = vrot.slane %v1414, %v1418
        %v1420 = vlaneseq
        %v1421 = vshrl.u32 %v1420, 7
        %v1422 = vsub.s32 1, %v1421
        %v1423 = vrot.slane %v1414, %v1422
        %1426 = vmatprep.subr.mxu0 %v1383
        %1427 = vmatpush1.msra.mxu0 %v1382
        %1428 = vmatprep.subr.mxu0 %v1385
        %1429 = vmatpush1.msra.mxu0 %v1384
        %1430 = vmatprep.subr.mxu0 %v1387
        %1431 = vmatpush1.msra.mxu0 %v1386
        %1432 = vmatprep.subr.mxu0 %v1389
        %1433 = vmatpush1.msra.mxu0 %v1388
        %1434 = vmatprep.subr.mxu0 %v1391
        %1435 = vmatpush1.msra.mxu0 %v1390
        %1436 = vmatprep.subr.mxu0 %v1393
        %1437 = vmatpush1.msra.mxu0 %v1392
        %1438 = vmatprep.subr.mxu0 %v1395
        %1439 = vmatpush1.msra.mxu0 %v1394
        %1440 = vmatprep.subr.mxu0 %v1397
        %1441 = vmatpush1.msra.mxu0 %v1396
        %1442 = vmatprep.subr.mxu0 %v1399
        %1443 = vmatpush1.msra.mxu0 %v1398
        %1444 = vmatprep.subr.mxu0 %v1401
        %1445 = vmatpush1.msra.mxu0 %v1400
        %1446 = vmatprep.subr.mxu0 %v1403
        %1447 = vmatpush1.msra.mxu0 %v1402
        %1448 = vmatprep.subr.mxu0 %v1405
        %1449 = vmatpush1.msra.mxu0 %v1404
        %1450 = vmatprep.subr.mxu0 %v1407
        %1451 = vmatpush1.msra.mxu0 %v1406
        %1452 = vmatprep.subr.mxu0 %v1409
        %1453 = vmatpush1.msra.mxu0 %v1408
        %1454 = vmatprep.subr.mxu0 %v1411
        %1455 = vmatpush1.msra.mxu0 %v1410
        %1456 = vmatprep.subr.mxu0 %v1413
        %1457 = vmatpush1.msra.mxu0 %v1412
        %1458 = vmatprep.subr.mxu0 0.0
        %1459 = vmatpush1.msra.mxu0 0.0
        %1460 = vmatprep.subr.mxu0 0.0
        %1461 = vmatpush1.msra.mxu0 0.0
        %1462 = vmatprep.subr.mxu0 0.0
        %1463 = vmatpush1.msra.mxu0 0.0
        %1464 = vmatprep.subr.mxu0 0.0
        %1465 = vmatpush1.msra.mxu0 0.0
        %1466 = vmatprep.subr.mxu0 0.0
        %1467 = vmatpush1.msra.mxu0 0.0
        %1468 = vmatprep.subr.mxu0 0.0
        %1469 = vmatpush1.msra.mxu0 0.0
        %1470 = vmatprep.subr.mxu0 0.0
        %1471 = vmatpush1.msra.mxu0 0.0
        %1472 = vmatprep.subr.mxu0 0.0
        %1473 = vmatpush1.msra.mxu0 0.0
        %1474 = vmatprep.subr.mxu0 0.0
        %1475 = vmatpush1.msra.mxu0 0.0
        %1476 = vmatprep.subr.mxu0 0.0
        %1477 = vmatpush1.msra.mxu0 0.0
        %1478 = vmatprep.subr.mxu0 0.0
        %1479 = vmatpush1.msra.mxu0 0.0
        %1480 = vmatprep.subr.mxu0 0.0
        %1481 = vmatpush1.msra.mxu0 0.0
        %1482 = vmatprep.subr.mxu0 0.0
        %1483 = vmatpush1.msra.mxu0 0.0
        %1484 = vmatprep.subr.mxu0 0.0
        %1485 = vmatpush1.msra.mxu0 0.0
        %1486 = vmatprep.subr.mxu0 0.0
        %1487 = vmatpush1.msra.mxu0 0.0
        %1488 = vmatprep.subr.mxu0 0.0
        %1489 = vmatpush1.msra.mxu0 0.0
        %1490 = vmatprep.mubr.f32.mxu0 0.0
        %1491 = vmatmul.mubr.f32.gmra.mrb[0].mxu0 %v1350
        %v1492 = vpop.f32.mrb[0].mxu0
        %v1493 = vadd.f32 %v1419, %v1492
        %v1494 = vpop.f32.mrb[0].mxu0
        %v1495 = vadd.f32 %v1423, %v1494
        %1496 = vmatprep.mubr.f32.mxu0 0.0
        %1497 = vmatmul.mubr.f32.gmra.mrb[0].mxu0 %v1351
        %v1498 = vpop.f32.mrb[0].mxu0
        %v1499 = vadd.f32 %v1419, %v1498
        %v1500 = vpop.f32.mrb[0].mxu0
        %v1501 = vadd.f32 %v1423, %v1500
        %1502 = vmatprep.mubr.f32.mxu0 0.0
        %1503 = vmatmul.mubr.f32.gmra.mrb[0].mxu0 %v1352
        %v1504 = vpop.f32.mrb[0].mxu0
        %v1505 = vadd.f32 %v1419, %v1504
        %v1506 = vpop.f32.mrb[0].mxu0
        %v1507 = vadd.f32 %v1423, %v1506
        %1508 = vmatprep.mubr.f32.mxu0 0.0
        %1509 = vmatmul.mubr.f32.gmra.mrb[0].mxu0 %v1353
        %v1510 = vpop.f32.mrb[0].mxu0
        %v1511 = vadd.f32 %v1419, %v1510
        %v1512 = vpop.f32.mrb[0].mxu0
        %v1513 = vadd.f32 %v1423, %v1512
        %1514 = vmatprep.mubr.f32.mxu0 0.0
        %1515 = vmatmul.mubr.f32.gmra.mrb[0].mxu0 %v1354
        %v1516 = vpop.f32.mrb[0].mxu0
        %v1517 = vadd.f32 %v1419, %v1516
        %v1518 = vpop.f32.mrb[0].mxu0
        %v1519 = vadd.f32 %v1423, %v1518
        %1520 = vmatprep.mubr.f32.mxu0 0.0
        %1521 = vmatmul.mubr.f32.gmra.mrb[0].mxu0 %v1355
        %v1522 = vpop.f32.mrb[0].mxu0
        %v1523 = vadd.f32 %v1419, %v1522
        %v1524 = vpop.f32.mrb[0].mxu0
        %v1525 = vadd.f32 %v1423, %v1524
        %1526 = vmatprep.mubr.f32.mxu0 0.0
        %1527 = vmatmul.mubr.f32.gmra.mrb[0].mxu0 %v1356
        %v1528 = vpop.f32.mrb[0].mxu0
        %v1529 = vadd.f32 %v1419, %v1528
        %v1530 = vpop.f32.mrb[0].mxu0
        %v1531 = vadd.f32 %v1423, %v1530
        %1532 = vmatprep.mubr.f32.mxu0 0.0
        %1533 = vmatmul.mubr.f32.gmra.mrb[0].mxu0 %v1357
        %v1534 = vpop.f32.mrb[0].mxu0
        %v1535 = vadd.f32 %v1419, %v1534
        %v1536 = vpop.f32.mrb[0].mxu0
        %v1537 = vadd.f32 %v1423, %v1536
        %1538 = vmatprep.mubr.f32.mxu0 0.0
        %1539 = vmatmul.mubr.f32.gmra.mrb[0].mxu0 %v1358
        %v1540 = vpop.f32.mrb[0].mxu0
        %v1541 = vadd.f32 %v1419, %v1540
        %v1542 = vpop.f32.mrb[0].mxu0
        %v1543 = vadd.f32 %v1423, %v1542
        %1544 = vmatprep.mubr.f32.mxu0 0.0
        %1545 = vmatmul.mubr.f32.gmra.mrb[0].mxu0 %v1359
        %v1546 = vpop.f32.mrb[0].mxu0
        %v1547 = vadd.f32 %v1419, %v1546
        %v1548 = vpop.f32.mrb[0].mxu0
        %v1549 = vadd.f32 %v1423, %v1548
        %1550 = vmatprep.mubr.f32.mxu0 0.0
        %1551 = vmatmul.mubr.f32.gmra.mrb[0].mxu0 %v1360
        %v1552 = vpop.f32.mrb[0].mxu0
        %v1553 = vadd.f32 %v1419, %v1552
        %v1554 = vpop.f32.mrb[0].mxu0
        %v1555 = vadd.f32 %v1423, %v1554
        %1556 = vmatprep.mubr.f32.mxu0 0.0
        %1557 = vmatmul.mubr.f32.gmra.mrb[0].mxu0 %v1361
        %v1558 = vpop.f32.mrb[0].mxu0
        %v1559 = vadd.f32 %v1419, %v1558
        %v1560 = vpop.f32.mrb[0].mxu0
        %v1561 = vadd.f32 %v1423, %v1560
        %1562 = vmatprep.mubr.f32.mxu0 0.0
        %1563 = vmatmul.mubr.f32.gmra.mrb[0].mxu0 %v1362
        %v1564 = vpop.f32.mrb[0].mxu0
        %v1565 = vadd.f32 %v1419, %v1564
        %v1566 = vpop.f32.mrb[0].mxu0
        %v1567 = vadd.f32 %v1423, %v1566
        %1568 = vmatprep.mubr.f32.mxu0 0.0
        %1569 = vmatmul.mubr.f32.gmra.mrb[0].mxu0 %v1363
        %v1570 = vpop.f32.mrb[0].mxu0
        %v1571 = vadd.f32 %v1419, %v1570
        %v1572 = vpop.f32.mrb[0].mxu0
        %v1573 = vadd.f32 %v1423, %v1572
        %1574 = vmatprep.mubr.f32.mxu0 0.0
        %1575 = vmatmul.mubr.f32.gmra.mrb[0].mxu0 %v1364
        %v1576 = vpop.f32.mrb[0].mxu0
        %v1577 = vadd.f32 %v1419, %v1576
        %v1578 = vpop.f32.mrb[0].mxu0
        %v1579 = vadd.f32 %v1423, %v1578
        %1580 = vmatprep.mubr.f32.mxu0 0.0
        %1581 = vmatmul.mubr.f32.gmra.mrb[0].mxu0 %v1365
        %v1582 = vpop.f32.mrb[0].mxu0
        %v1583 = vadd.f32 %v1419, %v1582
        %v1584 = vpop.f32.mrb[0].mxu0
        %v1585 = vadd.f32 %v1423, %v1584
        %1586 = vmatprep.mubr.f32.mxu0 0.0
        %1587 = vmatmul.mubr.f32.gmra.mrb[0].mxu0 %v1366
        %v1588 = vpop.f32.mrb[0].mxu0
        %v1589 = vadd.f32 %v1419, %v1588
        %v1590 = vpop.f32.mrb[0].mxu0
        %v1591 = vadd.f32 %v1423, %v1590
        %1592 = vmatprep.mubr.f32.mxu0 0.0
        %1593 = vmatmul.mubr.f32.gmra.mrb[0].mxu0 %v1367
        %v1594 = vpop.f32.mrb[0].mxu0
        %v1595 = vadd.f32 %v1419, %v1594
        %v1596 = vpop.f32.mrb[0].mxu0
        %v1597 = vadd.f32 %v1423, %v1596
        %1598 = vmatprep.mubr.f32.mxu0 0.0
        %1599 = vmatmul.mubr.f32.gmra.mrb[0].mxu0 %v1368
        %v1600 = vpop.f32.mrb[0].mxu0
        %v1601 = vadd.f32 %v1419, %v1600
        %v1602 = vpop.f32.mrb[0].mxu0
        %v1603 = vadd.f32 %v1423, %v1602
        %1604 = vmatprep.mubr.f32.mxu0 0.0
        %1605 = vmatmul.mubr.f32.gmra.mrb[0].mxu0 %v1369
        %v1606 = vpop.f32.mrb[0].mxu0
        %v1607 = vadd.f32 %v1419, %v1606
        %v1608 = vpop.f32.mrb[0].mxu0
        %v1609 = vadd.f32 %v1423, %v1608
        %1610 = vmatprep.mubr.f32.mxu0 0.0
        %1611 = vmatmul.mubr.f32.gmra.mrb[0].mxu0 %v1370
        %v1612 = vpop.f32.mrb[0].mxu0
        %v1613 = vadd.f32 %v1419, %v1612
        %v1614 = vpop.f32.mrb[0].mxu0
        %v1615 = vadd.f32 %v1423, %v1614
        %1616 = vmatprep.mubr.f32.mxu0 0.0
        %1617 = vmatmul.mubr.f32.gmra.mrb[0].mxu0 %v1371
        %v1618 = vpop.f32.mrb[0].mxu0
        %v1619 = vadd.f32 %v1419, %v1618
        %v1620 = vpop.f32.mrb[0].mxu0
        %v1621 = vadd.f32 %v1423, %v1620
        %1622 = vmatprep.mubr.f32.mxu0 0.0
        %1623 = vmatmul.mubr.f32.gmra.mrb[0].mxu0 %v1372
        %v1624 = vpop.f32.mrb[0].mxu0
        %v1625 = vadd.f32 %v1419, %v1624
        %v1626 = vpop.f32.mrb[0].mxu0
        %v1627 = vadd.f32 %v1423, %v1626
        %1628 = vmatprep.mubr.f32.mxu0 0.0
        %1629 = vmatmul.mubr.f32.gmra.mrb[0].mxu0 %v1373
        %v1630 = vpop.f32.mrb[0].mxu0
        %v1631 = vadd.f32 %v1419, %v1630
        %v1632 = vpop.f32.mrb[0].mxu0
        %v1633 = vadd.f32 %v1423, %v1632
        %1634 = vmatprep.mubr.f32.mxu0 0.0
        %1635 = vmatmul.mubr.f32.gmra.mrb[0].mxu0 %v1374
        %v1636 = vpop.f32.mrb[0].mxu0
        %v1637 = vadd.f32 %v1419, %v1636
        %v1638 = vpop.f32.mrb[0].mxu0
        %v1639 = vadd.f32 %v1423, %v1638
        %1640 = vmatprep.mubr.f32.mxu0 0.0
        %1641 = vmatmul.mubr.f32.gmra.mrb[0].mxu0 %v1375
        %v1642 = vpop.f32.mrb[0].mxu0
        %v1643 = vadd.f32 %v1419, %v1642
        %v1644 = vpop.f32.mrb[0].mxu0
        %v1645 = vadd.f32 %v1423, %v1644
        %1646 = vmatprep.mubr.f32.mxu0 0.0
        %1647 = vmatmul.mubr.f32.gmra.mrb[0].mxu0 %v1376
        %v1648 = vpop.f32.mrb[0].mxu0
        %v1649 = vadd.f32 %v1419, %v1648
        %v1650 = vpop.f32.mrb[0].mxu0
        %v1651 = vadd.f32 %v1423, %v1650
        %1652 = vmatprep.mubr.f32.mxu0 0.0
        %1653 = vmatmul.mubr.f32.gmra.mrb[0].mxu0 %v1377
        %v1654 = vpop.f32.mrb[0].mxu0
        %v1655 = vadd.f32 %v1419, %v1654
        %v1656 = vpop.f32.mrb[0].mxu0
        %v1657 = vadd.f32 %v1423, %v1656
        %1658 = vmatprep.mubr.f32.mxu0 0.0
        %1659 = vmatmul.mubr.f32.gmra.mrb[0].mxu0 %v1378
        %v1660 = vpop.f32.mrb[0].mxu0
        %v1661 = vadd.f32 %v1419, %v1660
        %v1662 = vpop.f32.mrb[0].mxu0
        %v1663 = vadd.f32 %v1423, %v1662
        %1664 = vmatprep.mubr.f32.mxu0 0.0
        %1665 = vmatmul.mubr.f32.gmra.mrb[0].mxu0 %v1379
        %v1666 = vpop.f32.mrb[0].mxu0
        %v1667 = vadd.f32 %v1419, %v1666
        %v1668 = vpop.f32.mrb[0].mxu0
        %v1669 = vadd.f32 %v1423, %v1668
        %1670 = vmatprep.mubr.f32.mxu0 0.0
        %1671 = vmatmul.mubr.f32.gmra.mrb[0].mxu0 %v1380
        %v1672 = vpop.f32.mrb[0].mxu0
        %v1673 = vadd.f32 %v1419, %v1672
        %v1674 = vpop.f32.mrb[0].mxu0
        %v1675 = vadd.f32 %v1423, %v1674
        %1676 = vmatprep.mubr.f32.mxu0 0.0
        %1677 = vmatmul.mubr.f32.gmra.mrb[0].mxu0 %v1381
        %v1678 = vpop.f32.mrb[0].mxu0
        %v1679 = vadd.f32 %v1419, %v1678
        %v1680 = vpop.f32.mrb[0].mxu0
        %v1681 = vadd.f32 %v1423, %v1680
        %1682 = vdwg.mxu0
        %v1683 = vmul.f32 %v1493, 0.01
        %v1684 = vmul.f32 %v1495, 0.01
        %v1685 = vmul.f32 %v1499, 0.01
        %v1686 = vmul.f32 %v1501, 0.01
        %v1687 = vmul.f32 %v1505, 0.01
        %v1688 = vmul.f32 %v1507, 0.01
        %v1689 = vmul.f32 %v1511, 0.01
        %v1690 = vmul.f32 %v1513, 0.01
        %v1691 = vmul.f32 %v1517, 0.01
        %v1692 = vmul.f32 %v1519, 0.01
        %v1693 = vmul.f32 %v1523, 0.01
        %v1694 = vmul.f32 %v1525, 0.01
        %v1695 = vmul.f32 %v1529, 0.01
        %v1696 = vmul.f32 %v1531, 0.01
        %v1697 = vmul.f32 %v1535, 0.01
        %v1698 = vmul.f32 %v1537, 0.01
        %v1699 = vmul.f32 %v1541, 0.01
        %v1700 = vmul.f32 %v1543, 0.01
        %v1701 = vmul.f32 %v1547, 0.01
        %v1702 = vmul.f32 %v1549, 0.01
        %v1703 = vmul.f32 %v1553, 0.01
        %v1704 = vmul.f32 %v1555, 0.01
        %v1705 = vmul.f32 %v1559, 0.01
        %v1706 = vmul.f32 %v1561, 0.01
        %v1707 = vmul.f32 %v1565, 0.01
        %v1708 = vmul.f32 %v1567, 0.01
        %v1709 = vmul.f32 %v1571, 0.01
        %v1710 = vmul.f32 %v1573, 0.01
        %v1711 = vmul.f32 %v1577, 0.01
        %v1712 = vmul.f32 %v1579, 0.01
        %v1713 = vmul.f32 %v1583, 0.01
        %v1714 = vmul.f32 %v1585, 0.01
        %v1715 = vmul.f32 %v1589, 0.01
        %v1716 = vmul.f32 %v1591, 0.01
        %v1717 = vmul.f32 %v1595, 0.01
        %v1718 = vmul.f32 %v1597, 0.01
        %v1719 = vmul.f32 %v1601, 0.01
        %v1720 = vmul.f32 %v1603, 0.01
        %v1721 = vmul.f32 %v1607, 0.01
        %v1722 = vmul.f32 %v1609, 0.01
        %v1723 = vmul.f32 %v1613, 0.01
        %v1724 = vmul.f32 %v1615, 0.01
        %v1725 = vmul.f32 %v1619, 0.01
        %v1726 = vmul.f32 %v1621, 0.01
        %v1727 = vmul.f32 %v1625, 0.01
        %v1728 = vmul.f32 %v1627, 0.01
        %v1729 = vmul.f32 %v1631, 0.01
        %v1730 = vmul.f32 %v1633, 0.01
        %v1731 = vmul.f32 %v1637, 0.01
        %v1732 = vmul.f32 %v1639, 0.01
        %v1733 = vmul.f32 %v1643, 0.01
        %v1734 = vmul.f32 %v1645, 0.01
        %v1735 = vmul.f32 %v1649, 0.01
        %v1736 = vmul.f32 %v1651, 0.01
        %v1737 = vmul.f32 %v1655, 0.01
        %v1738 = vmul.f32 %v1657, 0.01
        %v1739 = vmul.f32 %v1661, 0.01
        %v1740 = vmul.f32 %v1663, 0.01
        %v1741 = vmul.f32 %v1667, 0.01
        %v1742 = vmul.f32 %v1669, 0.01
        %v1743 = vmul.f32 %v1673, 0.01
        %v1744 = vmul.f32 %v1675, 0.01
        %v1745 = vmul.f32 %v1679, 0.01
        %v1746 = vmul.f32 %v1681, 0.01
        %v1747 = vmax.f32 %v1493, %v1683
        %v1748 = vmax.f32 %v1495, %v1684
        %v1749 = vmax.f32 %v1499, %v1685
        %v1750 = vmax.f32 %v1501, %v1686
        %v1751 = vmax.f32 %v1505, %v1687
        %v1752 = vmax.f32 %v1507, %v1688
        %v1753 = vmax.f32 %v1511, %v1689
        %v1754 = vmax.f32 %v1513, %v1690
        %v1755 = vmax.f32 %v1517, %v1691
        %v1756 = vmax.f32 %v1519, %v1692
        %v1757 = vmax.f32 %v1523, %v1693
        %v1758 = vmax.f32 %v1525, %v1694
        %v1759 = vmax.f32 %v1529, %v1695
        %v1760 = vmax.f32 %v1531, %v1696
        %v1761 = vmax.f32 %v1535, %v1697
        %v1762 = vmax.f32 %v1537, %v1698
        %v1763 = vmax.f32 %v1541, %v1699
        %v1764 = vmax.f32 %v1543, %v1700
        %v1765 = vmax.f32 %v1547, %v1701
        %v1766 = vmax.f32 %v1549, %v1702
        %v1767 = vmax.f32 %v1553, %v1703
        %v1768 = vmax.f32 %v1555, %v1704
        %v1769 = vmax.f32 %v1559, %v1705
        %v1770 = vmax.f32 %v1561, %v1706
        %v1771 = vmax.f32 %v1565, %v1707
        %v1772 = vmax.f32 %v1567, %v1708
        %v1773 = vmax.f32 %v1571, %v1709
        %v1774 = vmax.f32 %v1573, %v1710
        %v1775 = vmax.f32 %v1577, %v1711
        %v1776 = vmax.f32 %v1579, %v1712
        %v1777 = vmax.f32 %v1583, %v1713
        %v1778 = vmax.f32 %v1585, %v1714
        %v1779 = vmax.f32 %v1589, %v1715
        %v1780 = vmax.f32 %v1591, %v1716
        %v1781 = vmax.f32 %v1595, %v1717
        %v1782 = vmax.f32 %v1597, %v1718
        %v1783 = vmax.f32 %v1601, %v1719
        %v1784 = vmax.f32 %v1603, %v1720
        %v1785 = vmax.f32 %v1607, %v1721
        %v1786 = vmax.f32 %v1609, %v1722
        %v1787 = vmax.f32 %v1613, %v1723
        %v1788 = vmax.f32 %v1615, %v1724
        %v1789 = vmax.f32 %v1619, %v1725
        %v1790 = vmax.f32 %v1621, %v1726
        %v1791 = vmax.f32 %v1625, %v1727
        %v1792 = vmax.f32 %v1627, %v1728
        %v1793 = vmax.f32 %v1631, %v1729
        %v1794 = vmax.f32 %v1633, %v1730
        %v1795 = vmax.f32 %v1637, %v1731
        %v1796 = vmax.f32 %v1639, %v1732
        %v1797 = vmax.f32 %v1643, %v1733
        %v1798 = vmax.f32 %v1645, %v1734
        %v1799 = vmax.f32 %v1649, %v1735
        %v1800 = vmax.f32 %v1651, %v1736
        %v1801 = vmax.f32 %v1655, %v1737
        %v1802 = vmax.f32 %v1657, %v1738
        %v1803 = vmax.f32 %v1661, %v1739
        %v1804 = vmax.f32 %v1663, %v1740
        %v1805 = vmax.f32 %v1667, %v1741
        %v1806 = vmax.f32 %v1669, %v1742
        %v1807 = vmax.f32 %v1673, %v1743
        %v1808 = vmax.f32 %v1675, %v1744
        %v1809 = vmax.f32 %v1679, %v1745
        %v1810 = vmax.f32 %v1681, %v1746
        %v1811 = vld [vmem:[#allocation4] sm:$0xff]
        %v1812 = vld [vmem:[#allocation4 + $0x8] sm:$0xff]
        %v1813 = vld [vmem:[#allocation4 + $0x10] sm:$0xff]
        %v1814 = vld [vmem:[#allocation4 + $0x18] sm:$0xff]
        %v1815 = vld [vmem:[#allocation4 + $0x20] sm:$0xff]
        %v1816 = vld [vmem:[#allocation4 + $0x28] sm:$0xff]
        %v1817 = vld [vmem:[#allocation4 + $0x30] sm:$0xff]
        %v1818 = vld [vmem:[#allocation4 + $0x38] sm:$0xff]
        %v1819 = vld [vmem:[#allocation4 + $0x40] sm:$0xff]
        %v1820 = vld [vmem:[#allocation4 + $0x48] sm:$0xff]
        %v1821 = vld [vmem:[#allocation4 + $0x50] sm:$0xff]
        %v1822 = vld [vmem:[#allocation4 + $0x58] sm:$0xff]
        %v1823 = vld [vmem:[#allocation4 + $0x60] sm:$0xff]
        %v1824 = vld [vmem:[#allocation4 + $0x68] sm:$0xff]
        %v1825 = vld [vmem:[#allocation4 + $0x70] sm:$0xff]
        %v1826 = vld [vmem:[#allocation4 + $0x78] sm:$0xff]
        %v1827 = vld [vmem:[#allocation4 + $0x80] sm:$0xff]
        %v1828 = vld [vmem:[#allocation4 + $0x88] sm:$0xff]
        %v1829 = vld [vmem:[#allocation4 + $0x90] sm:$0xff]
        %v1830 = vld [vmem:[#allocation4 + $0x98] sm:$0xff]
        %v1831 = vld [vmem:[#allocation4 + $0xa0] sm:$0xff]
        %v1832 = vld [vmem:[#allocation4 + $0xa8] sm:$0xff]
        %v1833 = vld [vmem:[#allocation4 + $0xb0] sm:$0xff]
        %v1834 = vld [vmem:[#allocation4 + $0xb8] sm:$0xff]
        %v1835 = vld [vmem:[#allocation4 + $0xc0] sm:$0xff]
        %v1836 = vld [vmem:[#allocation4 + $0xc8] sm:$0xff]
        %v1837 = vld [vmem:[#allocation4 + $0xd0] sm:$0xff]
        %v1838 = vld [vmem:[#allocation4 + $0xd8] sm:$0xff]
        %v1839 = vld [vmem:[#allocation4 + $0xe0] sm:$0xff]
        %v1840 = vld [vmem:[#allocation4 + $0xe8] sm:$0xff]
        %v1841 = vld [vmem:[#allocation4 + $0xf0] sm:$0xff]
        %v1842 = vld [vmem:[#allocation4 + $0xf8] sm:$0xff]
        %v1843 = vld [vmem:[#allocation4 + $0x100] sm:$0xff]
        %v1844 = vld [vmem:[#allocation4 + $0x108] sm:$0xff]
        %v1845 = vld [vmem:[#allocation4 + $0x110] sm:$0xff]
        %v1846 = vld [vmem:[#allocation4 + $0x118] sm:$0xff]
        %v1847 = vld [vmem:[#allocation4 + $0x120] sm:$0xff]
        %v1848 = vld [vmem:[#allocation4 + $0x128] sm:$0xff]
        %v1849 = vld [vmem:[#allocation4 + $0x130] sm:$0xff]
        %v1850 = vld [vmem:[#allocation4 + $0x138] sm:$0xff]
        %v1851 = vld [vmem:[#allocation4 + $0x140] sm:$0xff]
        %v1852 = vld [vmem:[#allocation4 + $0x148] sm:$0xff]
        %v1853 = vld [vmem:[#allocation4 + $0x150] sm:$0xff]
        %v1854 = vld [vmem:[#allocation4 + $0x158] sm:$0xff]
        %v1855 = vld [vmem:[#allocation4 + $0x160] sm:$0xff]
        %v1856 = vld [vmem:[#allocation4 + $0x168] sm:$0xff]
        %v1857 = vld [vmem:[#allocation4 + $0x170] sm:$0xff]
        %v1858 = vld [vmem:[#allocation4 + $0x178] sm:$0xff]
        %v1859 = vld [vmem:[#allocation4 + $0x180] sm:$0xff]
        %v1860 = vld [vmem:[#allocation4 + $0x188] sm:$0xff]
        %v1861 = vld [vmem:[#allocation4 + $0x190] sm:$0xff]
        %v1862 = vld [vmem:[#allocation4 + $0x198] sm:$0xff]
        %v1863 = vld [vmem:[#allocation4 + $0x1a0] sm:$0xff]
        %v1864 = vld [vmem:[#allocation4 + $0x1a8] sm:$0xff]
        %v1865 = vld [vmem:[#allocation4 + $0x1b0] sm:$0xff]
        %v1866 = vld [vmem:[#allocation4 + $0x1b8] sm:$0xff]
        %v1867 = vld [vmem:[#allocation4 + $0x1c0] sm:$0xff]
        %v1868 = vld [vmem:[#allocation4 + $0x1c8] sm:$0xff]
        %v1869 = vld [vmem:[#allocation4 + $0x1d0] sm:$0xff]
        %v1870 = vld [vmem:[#allocation4 + $0x1d8] sm:$0xff]
        %v1871 = vld [vmem:[#allocation4 + $0x1e0] sm:$0xff]
        %v1872 = vld [vmem:[#allocation4 + $0x1e8] sm:$0xff]
        %v1873 = vld [vmem:[#allocation4 + $0x1f0] sm:$0xff]
        %v1874 = vld [vmem:[#allocation4 + $0x1f8] sm:$0xff]
        %v1875 = vld [vmem:[#allocation4 + $0x200] sm:$0xff]
        %v1876 = vld [vmem:[#allocation4 + $0x208] sm:$0xff]
        %v1877 = vld [vmem:[#allocation4 + $0x210] sm:$0xff]
        %v1878 = vld [vmem:[#allocation4 + $0x218] sm:$0xff]
        %v1879 = vld [vmem:[#allocation4 + $0x220] sm:$0xff]
        %v1880 = vld [vmem:[#allocation4 + $0x228] sm:$0xff]
        %v1881 = vld [vmem:[#allocation4 + $0x230] sm:$0xff]
        %v1882 = vld [vmem:[#allocation4 + $0x238] sm:$0xff]
        %v1883 = vld [vmem:[#allocation4 + $0x240] sm:$0xff]
        %v1884 = vld [vmem:[#allocation4 + $0x248] sm:$0xff]
        %v1885 = vld [vmem:[#allocation4 + $0x250] sm:$0xff]
        %v1886 = vld [vmem:[#allocation4 + $0x258] sm:$0xff]
        %v1887 = vld [vmem:[#allocation4 + $0x260] sm:$0xff]
        %v1888 = vld [vmem:[#allocation4 + $0x268] sm:$0xff]
        %v1889 = vld [vmem:[#allocation4 + $0x270] sm:$0xff]
        %v1890 = vld [vmem:[#allocation4 + $0x278] sm:$0xff]
        %v1891 = vld [vmem:[#allocation4 + $0x280] sm:$0xff]
        %v1892 = vld [vmem:[#allocation4 + $0x288] sm:$0xff]
        %v1893 = vld [vmem:[#allocation4 + $0x290] sm:$0xff]
        %v1894 = vld [vmem:[#allocation4 + $0x298] sm:$0xff]
        %v1895 = vld [vmem:[#allocation4 + $0x2a0] sm:$0xff]
        %v1896 = vld [vmem:[#allocation4 + $0x2a8] sm:$0xff]
        %v1897 = vld [vmem:[#allocation4 + $0x2b0] sm:$0xff]
        %v1898 = vld [vmem:[#allocation4 + $0x2b8] sm:$0xff]
        %v1899 = vld [vmem:[#allocation4 + $0x2c0] sm:$0xff]
        %v1900 = vld [vmem:[#allocation4 + $0x2c8] sm:$0xff]
        %v1901 = vld [vmem:[#allocation4 + $0x2d0] sm:$0xff]
        %v1902 = vld [vmem:[#allocation4 + $0x2d8] sm:$0xff]
        %v1903 = vld [vmem:[#allocation4 + $0x2e0] sm:$0xff]
        %v1904 = vld [vmem:[#allocation4 + $0x2e8] sm:$0xff]
        %v1905 = vld [vmem:[#allocation4 + $0x2f0] sm:$0xff]
        %v1906 = vld [vmem:[#allocation4 + $0x2f8] sm:$0xff]
        %v1907 = vld [vmem:[#allocation4 + $0x300] sm:$0xff]
        %v1908 = vld [vmem:[#allocation4 + $0x308] sm:$0xff]
        %v1909 = vld [vmem:[#allocation4 + $0x310] sm:$0xff]
        %v1910 = vld [vmem:[#allocation4 + $0x318] sm:$0xff]
        %v1911 = vld [vmem:[#allocation4 + $0x320] sm:$0xff]
        %v1912 = vld [vmem:[#allocation4 + $0x328] sm:$0xff]
        %v1913 = vld [vmem:[#allocation4 + $0x330] sm:$0xff]
        %v1914 = vld [vmem:[#allocation4 + $0x338] sm:$0xff]
        %v1915 = vld [vmem:[#allocation4 + $0x340] sm:$0xff]
        %v1916 = vld [vmem:[#allocation4 + $0x348] sm:$0xff]
        %v1917 = vld [vmem:[#allocation4 + $0x350] sm:$0xff]
        %v1918 = vld [vmem:[#allocation4 + $0x358] sm:$0xff]
        %v1919 = vld [vmem:[#allocation4 + $0x360] sm:$0xff]
        %v1920 = vld [vmem:[#allocation4 + $0x368] sm:$0xff]
        %v1921 = vld [vmem:[#allocation4 + $0x370] sm:$0xff]
        %v1922 = vld [vmem:[#allocation4 + $0x378] sm:$0xff]
        %v1923 = vld [vmem:[#allocation4 + $0x380] sm:$0xff]
        %v1924 = vld [vmem:[#allocation4 + $0x388] sm:$0xff]
        %v1925 = vld [vmem:[#allocation4 + $0x390] sm:$0xff]
        %v1926 = vld [vmem:[#allocation4 + $0x398] sm:$0xff]
        %v1927 = vld [vmem:[#allocation4 + $0x3a0] sm:$0xff]
        %v1928 = vld [vmem:[#allocation4 + $0x3a8] sm:$0xff]
        %v1929 = vld [vmem:[#allocation4 + $0x3b0] sm:$0xff]
        %v1930 = vld [vmem:[#allocation4 + $0x3b8] sm:$0xff]
        %v1931 = vld [vmem:[#allocation4 + $0x3c0] sm:$0xff]
        %v1932 = vld [vmem:[#allocation4 + $0x3c8] sm:$0xff]
        %v1933 = vld [vmem:[#allocation4 + $0x3d0] sm:$0xff]
        %v1934 = vld [vmem:[#allocation4 + $0x3d8] sm:$0xff]
        %v1935 = vld [vmem:[#allocation4 + $0x3e0] sm:$0xff]
        %v1936 = vld [vmem:[#allocation4 + $0x3e8] sm:$0xff]
        %v1937 = vld [vmem:[#allocation4 + $0x3f0] sm:$0xff]
        %v1938 = vld [vmem:[#allocation4 + $0x3f8] sm:$0xff]
        %v1939 = vld [vmem:[%s8] sm:$0xf]
        %v1941 = vlaneseq
        %v1942 = vshrl.u32 %v1941, 7
        %v1943 = vsub.s32 0, %v1942
        %v1944 = vrot.slane %v1939, %v1943
        %v1945 = vlaneseq
        %v1946 = vshrl.u32 %v1945, 7
        %v1947 = vsub.s32 1, %v1946
        %v1948 = vrot.slane %v1939, %v1947
        %v1949 = vlaneseq
        %v1950 = vshrl.u32 %v1949, 7
        %v1951 = vsub.s32 2, %v1950
        %v1952 = vrot.slane %v1939, %v1951
        %v1953 = vlaneseq
        %v1954 = vshrl.u32 %v1953, 7
        %v1955 = vsub.s32 3, %v1954
        %v1956 = vrot.slane %v1939, %v1955
        %1961 = vmatprep.subr.mxu0 %v1812
        %1962 = vmatpush1.msra.mxu0 %v1811
        %1963 = vmatprep.subr.mxu0 %v1816
        %1964 = vmatpush1.msra.mxu0 %v1815
        %1965 = vmatprep.subr.mxu0 %v1820
        %1966 = vmatpush1.msra.mxu0 %v1819
        %1967 = vmatprep.subr.mxu0 %v1824
        %1968 = vmatpush1.msra.mxu0 %v1823
        %1969 = vmatprep.subr.mxu0 %v1828
        %1970 = vmatpush1.msra.mxu0 %v1827
        %1971 = vmatprep.subr.mxu0 %v1832
        %1972 = vmatpush1.msra.mxu0 %v1831
        %1973 = vmatprep.subr.mxu0 %v1836
        %1974 = vmatpush1.msra.mxu0 %v1835
        %1975 = vmatprep.subr.mxu0 %v1840
        %1976 = vmatpush1.msra.mxu0 %v1839
        %1977 = vmatprep.subr.mxu0 %v1844
        %1978 = vmatpush1.msra.mxu0 %v1843
        %1979 = vmatprep.subr.mxu0 %v1848
        %1980 = vmatpush1.msra.mxu0 %v1847
        %1981 = vmatprep.subr.mxu0 %v1852
        %1982 = vmatpush1.msra.mxu0 %v1851
        %1983 = vmatprep.subr.mxu0 %v1856
        %1984 = vmatpush1.msra.mxu0 %v1855
        %1985 = vmatprep.subr.mxu0 %v1860
        %1986 = vmatpush1.msra.mxu0 %v1859
        %1987 = vmatprep.subr.mxu0 %v1864
        %1988 = vmatpush1.msra.mxu0 %v1863
        %1989 = vmatprep.subr.mxu0 %v1868
        %1990 = vmatpush1.msra.mxu0 %v1867
        %1991 = vmatprep.subr.mxu0 %v1872
        %1992 = vmatpush1.msra.mxu0 %v1871
        %1993 = vmatprep.subr.mxu0 %v1876
        %1994 = vmatpush1.msra.mxu0 %v1875
        %1995 = vmatprep.subr.mxu0 %v1880
        %1996 = vmatpush1.msra.mxu0 %v1879
        %1997 = vmatprep.subr.mxu0 %v1884
        %1998 = vmatpush1.msra.mxu0 %v1883
        %1999 = vmatprep.subr.mxu0 %v1888
        %2000 = vmatpush1.msra.mxu0 %v1887
        %2001 = vmatprep.subr.mxu0 %v1892
        %2002 = vmatpush1.msra.mxu0 %v1891
        %2003 = vmatprep.subr.mxu0 %v1896
        %2004 = vmatpush1.msra.mxu0 %v1895
        %2005 = vmatprep.subr.mxu0 %v1900
        %2006 = vmatpush1.msra.mxu0 %v1899
        %2007 = vmatprep.subr.mxu0 %v1904
        %2008 = vmatpush1.msra.mxu0 %v1903
        %2009 = vmatprep.subr.mxu0 %v1908
        %2010 = vmatpush1.msra.mxu0 %v1907
        %2011 = vmatprep.subr.mxu0 %v1912
        %2012 = vmatpush1.msra.mxu0 %v1911
        %2013 = vmatprep.subr.mxu0 %v1916
        %2014 = vmatpush1.msra.mxu0 %v1915
        %2015 = vmatprep.subr.mxu0 %v1920
        %2016 = vmatpush1.msra.mxu0 %v1919
        %2017 = vmatprep.subr.mxu0 %v1924
        %2018 = vmatpush1.msra.mxu0 %v1923
        %2019 = vmatprep.subr.mxu0 %v1928
        %2020 = vmatpush1.msra.mxu0 %v1927
        %2021 = vmatprep.subr.mxu0 %v1932
        %2022 = vmatpush1.msra.mxu0 %v1931
        %2023 = vmatprep.subr.mxu0 %v1936
        %2024 = vmatpush1.msra.mxu0 %v1935
        %2025 = vmatprep.mubr.f32.mxu0 %v1748
        %2026 = vmatmul.mubr.f32.gmra.mrb[0].mxu0 %v1747
        %v2027 = vpop.f32.mrb[0].mxu0
        %v2028 = vadd.f32 %v1944, %v2027
        %v2029 = vpop.f32.mrb[0].mxu0
        %v2030 = vadd.f32 %v1948, %v2029
        %2031 = vmatprep.mubr.f32.mxu0 %v1750
        %2032 = vmatmul.mubr.f32.gmra.mrb[0].mxu0 %v1749
        %v2033 = vpop.f32.mrb[0].mxu0
        %v2034 = vadd.f32 %v1944, %v2033
        %v2035 = vpop.f32.mrb[0].mxu0
        %v2036 = vadd.f32 %v1948, %v2035
        %2037 = vmatprep.mubr.f32.mxu0 %v1752
        %2038 = vmatmul.mubr.f32.gmra.mrb[0].mxu0 %v1751
        %v2039 = vpop.f32.mrb[0].mxu0
        %v2040 = vadd.f32 %v1944, %v2039
        %v2041 = vpop.f32.mrb[0].mxu0
        %v2042 = vadd.f32 %v1948, %v2041
        %2043 = vmatprep.mubr.f32.mxu0 %v1754
        %2044 = vmatmul.mubr.f32.gmra.mrb[0].mxu0 %v1753
        %v2045 = vpop.f32.mrb[0].mxu0
        %v2046 = vadd.f32 %v1944, %v2045
        %v2047 = vpop.f32.mrb[0].mxu0
        %v2048 = vadd.f32 %v1948, %v2047
        %2049 = vmatprep.mubr.f32.mxu0 %v1756
        %2050 = vmatmul.mubr.f32.gmra.mrb[0].mxu0 %v1755
        %v2051 = vpop.f32.mrb[0].mxu0
        %v2052 = vadd.f32 %v1944, %v2051
        %v2053 = vpop.f32.mrb[0].mxu0
        %v2054 = vadd.f32 %v1948, %v2053
        %2055 = vmatprep.mubr.f32.mxu0 %v1758
        %2056 = vmatmul.mubr.f32.gmra.mrb[0].mxu0 %v1757
        %v2057 = vpop.f32.mrb[0].mxu0
        %v2058 = vadd.f32 %v1944, %v2057
        %v2059 = vpop.f32.mrb[0].mxu0
        %v2060 = vadd.f32 %v1948, %v2059
        %2061 = vmatprep.mubr.f32.mxu0 %v1760
        %2062 = vmatmul.mubr.f32.gmra.mrb[0].mxu0 %v1759
        %v2063 = vpop.f32.mrb[0].mxu0
        %v2064 = vadd.f32 %v1944, %v2063
        %v2065 = vpop.f32.mrb[0].mxu0
        %v2066 = vadd.f32 %v1948, %v2065
        %2067 = vmatprep.mubr.f32.mxu0 %v1762
        %2068 = vmatmul.mubr.f32.gmra.mrb[0].mxu0 %v1761
        %v2069 = vpop.f32.mrb[0].mxu0
        %v2070 = vadd.f32 %v1944, %v2069
        %v2071 = vpop.f32.mrb[0].mxu0
        %v2072 = vadd.f32 %v1948, %v2071
        %2073 = vmatprep.mubr.f32.mxu0 %v1764
        %2074 = vmatmul.mubr.f32.gmra.mrb[0].mxu0 %v1763
        %v2075 = vpop.f32.mrb[0].mxu0
        %v2076 = vadd.f32 %v1944, %v2075
        %v2077 = vpop.f32.mrb[0].mxu0
        %v2078 = vadd.f32 %v1948, %v2077
        %2079 = vmatprep.mubr.f32.mxu0 %v1766
        %2080 = vmatmul.mubr.f32.gmra.mrb[0].mxu0 %v1765
        %v2081 = vpop.f32.mrb[0].mxu0
        %v2082 = vadd.f32 %v1944, %v2081
        %v2083 = vpop.f32.mrb[0].mxu0
        %v2084 = vadd.f32 %v1948, %v2083
        %2085 = vmatprep.mubr.f32.mxu0 %v1768
        %2086 = vmatmul.mubr.f32.gmra.mrb[0].mxu0 %v1767
        %v2087 = vpop.f32.mrb[0].mxu0
        %v2088 = vadd.f32 %v1944, %v2087
        %v2089 = vpop.f32.mrb[0].mxu0
        %v2090 = vadd.f32 %v1948, %v2089
        %2091 = vmatprep.mubr.f32.mxu0 %v1770
        %2092 = vmatmul.mubr.f32.gmra.mrb[0].mxu0 %v1769
        %v2093 = vpop.f32.mrb[0].mxu0
        %v2094 = vadd.f32 %v1944, %v2093
        %v2095 = vpop.f32.mrb[0].mxu0
        %v2096 = vadd.f32 %v1948, %v2095
        %2097 = vmatprep.mubr.f32.mxu0 %v1772
        %2098 = vmatmul.mubr.f32.gmra.mrb[0].mxu0 %v1771
        %v2099 = vpop.f32.mrb[0].mxu0
        %v2100 = vadd.f32 %v1944, %v2099
        %v2101 = vpop.f32.mrb[0].mxu0
        %v2102 = vadd.f32 %v1948, %v2101
        %2103 = vmatprep.mubr.f32.mxu0 %v1774
        %2104 = vmatmul.mubr.f32.gmra.mrb[0].mxu0 %v1773
        %v2105 = vpop.f32.mrb[0].mxu0
        %v2106 = vadd.f32 %v1944, %v2105
        %v2107 = vpop.f32.mrb[0].mxu0
        %v2108 = vadd.f32 %v1948, %v2107
        %2109 = vmatprep.mubr.f32.mxu0 %v1776
        %2110 = vmatmul.mubr.f32.gmra.mrb[0].mxu0 %v1775
        %v2111 = vpop.f32.mrb[0].mxu0
        %v2112 = vadd.f32 %v1944, %v2111
        %v2113 = vpop.f32.mrb[0].mxu0
        %v2114 = vadd.f32 %v1948, %v2113
        %2115 = vmatprep.mubr.f32.mxu0 %v1778
        %2116 = vmatmul.mubr.f32.gmra.mrb[0].mxu0 %v1777
        %v2117 = vpop.f32.mrb[0].mxu0
        %v2118 = vadd.f32 %v1944, %v2117
        %v2119 = vpop.f32.mrb[0].mxu0
        %v2120 = vadd.f32 %v1948, %v2119
        %2121 = vmatprep.mubr.f32.mxu0 %v1780
        %2122 = vmatmul.mubr.f32.gmra.mrb[0].mxu0 %v1779
        %v2123 = vpop.f32.mrb[0].mxu0
        %v2124 = vadd.f32 %v1944, %v2123
        %v2125 = vpop.f32.mrb[0].mxu0
        %v2126 = vadd.f32 %v1948, %v2125
        %2127 = vmatprep.mubr.f32.mxu0 %v1782
        %2128 = vmatmul.mubr.f32.gmra.mrb[0].mxu0 %v1781
        %v2129 = vpop.f32.mrb[0].mxu0
        %v2130 = vadd.f32 %v1944, %v2129
        %v2131 = vpop.f32.mrb[0].mxu0
        %v2132 = vadd.f32 %v1948, %v2131
        %2133 = vmatprep.mubr.f32.mxu0 %v1784
        %2134 = vmatmul.mubr.f32.gmra.mrb[0].mxu0 %v1783
        %v2135 = vpop.f32.mrb[0].mxu0
        %v2136 = vadd.f32 %v1944, %v2135
        %v2137 = vpop.f32.mrb[0].mxu0
        %v2138 = vadd.f32 %v1948, %v2137
        %2139 = vmatprep.mubr.f32.mxu0 %v1786
        %2140 = vmatmul.mubr.f32.gmra.mrb[0].mxu0 %v1785
        %v2141 = vpop.f32.mrb[0].mxu0
        %v2142 = vadd.f32 %v1944, %v2141
        %v2143 = vpop.f32.mrb[0].mxu0
        %v2144 = vadd.f32 %v1948, %v2143
        %2145 = vmatprep.mubr.f32.mxu0 %v1788
        %2146 = vmatmul.mubr.f32.gmra.mrb[0].mxu0 %v1787
        %v2147 = vpop.f32.mrb[0].mxu0
        %v2148 = vadd.f32 %v1944, %v2147
        %v2149 = vpop.f32.mrb[0].mxu0
        %v2150 = vadd.f32 %v1948, %v2149
        %2151 = vmatprep.mubr.f32.mxu0 %v1790
        %2152 = vmatmul.mubr.f32.gmra.mrb[0].mxu0 %v1789
        %v2153 = vpop.f32.mrb[0].mxu0
        %v2154 = vadd.f32 %v1944, %v2153
        %v2155 = vpop.f32.mrb[0].mxu0
        %v2156 = vadd.f32 %v1948, %v2155
        %2157 = vmatprep.mubr.f32.mxu0 %v1792
        %2158 = vmatmul.mubr.f32.gmra.mrb[0].mxu0 %v1791
        %v2159 = vpop.f32.mrb[0].mxu0
        %v2160 = vadd.f32 %v1944, %v2159
        %v2161 = vpop.f32.mrb[0].mxu0
        %v2162 = vadd.f32 %v1948, %v2161
        %2163 = vmatprep.mubr.f32.mxu0 %v1794
        %2164 = vmatmul.mubr.f32.gmra.mrb[0].mxu0 %v1793
        %v2165 = vpop.f32.mrb[0].mxu0
        %v2166 = vadd.f32 %v1944, %v2165
        %v2167 = vpop.f32.mrb[0].mxu0
        %v2168 = vadd.f32 %v1948, %v2167
        %2169 = vmatprep.mubr.f32.mxu0 %v1796
        %2170 = vmatmul.mubr.f32.gmra.mrb[0].mxu0 %v1795
        %v2171 = vpop.f32.mrb[0].mxu0
        %v2172 = vadd.f32 %v1944, %v2171
        %v2173 = vpop.f32.mrb[0].mxu0
        %v2174 = vadd.f32 %v1948, %v2173
        %2175 = vmatprep.mubr.f32.mxu0 %v1798
        %2176 = vmatmul.mubr.f32.gmra.mrb[0].mxu0 %v1797
        %v2177 = vpop.f32.mrb[0].mxu0
        %v2178 = vadd.f32 %v1944, %v2177
        %v2179 = vpop.f32.mrb[0].mxu0
        %v2180 = vadd.f32 %v1948, %v2179
        %2181 = vmatprep.mubr.f32.mxu0 %v1800
        %2182 = vmatmul.mubr.f32.gmra.mrb[0].mxu0 %v1799
        %v2183 = vpop.f32.mrb[0].mxu0
        %v2184 = vadd.f32 %v1944, %v2183
        %v2185 = vpop.f32.mrb[0].mxu0
        %v2186 = vadd.f32 %v1948, %v2185
        %2187 = vmatprep.mubr.f32.mxu0 %v1802
        %2188 = vmatmul.mubr.f32.gmra.mrb[0].mxu0 %v1801
        %v2189 = vpop.f32.mrb[0].mxu0
        %v2190 = vadd.f32 %v1944, %v2189
        %v2191 = vpop.f32.mrb[0].mxu0
        %v2192 = vadd.f32 %v1948, %v2191
        %2193 = vmatprep.mubr.f32.mxu0 %v1804
        %2194 = vmatmul.mubr.f32.gmra.mrb[0].mxu0 %v1803
        %v2195 = vpop.f32.mrb[0].mxu0
        %v2196 = vadd.f32 %v1944, %v2195
        %v2197 = vpop.f32.mrb[0].mxu0
        %v2198 = vadd.f32 %v1948, %v2197
        %2199 = vmatprep.mubr.f32.mxu0 %v1806
        %2200 = vmatmul.mubr.f32.gmra.mrb[0].mxu0 %v1805
        %v2201 = vpop.f32.mrb[0].mxu0
        %v2202 = vadd.f32 %v1944, %v2201
        %v2203 = vpop.f32.mrb[0].mxu0
        %v2204 = vadd.f32 %v1948, %v2203
        %2205 = vmatprep.mubr.f32.mxu0 %v1808
        %2206 = vmatmul.mubr.f32.gmra.mrb[0].mxu0 %v1807
        %v2207 = vpop.f32.mrb[0].mxu0
        %v2208 = vadd.f32 %v1944, %v2207
        %v2209 = vpop.f32.mrb[0].mxu0
        %v2210 = vadd.f32 %v1948, %v2209
        %2211 = vmatprep.mubr.f32.mxu0 %v1810
        %2212 = vmatmul.mubr.f32.gmra.mrb[0].mxu0 %v1809
        %v2213 = vpop.f32.mrb[0].mxu0
        %v2214 = vadd.f32 %v1944, %v2213
        %v2215 = vpop.f32.mrb[0].mxu0
        %v2216 = vadd.f32 %v1948, %v2215
        %2217 = vdwg.mxu0
        %2218 = vmatprep.subr.mxu0 %v1814
        %2219 = vmatpush1.msra.mxu0 %v1813
        %2220 = vmatprep.subr.mxu0 %v1818
        %2221 = vmatpush1.msra.mxu0 %v1817
        %2222 = vmatprep.subr.mxu0 %v1822
        %2223 = vmatpush1.msra.mxu0 %v1821
        %2224 = vmatprep.subr.mxu0 %v1826
        %2225 = vmatpush1.msra.mxu0 %v1825
        %2226 = vmatprep.subr.mxu0 %v1830
        %2227 = vmatpush1.msra.mxu0 %v1829
        %2228 = vmatprep.subr.mxu0 %v1834
        %2229 = vmatpush1.msra.mxu0 %v1833
        %2230 = vmatprep.subr.mxu0 %v1838
        %2231 = vmatpush1.msra.mxu0 %v1837
        %2232 = vmatprep.subr.mxu0 %v1842
        %2233 = vmatpush1.msra.mxu0 %v1841
        %2234 = vmatprep.subr.mxu0 %v1846
        %2235 = vmatpush1.msra.mxu0 %v1845
        %2236 = vmatprep.subr.mxu0 %v1850
        %2237 = vmatpush1.msra.mxu0 %v1849
        %2238 = vmatprep.subr.mxu0 %v1854
        %2239 = vmatpush1.msra.mxu0 %v1853
        %2240 = vmatprep.subr.mxu0 %v1858
        %2241 = vmatpush1.msra.mxu0 %v1857
        %2242 = vmatprep.subr.mxu0 %v1862
        %2243 = vmatpush1.msra.mxu0 %v1861
        %2244 = vmatprep.subr.mxu0 %v1866
        %2245 = vmatpush1.msra.mxu0 %v1865
        %2246 = vmatprep.subr.mxu0 %v1870
        %2247 = vmatpush1.msra.mxu0 %v1869
        %2248 = vmatprep.subr.mxu0 %v1874
        %2249 = vmatpush1.msra.mxu0 %v1873
        %2250 = vmatprep.subr.mxu0 %v1878
        %2251 = vmatpush1.msra.mxu0 %v1877
        %2252 = vmatprep.subr.mxu0 %v1882
        %2253 = vmatpush1.msra.mxu0 %v1881
        %2254 = vmatprep.subr.mxu0 %v1886
        %2255 = vmatpush1.msra.mxu0 %v1885
        %2256 = vmatprep.subr.mxu0 %v1890
        %2257 = vmatpush1.msra.mxu0 %v1889
        %2258 = vmatprep.subr.mxu0 %v1894
        %2259 = vmatpush1.msra.mxu0 %v1893
        %2260 = vmatprep.subr.mxu0 %v1898
        %2261 = vmatpush1.msra.mxu0 %v1897
        %2262 = vmatprep.subr.mxu0 %v1902
        %2263 = vmatpush1.msra.mxu0 %v1901
        %2264 = vmatprep.subr.mxu0 %v1906
        %2265 = vmatpush1.msra.mxu0 %v1905
        %2266 = vmatprep.subr.mxu0 %v1910
        %2267 = vmatpush1.msra.mxu0 %v1909
        %2268 = vmatprep.subr.mxu0 %v1914
        %2269 = vmatpush1.msra.mxu0 %v1913
        %2270 = vmatprep.subr.mxu0 %v1918
        %2271 = vmatpush1.msra.mxu0 %v1917
        %2272 = vmatprep.subr.mxu0 %v1922
        %2273 = vmatpush1.msra.mxu0 %v1921
        %2274 = vmatprep.subr.mxu0 %v1926
        %2275 = vmatpush1.msra.mxu0 %v1925
        %2276 = vmatprep.subr.mxu0 %v1930
        %2277 = vmatpush1.msra.mxu0 %v1929
        %2278 = vmatprep.subr.mxu0 %v1934
        %2279 = vmatpush1.msra.mxu0 %v1933
        %2280 = vmatprep.subr.mxu0 %v1938
        %2281 = vmatpush1.msra.mxu0 %v1937
        %2282 = vmatprep.mubr.f32.mxu0 %v1748
        %2283 = vmatmul.mubr.f32.gmra.mrb[0].mxu0 %v1747
        %v2284 = vpop.f32.mrb[0].mxu0
        %v2285 = vadd.f32 %v1952, %v2284
        %v2286 = vpop.f32.mrb[0].mxu0
        %v2287 = vadd.f32 %v1956, %v2286
        %2288 = vmatprep.mubr.f32.mxu0 %v1750
        %2289 = vmatmul.mubr.f32.gmra.mrb[0].mxu0 %v1749
        %v2290 = vpop.f32.mrb[0].mxu0
        %v2291 = vadd.f32 %v1952, %v2290
        %v2292 = vpop.f32.mrb[0].mxu0
        %v2293 = vadd.f32 %v1956, %v2292
        %2294 = vmatprep.mubr.f32.mxu0 %v1752
        %2295 = vmatmul.mubr.f32.gmra.mrb[0].mxu0 %v1751
        %v2296 = vpop.f32.mrb[0].mxu0
        %v2297 = vadd.f32 %v1952, %v2296
        %v2298 = vpop.f32.mrb[0].mxu0
        %v2299 = vadd.f32 %v1956, %v2298
        %2300 = vmatprep.mubr.f32.mxu0 %v1754
        %2301 = vmatmul.mubr.f32.gmra.mrb[0].mxu0 %v1753
        %v2302 = vpop.f32.mrb[0].mxu0
        %v2303 = vadd.f32 %v1952, %v2302
        %v2304 = vpop.f32.mrb[0].mxu0
        %v2305 = vadd.f32 %v1956, %v2304
        %2306 = vmatprep.mubr.f32.mxu0 %v1756
        %2307 = vmatmul.mubr.f32.gmra.mrb[0].mxu0 %v1755
        %v2308 = vpop.f32.mrb[0].mxu0
        %v2309 = vadd.f32 %v1952, %v2308
        %v2310 = vpop.f32.mrb[0].mxu0
        %v2311 = vadd.f32 %v1956, %v2310
        %2312 = vmatprep.mubr.f32.mxu0 %v1758
        %2313 = vmatmul.mubr.f32.gmra.mrb[0].mxu0 %v1757
        %v2314 = vpop.f32.mrb[0].mxu0
        %v2315 = vadd.f32 %v1952, %v2314
        %v2316 = vpop.f32.mrb[0].mxu0
        %v2317 = vadd.f32 %v1956, %v2316
        %2318 = vmatprep.mubr.f32.mxu0 %v1760
        %2319 = vmatmul.mubr.f32.gmra.mrb[0].mxu0 %v1759
        %v2320 = vpop.f32.mrb[0].mxu0
        %v2321 = vadd.f32 %v1952, %v2320
        %v2322 = vpop.f32.mrb[0].mxu0
        %v2323 = vadd.f32 %v1956, %v2322
        %2324 = vmatprep.mubr.f32.mxu0 %v1762
        %2325 = vmatmul.mubr.f32.gmra.mrb[0].mxu0 %v1761
        %v2326 = vpop.f32.mrb[0].mxu0
        %v2327 = vadd.f32 %v1952, %v2326
        %v2328 = vpop.f32.mrb[0].mxu0
        %v2329 = vadd.f32 %v1956, %v2328
        %2330 = vmatprep.mubr.f32.mxu0 %v1764
        %2331 = vmatmul.mubr.f32.gmra.mrb[0].mxu0 %v1763
        %v2332 = vpop.f32.mrb[0].mxu0
        %v2333 = vadd.f32 %v1952, %v2332
        %v2334 = vpop.f32.mrb[0].mxu0
        %v2335 = vadd.f32 %v1956, %v2334
        %2336 = vmatprep.mubr.f32.mxu0 %v1766
        %2337 = vmatmul.mubr.f32.gmra.mrb[0].mxu0 %v1765
        %v2338 = vpop.f32.mrb[0].mxu0
        %v2339 = vadd.f32 %v1952, %v2338
        %v2340 = vpop.f32.mrb[0].mxu0
        %v2341 = vadd.f32 %v1956, %v2340
        %2342 = vmatprep.mubr.f32.mxu0 %v1768
        %2343 = vmatmul.mubr.f32.gmra.mrb[0].mxu0 %v1767
        %v2344 = vpop.f32.mrb[0].mxu0
        %v2345 = vadd.f32 %v1952, %v2344
        %v2346 = vpop.f32.mrb[0].mxu0
        %v2347 = vadd.f32 %v1956, %v2346
        %2348 = vmatprep.mubr.f32.mxu0 %v1770
        %2349 = vmatmul.mubr.f32.gmra.mrb[0].mxu0 %v1769
        %v2350 = vpop.f32.mrb[0].mxu0
        %v2351 = vadd.f32 %v1952, %v2350
        %v2352 = vpop.f32.mrb[0].mxu0
        %v2353 = vadd.f32 %v1956, %v2352
        %2354 = vmatprep.mubr.f32.mxu0 %v1772
        %2355 = vmatmul.mubr.f32.gmra.mrb[0].mxu0 %v1771
        %v2356 = vpop.f32.mrb[0].mxu0
        %v2357 = vadd.f32 %v1952, %v2356
        %v2358 = vpop.f32.mrb[0].mxu0
        %v2359 = vadd.f32 %v1956, %v2358
        %2360 = vmatprep.mubr.f32.mxu0 %v1774
        %2361 = vmatmul.mubr.f32.gmra.mrb[0].mxu0 %v1773
        %v2362 = vpop.f32.mrb[0].mxu0
        %v2363 = vadd.f32 %v1952, %v2362
        %v2364 = vpop.f32.mrb[0].mxu0
        %v2365 = vadd.f32 %v1956, %v2364
        %2366 = vmatprep.mubr.f32.mxu0 %v1776
        %2367 = vmatmul.mubr.f32.gmra.mrb[0].mxu0 %v1775
        %v2368 = vpop.f32.mrb[0].mxu0
        %v2369 = vadd.f32 %v1952, %v2368
        %v2370 = vpop.f32.mrb[0].mxu0
        %v2371 = vadd.f32 %v1956, %v2370
        %2372 = vmatprep.mubr.f32.mxu0 %v1778
        %2373 = vmatmul.mubr.f32.gmra.mrb[0].mxu0 %v1777
        %v2374 = vpop.f32.mrb[0].mxu0
        %v2375 = vadd.f32 %v1952, %v2374
        %v2376 = vpop.f32.mrb[0].mxu0
        %v2377 = vadd.f32 %v1956, %v2376
        %2378 = vmatprep.mubr.f32.mxu0 %v1780
        %2379 = vmatmul.mubr.f32.gmra.mrb[0].mxu0 %v1779
        %v2380 = vpop.f32.mrb[0].mxu0
        %v2381 = vadd.f32 %v1952, %v2380
        %v2382 = vpop.f32.mrb[0].mxu0
        %v2383 = vadd.f32 %v1956, %v2382
        %2384 = vmatprep.mubr.f32.mxu0 %v1782
        %2385 = vmatmul.mubr.f32.gmra.mrb[0].mxu0 %v1781
        %v2386 = vpop.f32.mrb[0].mxu0
        %v2387 = vadd.f32 %v1952, %v2386
        %v2388 = vpop.f32.mrb[0].mxu0
        %v2389 = vadd.f32 %v1956, %v2388
        %2390 = vmatprep.mubr.f32.mxu0 %v1784
        %2391 = vmatmul.mubr.f32.gmra.mrb[0].mxu0 %v1783
        %v2392 = vpop.f32.mrb[0].mxu0
        %v2393 = vadd.f32 %v1952, %v2392
        %v2394 = vpop.f32.mrb[0].mxu0
        %v2395 = vadd.f32 %v1956, %v2394
        %2396 = vmatprep.mubr.f32.mxu0 %v1786
        %2397 = vmatmul.mubr.f32.gmra.mrb[0].mxu0 %v1785
        %v2398 = vpop.f32.mrb[0].mxu0
        %v2399 = vadd.f32 %v1952, %v2398
        %v2400 = vpop.f32.mrb[0].mxu0
        %v2401 = vadd.f32 %v1956, %v2400
        %2402 = vmatprep.mubr.f32.mxu0 %v1788
        %2403 = vmatmul.mubr.f32.gmra.mrb[0].mxu0 %v1787
        %v2404 = vpop.f32.mrb[0].mxu0
        %v2405 = vadd.f32 %v1952, %v2404
        %v2406 = vpop.f32.mrb[0].mxu0
        %v2407 = vadd.f32 %v1956, %v2406
        %2408 = vmatprep.mubr.f32.mxu0 %v1790
        %2409 = vmatmul.mubr.f32.gmra.mrb[0].mxu0 %v1789
        %v2410 = vpop.f32.mrb[0].mxu0
        %v2411 = vadd.f32 %v1952, %v2410
        %v2412 = vpop.f32.mrb[0].mxu0
        %v2413 = vadd.f32 %v1956, %v2412
        %2414 = vmatprep.mubr.f32.mxu0 %v1792
        %2415 = vmatmul.mubr.f32.gmra.mrb[0].mxu0 %v1791
        %v2416 = vpop.f32.mrb[0].mxu0
        %v2417 = vadd.f32 %v1952, %v2416
        %v2418 = vpop.f32.mrb[0].mxu0
        %v2419 = vadd.f32 %v1956, %v2418
        %2420 = vmatprep.mubr.f32.mxu0 %v1794
        %2421 = vmatmul.mubr.f32.gmra.mrb[0].mxu0 %v1793
        %v2422 = vpop.f32.mrb[0].mxu0
        %v2423 = vadd.f32 %v1952, %v2422
        %v2424 = vpop.f32.mrb[0].mxu0
        %v2425 = vadd.f32 %v1956, %v2424
        %2426 = vmatprep.mubr.f32.mxu0 %v1796
        %2427 = vmatmul.mubr.f32.gmra.mrb[0].mxu0 %v1795
        %v2428 = vpop.f32.mrb[0].mxu0
        %v2429 = vadd.f32 %v1952, %v2428
        %v2430 = vpop.f32.mrb[0].mxu0
        %v2431 = vadd.f32 %v1956, %v2430
        %2432 = vmatprep.mubr.f32.mxu0 %v1798
        %2433 = vmatmul.mubr.f32.gmra.mrb[0].mxu0 %v1797
        %v2434 = vpop.f32.mrb[0].mxu0
        %v2435 = vadd.f32 %v1952, %v2434
        %v2436 = vpop.f32.mrb[0].mxu0
        %v2437 = vadd.f32 %v1956, %v2436
        %2438 = vmatprep.mubr.f32.mxu0 %v1800
        %2439 = vmatmul.mubr.f32.gmra.mrb[0].mxu0 %v1799
        %v2440 = vpop.f32.mrb[0].mxu0
        %v2441 = vadd.f32 %v1952, %v2440
        %v2442 = vpop.f32.mrb[0].mxu0
        %v2443 = vadd.f32 %v1956, %v2442
        %2444 = vmatprep.mubr.f32.mxu0 %v1802
        %2445 = vmatmul.mubr.f32.gmra.mrb[0].mxu0 %v1801
        %v2446 = vpop.f32.mrb[0].mxu0
        %v2447 = vadd.f32 %v1952, %v2446
        %v2448 = vpop.f32.mrb[0].mxu0
        %v2449 = vadd.f32 %v1956, %v2448
        %2450 = vmatprep.mubr.f32.mxu0 %v1804
        %2451 = vmatmul.mubr.f32.gmra.mrb[0].mxu0 %v1803
        %v2452 = vpop.f32.mrb[0].mxu0
        %v2453 = vadd.f32 %v1952, %v2452
        %v2454 = vpop.f32.mrb[0].mxu0
        %v2455 = vadd.f32 %v1956, %v2454
        %2456 = vmatprep.mubr.f32.mxu0 %v1806
        %2457 = vmatmul.mubr.f32.gmra.mrb[0].mxu0 %v1805
        %v2458 = vpop.f32.mrb[0].mxu0
        %v2459 = vadd.f32 %v1952, %v2458
        %v2460 = vpop.f32.mrb[0].mxu0
        %v2461 = vadd.f32 %v1956, %v2460
        %2462 = vmatprep.mubr.f32.mxu0 %v1808
        %2463 = vmatmul.mubr.f32.gmra.mrb[0].mxu0 %v1807
        %v2464 = vpop.f32.mrb[0].mxu0
        %v2465 = vadd.f32 %v1952, %v2464
        %v2466 = vpop.f32.mrb[0].mxu0
        %v2467 = vadd.f32 %v1956, %v2466
        %2468 = vmatprep.mubr.f32.mxu0 %v1810
        %2469 = vmatmul.mubr.f32.gmra.mrb[0].mxu0 %v1809
        %v2470 = vpop.f32.mrb[0].mxu0
        %v2471 = vadd.f32 %v1952, %v2470
        %v2472 = vpop.f32.mrb[0].mxu0
        %v2473 = vadd.f32 %v1956, %v2472
        %2474 = vdwg.mxu0
        %v2475 = vmul.f32 %v2028, 0.01
        %v2476 = vmul.f32 %v2030, 0.01
        %v2477 = vmul.f32 %v2285, 0.01
        %v2478 = vmul.f32 %v2287, 0.01
        %v2479 = vmul.f32 %v2034, 0.01
        %v2480 = vmul.f32 %v2036, 0.01
        %v2481 = vmul.f32 %v2291, 0.01
        %v2482 = vmul.f32 %v2293, 0.01
        %v2483 = vmul.f32 %v2040, 0.01
        %v2484 = vmul.f32 %v2042, 0.01
        %v2485 = vmul.f32 %v2297, 0.01
        %v2486 = vmul.f32 %v2299, 0.01
        %v2487 = vmul.f32 %v2046, 0.01
        %v2488 = vmul.f32 %v2048, 0.01
        %v2489 = vmul.f32 %v2303, 0.01
        %v2490 = vmul.f32 %v2305, 0.01
        %v2491 = vmul.f32 %v2052, 0.01
        %v2492 = vmul.f32 %v2054, 0.01
        %v2493 = vmul.f32 %v2309, 0.01
        %v2494 = vmul.f32 %v2311, 0.01
        %v2495 = vmul.f32 %v2058, 0.01
        %v2496 = vmul.f32 %v2060, 0.01
        %v2497 = vmul.f32 %v2315, 0.01
        %v2498 = vmul.f32 %v2317, 0.01
        %v2499 = vmul.f32 %v2064, 0.01
        %v2500 = vmul.f32 %v2066, 0.01
        %v2501 = vmul.f32 %v2321, 0.01
        %v2502 = vmul.f32 %v2323, 0.01
        %v2503 = vmul.f32 %v2070, 0.01
        %v2504 = vmul.f32 %v2072, 0.01
        %v2505 = vmul.f32 %v2327, 0.01
        %v2506 = vmul.f32 %v2329, 0.01
        %v2507 = vmul.f32 %v2076, 0.01
        %v2508 = vmul.f32 %v2078, 0.01
        %v2509 = vmul.f32 %v2333, 0.01
        %v2510 = vmul.f32 %v2335, 0.01
        %v2511 = vmul.f32 %v2082, 0.01
        %v2512 = vmul.f32 %v2084, 0.01
        %v2513 = vmul.f32 %v2339, 0.01
        %v2514 = vmul.f32 %v2341, 0.01
        %v2515 = vmul.f32 %v2088, 0.01
        %v2516 = vmul.f32 %v2090, 0.01
        %v2517 = vmul.f32 %v2345, 0.01
        %v2518 = vmul.f32 %v2347, 0.01
        %v2519 = vmul.f32 %v2094, 0.01
        %v2520 = vmul.f32 %v2096, 0.01
        %v2521 = vmul.f32 %v2351, 0.01
        %v2522 = vmul.f32 %v2353, 0.01
        %v2523 = vmul.f32 %v2100, 0.01
        %v2524 = vmul.f32 %v2102, 0.01
        %v2525 = vmul.f32 %v2357, 0.01
        %v2526 = vmul.f32 %v2359, 0.01
        %v2527 = vmul.f32 %v2106, 0.01
        %v2528 = vmul.f32 %v2108, 0.01
        %v2529 = vmul.f32 %v2363, 0.01
        %v2530 = vmul.f32 %v2365, 0.01
        %v2531 = vmul.f32 %v2112, 0.01
        %v2532 = vmul.f32 %v2114, 0.01
        %v2533 = vmul.f32 %v2369, 0.01
        %v2534 = vmul.f32 %v2371, 0.01
        %v2535 = vmul.f32 %v2118, 0.01
        %v2536 = vmul.f32 %v2120, 0.01
        %v2537 = vmul.f32 %v2375, 0.01
        %v2538 = vmul.f32 %v2377, 0.01
        %v2539 = vmul.f32 %v2124, 0.01
        %v2540 = vmul.f32 %v2126, 0.01
        %v2541 = vmul.f32 %v2381, 0.01
        %v2542 = vmul.f32 %v2383, 0.01
        %v2543 = vmul.f32 %v2130, 0.01
        %v2544 = vmul.f32 %v2132, 0.01
        %v2545 = vmul.f32 %v2387, 0.01
        %v2546 = vmul.f32 %v2389, 0.01
        %v2547 = vmul.f32 %v2136, 0.01
        %v2548 = vmul.f32 %v2138, 0.01
        %v2549 = vmul.f32 %v2393, 0.01
        %v2550 = vmul.f32 %v2395, 0.01
        %v2551 = vmul.f32 %v2142, 0.01
        %v2552 = vmul.f32 %v2144, 0.01
        %v2553 = vmul.f32 %v2399, 0.01
        %v2554 = vmul.f32 %v2401, 0.01
        %v2555 = vmul.f32 %v2148, 0.01
        %v2556 = vmul.f32 %v2150, 0.01
        %v2557 = vmul.f32 %v2405, 0.01
        %v2558 = vmul.f32 %v2407, 0.01
        %v2559 = vmul.f32 %v2154, 0.01
        %v2560 = vmul.f32 %v2156, 0.01
        %v2561 = vmul.f32 %v2411, 0.01
        %v2562 = vmul.f32 %v2413, 0.01
        %v2563 = vmul.f32 %v2160, 0.01
        %v2564 = vmul.f32 %v2162, 0.01
        %v2565 = vmul.f32 %v2417, 0.01
        %v2566 = vmul.f32 %v2419, 0.01
        %v2567 = vmul.f32 %v2166, 0.01
        %v2568 = vmul.f32 %v2168, 0.01
        %v2569 = vmul.f32 %v2423, 0.01
        %v2570 = vmul.f32 %v2425, 0.01
        %v2571 = vmul.f32 %v2172, 0.01
        %v2572 = vmul.f32 %v2174, 0.01
        %v2573 = vmul.f32 %v2429, 0.01
        %v2574 = vmul.f32 %v2431, 0.01
        %v2575 = vmul.f32 %v2178, 0.01
        %v2576 = vmul.f32 %v2180, 0.01
        %v2577 = vmul.f32 %v2435, 0.01
        %v2578 = vmul.f32 %v2437, 0.01
        %v2579 = vmul.f32 %v2184, 0.01
        %v2580 = vmul.f32 %v2186, 0.01
        %v2581 = vmul.f32 %v2441, 0.01
        %v2582 = vmul.f32 %v2443, 0.01
        %v2583 = vmul.f32 %v2190, 0.01
        %v2584 = vmul.f32 %v2192, 0.01
        %v2585 = vmul.f32 %v2447, 0.01
        %v2586 = vmul.f32 %v2449, 0.01
        %v2587 = vmul.f32 %v2196, 0.01
        %v2588 = vmul.f32 %v2198, 0.01
        %v2589 = vmul.f32 %v2453, 0.01
        %v2590 = vmul.f32 %v2455, 0.01
        %v2591 = vmul.f32 %v2202, 0.01
        %v2592 = vmul.f32 %v2204, 0.01
        %v2593 = vmul.f32 %v2459, 0.01
        %v2594 = vmul.f32 %v2461, 0.01
        %v2595 = vmul.f32 %v2208, 0.01
        %v2596 = vmul.f32 %v2210, 0.01
        %v2597 = vmul.f32 %v2465, 0.01
        %v2598 = vmul.f32 %v2467, 0.01
        %v2599 = vmul.f32 %v2214, 0.01
        %v2600 = vmul.f32 %v2216, 0.01
        %v2601 = vmul.f32 %v2471, 0.01
        %v2602 = vmul.f32 %v2473, 0.01
        %v2603 = vmax.f32 %v2028, %v2475
        %v2604 = vmax.f32 %v2030, %v2476
        %v2605 = vmax.f32 %v2285, %v2477
        %v2606 = vmax.f32 %v2287, %v2478
        %v2607 = vmax.f32 %v2034, %v2479
        %v2608 = vmax.f32 %v2036, %v2480
        %v2609 = vmax.f32 %v2291, %v2481
        %v2610 = vmax.f32 %v2293, %v2482
        %v2611 = vmax.f32 %v2040, %v2483
        %v2612 = vmax.f32 %v2042, %v2484
        %v2613 = vmax.f32 %v2297, %v2485
        %v2614 = vmax.f32 %v2299, %v2486
        %v2615 = vmax.f32 %v2046, %v2487
        %v2616 = vmax.f32 %v2048, %v2488
        %v2617 = vmax.f32 %v2303, %v2489
        %v2618 = vmax.f32 %v2305, %v2490
        %v2619 = vmax.f32 %v2052, %v2491
        %v2620 = vmax.f32 %v2054, %v2492
        %v2621 = vmax.f32 %v2309, %v2493
        %v2622 = vmax.f32 %v2311, %v2494
        %v2623 = vmax.f32 %v2058, %v2495
        %v2624 = vmax.f32 %v2060, %v2496
        %v2625 = vmax.f32 %v2315, %v2497
        %v2626 = vmax.f32 %v2317, %v2498
        %v2627 = vmax.f32 %v2064, %v2499
        %v2628 = vmax.f32 %v2066, %v2500
        %v2629 = vmax.f32 %v2321, %v2501
        %v2630 = vmax.f32 %v2323, %v2502
        %v2631 = vmax.f32 %v2070, %v2503
        %v2632 = vmax.f32 %v2072, %v2504
        %v2633 = vmax.f32 %v2327, %v2505
        %v2634 = vmax.f32 %v2329, %v2506
        %v2635 = vmax.f32 %v2076, %v2507
        %v2636 = vmax.f32 %v2078, %v2508
        %v2637 = vmax.f32 %v2333, %v2509
        %v2638 = vmax.f32 %v2335, %v2510
        %v2639 = vmax.f32 %v2082, %v2511
        %v2640 = vmax.f32 %v2084, %v2512
        %v2641 = vmax.f32 %v2339, %v2513
        %v2642 = vmax.f32 %v2341, %v2514
        %v2643 = vmax.f32 %v2088, %v2515
        %v2644 = vmax.f32 %v2090, %v2516
        %v2645 = vmax.f32 %v2345, %v2517
        %v2646 = vmax.f32 %v2347, %v2518
        %v2647 = vmax.f32 %v2094, %v2519
        %v2648 = vmax.f32 %v2096, %v2520
        %v2649 = vmax.f32 %v2351, %v2521
        %v2650 = vmax.f32 %v2353, %v2522
        %v2651 = vmax.f32 %v2100, %v2523
        %v2652 = vmax.f32 %v2102, %v2524
        %v2653 = vmax.f32 %v2357, %v2525
        %v2654 = vmax.f32 %v2359, %v2526
        %v2655 = vmax.f32 %v2106, %v2527
        %v2656 = vmax.f32 %v2108, %v2528
        %v2657 = vmax.f32 %v2363, %v2529
        %v2658 = vmax.f32 %v2365, %v2530
        %v2659 = vmax.f32 %v2112, %v2531
        %v2660 = vmax.f32 %v2114, %v2532
        %v2661 = vmax.f32 %v2369, %v2533
        %v2662 = vmax.f32 %v2371, %v2534
        %v2663 = vmax.f32 %v2118, %v2535
        %v2664 = vmax.f32 %v2120, %v2536
        %v2665 = vmax.f32 %v2375, %v2537
        %v2666 = vmax.f32 %v2377, %v2538
        %v2667 = vmax.f32 %v2124, %v2539
        %v2668 = vmax.f32 %v2126, %v2540
        %v2669 = vmax.f32 %v2381, %v2541
        %v2670 = vmax.f32 %v2383, %v2542
        %v2671 = vmax.f32 %v2130, %v2543
        %v2672 = vmax.f32 %v2132, %v2544
        %v2673 = vmax.f32 %v2387, %v2545
        %v2674 = vmax.f32 %v2389, %v2546
        %v2675 = vmax.f32 %v2136, %v2547
        %v2676 = vmax.f32 %v2138, %v2548
        %v2677 = vmax.f32 %v2393, %v2549
        %v2678 = vmax.f32 %v2395, %v2550
        %v2679 = vmax.f32 %v2142, %v2551
        %v2680 = vmax.f32 %v2144, %v2552
        %v2681 = vmax.f32 %v2399, %v2553
        %v2682 = vmax.f32 %v2401, %v2554
        %v2683 = vmax.f32 %v2148, %v2555
        %v2684 = vmax.f32 %v2150, %v2556
        %v2685 = vmax.f32 %v2405, %v2557
        %v2686 = vmax.f32 %v2407, %v2558
        %v2687 = vmax.f32 %v2154, %v2559
        %v2688 = vmax.f32 %v2156, %v2560
        %v2689 = vmax.f32 %v2411, %v2561
        %v2690 = vmax.f32 %v2413, %v2562
        %v2691 = vmax.f32 %v2160, %v2563
        %v2692 = vmax.f32 %v2162, %v2564
        %v2693 = vmax.f32 %v2417, %v2565
        %v2694 = vmax.f32 %v2419, %v2566
        %v2695 = vmax.f32 %v2166, %v2567
        %v2696 = vmax.f32 %v2168, %v2568
        %v2697 = vmax.f32 %v2423, %v2569
        %v2698 = vmax.f32 %v2425, %v2570
        %v2699 = vmax.f32 %v2172, %v2571
        %v2700 = vmax.f32 %v2174, %v2572
        %v2701 = vmax.f32 %v2429, %v2573
        %v2702 = vmax.f32 %v2431, %v2574
        %v2703 = vmax.f32 %v2178, %v2575
        %v2704 = vmax.f32 %v2180, %v2576
        %v2705 = vmax.f32 %v2435, %v2577
        %v2706 = vmax.f32 %v2437, %v2578
        %v2707 = vmax.f32 %v2184, %v2579
        %v2708 = vmax.f32 %v2186, %v2580
        %v2709 = vmax.f32 %v2441, %v2581
        %v2710 = vmax.f32 %v2443, %v2582
        %v2711 = vmax.f32 %v2190, %v2583
        %v2712 = vmax.f32 %v2192, %v2584
        %v2713 = vmax.f32 %v2447, %v2585
        %v2714 = vmax.f32 %v2449, %v2586
        %v2715 = vmax.f32 %v2196, %v2587
        %v2716 = vmax.f32 %v2198, %v2588
        %v2717 = vmax.f32 %v2453, %v2589
        %v2718 = vmax.f32 %v2455, %v2590
        %v2719 = vmax.f32 %v2202, %v2591
        %v2720 = vmax.f32 %v2204, %v2592
        %v2721 = vmax.f32 %v2459, %v2593
        %v2722 = vmax.f32 %v2461, %v2594
        %v2723 = vmax.f32 %v2208, %v2595
        %v2724 = vmax.f32 %v2210, %v2596
        %v2725 = vmax.f32 %v2465, %v2597
        %v2726 = vmax.f32 %v2467, %v2598
        %v2727 = vmax.f32 %v2214, %v2599
        %v2728 = vmax.f32 %v2216, %v2600
        %v2729 = vmax.f32 %v2471, %v2601
        %v2730 = vmax.f32 %v2473, %v2602
        %v2731 = vmax.f32 %v2603, %v2607
        %v2732 = vmax.f32 %v2731, %v2611
        %v2733 = vmax.f32 %v2732, %v2615
        %v2734 = vmax.f32 %v2733, %v2619
        %v2735 = vmax.f32 %v2734, %v2623
        %v2736 = vmax.f32 %v2735, %v2627
        %v2737 = vmax.f32 %v2736, %v2631
        %v2738 = vmax.f32 %v2737, %v2635
        %v2739 = vmax.f32 %v2738, %v2639
        %v2740 = vmax.f32 %v2739, %v2643
        %v2741 = vmax.f32 %v2740, %v2647
        %v2742 = vmax.f32 %v2741, %v2651
        %v2743 = vmax.f32 %v2742, %v2655
        %v2744 = vmax.f32 %v2743, %v2659
        %v2745 = vmax.f32 %v2744, %v2663
        %v2746 = vmax.f32 %v2745, %v2667
        %v2747 = vmax.f32 %v2746, %v2671
        %v2748 = vmax.f32 %v2747, %v2675
        %v2749 = vmax.f32 %v2748, %v2679
        %v2750 = vmax.f32 %v2749, %v2683
        %v2751 = vmax.f32 %v2750, %v2687
        %v2752 = vmax.f32 %v2751, %v2691
        %v2753 = vmax.f32 %v2752, %v2695
        %v2754 = vmax.f32 %v2753, %v2699
        %v2755 = vmax.f32 %v2754, %v2703
        %v2756 = vmax.f32 %v2755, %v2707
        %v2757 = vmax.f32 %v2756, %v2711
        %v2758 = vmax.f32 %v2757, %v2715
        %v2759 = vmax.f32 %v2758, %v2719
        %v2760 = vmax.f32 %v2759, %v2723
        %v2761 = vmax.f32 %v2760, %v2727
        %v2762 = vrot.slane %v2761, 4
        %v2763 = vmax.f32 %v2761, %v2762
        %v2764 = vrot.slane %v2763, 2
        %v2765 = vmax.f32 %v2763, %v2764
        %v2766 = vrot.slane %v2765, 1
        %v2767 = vmax.f32 %v2765, %v2766
        %v2768 = vmax.f32 %v2604, %v2608
        %v2769 = vmax.f32 %v2768, %v2612
        %v2770 = vmax.f32 %v2769, %v2616
        %v2771 = vmax.f32 %v2770, %v2620
        %v2772 = vmax.f32 %v2771, %v2624
        %v2773 = vmax.f32 %v2772, %v2628
        %v2774 = vmax.f32 %v2773, %v2632
        %v2775 = vmax.f32 %v2774, %v2636
        %v2776 = vmax.f32 %v2775, %v2640
        %v2777 = vmax.f32 %v2776, %v2644
        %v2778 = vmax.f32 %v2777, %v2648
        %v2779 = vmax.f32 %v2778, %v2652
        %v2780 = vmax.f32 %v2779, %v2656
        %v2781 = vmax.f32 %v2780, %v2660
        %v2782 = vmax.f32 %v2781, %v2664
        %v2783 = vmax.f32 %v2782, %v2668
        %v2784 = vmax.f32 %v2783, %v2672
        %v2785 = vmax.f32 %v2784, %v2676
        %v2786 = vmax.f32 %v2785, %v2680
        %v2787 = vmax.f32 %v2786, %v2684
        %v2788 = vmax.f32 %v2787, %v2688
        %v2789 = vmax.f32 %v2788, %v2692
        %v2790 = vmax.f32 %v2789, %v2696
        %v2791 = vmax.f32 %v2790, %v2700
        %v2792 = vmax.f32 %v2791, %v2704
        %v2793 = vmax.f32 %v2792, %v2708
        %v2794 = vmax.f32 %v2793, %v2712
        %v2795 = vmax.f32 %v2794, %v2716
        %v2796 = vmax.f32 %v2795, %v2720
        %v2797 = vmax.f32 %v2796, %v2724
        %v2798 = vmax.f32 %v2797, %v2728
        %v2799 = vrot.slane %v2798, 4
        %v2800 = vmax.f32 %v2798, %v2799
        %v2801 = vrot.slane %v2800, 2
        %v2802 = vmax.f32 %v2800, %v2801
        %v2803 = vrot.slane %v2802, 1
        %v2804 = vmax.f32 %v2802, %v2803
        %v2805 = vmax.f32 %v2605, %v2609
        %v2806 = vmax.f32 %v2805, %v2613
        %v2807 = vmax.f32 %v2806, %v2617
        %v2808 = vmax.f32 %v2807, %v2621
        %v2809 = vmax.f32 %v2808, %v2625
        %v2810 = vmax.f32 %v2809, %v2629
        %v2811 = vmax.f32 %v2810, %v2633
        %v2812 = vmax.f32 %v2811, %v2637
        %v2813 = vmax.f32 %v2812, %v2641
        %v2814 = vmax.f32 %v2813, %v2645
        %v2815 = vmax.f32 %v2814, %v2649
        %v2816 = vmax.f32 %v2815, %v2653
        %v2817 = vmax.f32 %v2816, %v2657
        %v2818 = vmax.f32 %v2817, %v2661
        %v2819 = vmax.f32 %v2818, %v2665
        %v2820 = vmax.f32 %v2819, %v2669
        %v2821 = vmax.f32 %v2820, %v2673
        %v2822 = vmax.f32 %v2821, %v2677
        %v2823 = vmax.f32 %v2822, %v2681
        %v2824 = vmax.f32 %v2823, %v2685
        %v2825 = vmax.f32 %v2824, %v2689
        %v2826 = vmax.f32 %v2825, %v2693
        %v2827 = vmax.f32 %v2826, %v2697
        %v2828 = vmax.f32 %v2827, %v2701
        %v2829 = vmax.f32 %v2828, %v2705
        %v2830 = vmax.f32 %v2829, %v2709
        %v2831 = vmax.f32 %v2830, %v2713
        %v2832 = vmax.f32 %v2831, %v2717
        %v2833 = vmax.f32 %v2832, %v2721
        %v2834 = vmax.f32 %v2833, %v2725
        %v2835 = vmax.f32 %v2834, %v2729
        %v2836 = vrot.slane %v2835, 4
        %v2837 = vmax.f32 %v2835, %v2836
        %v2838 = vrot.slane %v2837, 2
        %v2839 = vmax.f32 %v2837, %v2838
        %v2840 = vrot.slane %v2839, 1
        %v2841 = vmax.f32 %v2839, %v2840
        %v2842 = vmax.f32 %v2606, %v2610
        %v2843 = vmax.f32 %v2842, %v2614
        %v2844 = vmax.f32 %v2843, %v2618
        %v2845 = vmax.f32 %v2844, %v2622
        %v2846 = vmax.f32 %v2845, %v2626
        %v2847 = vmax.f32 %v2846, %v2630
        %v2848 = vmax.f32 %v2847, %v2634
        %v2849 = vmax.f32 %v2848, %v2638
        %v2850 = vmax.f32 %v2849, %v2642
        %v2851 = vmax.f32 %v2850, %v2646
        %v2852 = vmax.f32 %v2851, %v2650
        %v2853 = vmax.f32 %v2852, %v2654
        %v2854 = vmax.f32 %v2853, %v2658
        %v2855 = vmax.f32 %v2854, %v2662
        %v2856 = vmax.f32 %v2855, %v2666
        %v2857 = vmax.f32 %v2856, %v2670
        %v2858 = vmax.f32 %v2857, %v2674
        %v2859 = vmax.f32 %v2858, %v2678
        %v2860 = vmax.f32 %v2859, %v2682
        %v2861 = vmax.f32 %v2860, %v2686
        %v2862 = vmax.f32 %v2861, %v2690
        %v2863 = vmax.f32 %v2862, %v2694
        %v2864 = vmax.f32 %v2863, %v2698
        %v2865 = vmax.f32 %v2864, %v2702
        %v2866 = vmax.f32 %v2865, %v2706
        %v2867 = vmax.f32 %v2866, %v2710
        %v2868 = vmax.f32 %v2867, %v2714
        %v2869 = vmax.f32 %v2868, %v2718
        %v2870 = vmax.f32 %v2869, %v2722
        %v2871 = vmax.f32 %v2870, %v2726
        %v2872 = vmax.f32 %v2871, %v2730
        %v2873 = vrot.slane %v2872, 4
        %v2874 = vmax.f32 %v2872, %v2873
        %v2875 = vrot.slane %v2874, 2
        %v2876 = vmax.f32 %v2874, %v2875
        %v2877 = vrot.slane %v2876, 1
        %v2878 = vmax.f32 %v2876, %v2877
        %p2879 = scmp.eq.s32.totalorder %s35, 0
        // Predicated region
        $region89: #{tpu_custom_call.1} parent=79 // pred_check
          %p2880 = pneg %p2879
        $region90: #{tpu_custom_call.1} parent=79 // pred_check_branch
          %2882 = sbr.rel (%p2880) target = $region92
        $region91: #{tpu_custom_call.1} parent=79 // pred_region
          %v2887 = vcombine.low %v2767, %v2804
          %v2888 = vcombine.low %v2841, %v2878
          %v2890 = vunpack.c.l.s4 1966171168
          %v2891 = vunpack.c.0.s8 %v2890
          %v2892 = vlaneseq
          %v2893 = vshrl.u32 %v2892, 7
          %v2894 = vsub.s32 %v2891, %v2893
          %v2895 = vrot.slane %v2887, %v2894
          %v2897 = vunpack.c.l.s4 1966171168
          %v2898 = vunpack.c.0.s8 %v2897
          %v2899 = vlaneseq
          %v2900 = vshrl.u32 %v2899, 7
          %v2901 = vsub.s32 %v2898, %v2900
          %v2902 = vrot.slane %v2888, %v2901
          %v2903 = vcombine.low %v2895, %v2902
          %v2905 = vunpack.c.l.s4 1966171168
          %v2906 = vunpack.c.0.s8 %v2905
          %v2907 = vlaneseq
          %v2908 = vshrl.u32 %v2907, 7
          %v2909 = vsub.s32 %v2906, %v2908
          %v2910 = vrot.slane %v2903, %v2909
          %v2912 = vlaneseq
          %vm2913 = vcmp.ge.s32.totalorder %v2912, 0
          %vm2914 = vcmp.lt.s32.totalorder %v2912, 512
          %vm2915 = vmand %vm2913, %vm2914
          %2916 = vst.msk [vmem:[#allocation2] sm:$0xf] %vm2915, %v2910
        $region92: #{tpu_custom_call.1} parent=79 // pred_fallthru
          _
        %p2917 = scmp.gt.s32.totalorder %s35, 0
        // Predicated region
        $region93: #{tpu_custom_call.1} parent=79 // pred_check
          %p2918 = pneg %p2917
        $region94: #{tpu_custom_call.1} parent=79 // pred_check_branch
          %2920 = sbr.rel (%p2918) target = $region96
        $region95: #{tpu_custom_call.1} parent=79 // pred_region
          %v2921 = vld [vmem:[#allocation2] sm:$0xf]
          %v2926 = vcombine.low %v2767, %v2804
          %v2927 = vcombine.low %v2841, %v2878
          %v2929 = vunpack.c.l.s4 1966171168
          %v2930 = vunpack.c.0.s8 %v2929
          %v2931 = vlaneseq
          %v2932 = vshrl.u32 %v2931, 7
          %v2933 = vsub.s32 %v2930, %v2932
          %v2934 = vrot.slane %v2926, %v2933
          %v2936 = vunpack.c.l.s4 1966171168
          %v2937 = vunpack.c.0.s8 %v2936
          %v2938 = vlaneseq
          %v2939 = vshrl.u32 %v2938, 7
          %v2940 = vsub.s32 %v2937, %v2939
          %v2941 = vrot.slane %v2927, %v2940
          %v2942 = vcombine.low %v2934, %v2941
          %v2944 = vunpack.c.l.s4 1966171168
          %v2945 = vunpack.c.0.s8 %v2944
          %v2946 = vlaneseq
          %v2947 = vshrl.u32 %v2946, 7
          %v2948 = vsub.s32 %v2945, %v2947
          %v2949 = vrot.slane %v2942, %v2948
          %v2951 = vmax.f32 %v2921, %v2949
          %v2952 = vlaneseq
          %vm2953 = vcmp.ge.s32.totalorder %v2952, 0
          %vm2954 = vcmp.lt.s32.totalorder %v2952, 512
          %vm2955 = vmand %vm2953, %vm2954
          %2956 = vst.msk [vmem:[#allocation2] sm:$0xf] %vm2955, %v2951
        $region96: #{tpu_custom_call.1} parent=79 // pred_fallthru
          _
        // Predicated region
        $region97: #{tpu_custom_call.1} parent=79 // pred_check
          %p2957 = pneg %p2879
        $region98: #{tpu_custom_call.1} parent=79 // pred_check_branch
          %2959 = sbr.rel (%p2957) target = $region100
        $region99: #{tpu_custom_call.1} parent=79 // pred_region
          %v2960 = vld [vmem:[#allocation2] sm:$0xf]
          %v2961 = vld [vmem:[#allocation6] sm:$0xff]
          %v2962 = vld [vmem:[#allocation6 + $0x8] sm:$0xff]
          %v2963 = vld [vmem:[#allocation6 + $0x10] sm:$0xff]
          %v2964 = vld [vmem:[#allocation6 + $0x18] sm:$0xff]
          %v2965 = vld [vmem:[#allocation6 + $0x20] sm:$0xff]
          %v2966 = vld [vmem:[#allocation6 + $0x28] sm:$0xff]
          %v2967 = vld [vmem:[#allocation6 + $0x30] sm:$0xff]
          %v2968 = vld [vmem:[#allocation6 + $0x38] sm:$0xff]
          %v2969 = vld [vmem:[#allocation6 + $0x40] sm:$0xff]
          %v2970 = vld [vmem:[#allocation6 + $0x48] sm:$0xff]
          %v2971 = vld [vmem:[#allocation6 + $0x50] sm:$0xff]
          %v2972 = vld [vmem:[#allocation6 + $0x58] sm:$0xff]
          %v2973 = vld [vmem:[#allocation6 + $0x60] sm:$0xff]
          %v2974 = vld [vmem:[#allocation6 + $0x68] sm:$0xff]
          %v2975 = vld [vmem:[#allocation6 + $0x70] sm:$0xff]
          %v2976 = vld [vmem:[#allocation6 + $0x78] sm:$0xff]
          %v2977 = vld [vmem:[#allocation6 + $0x80] sm:$0xff]
          %v2978 = vld [vmem:[#allocation6 + $0x88] sm:$0xff]
          %v2979 = vld [vmem:[#allocation6 + $0x90] sm:$0xff]
          %v2980 = vld [vmem:[#allocation6 + $0x98] sm:$0xff]
          %v2981 = vld [vmem:[#allocation6 + $0xa0] sm:$0xff]
          %v2982 = vld [vmem:[#allocation6 + $0xa8] sm:$0xff]
          %v2983 = vld [vmem:[#allocation6 + $0xb0] sm:$0xff]
          %v2984 = vld [vmem:[#allocation6 + $0xb8] sm:$0xff]
          %v2985 = vld [vmem:[#allocation6 + $0xc0] sm:$0xff]
          %v2986 = vld [vmem:[#allocation6 + $0xc8] sm:$0xff]
          %v2987 = vld [vmem:[#allocation6 + $0xd0] sm:$0xff]
          %v2988 = vld [vmem:[#allocation6 + $0xd8] sm:$0xff]
          %v2989 = vld [vmem:[#allocation6 + $0xe0] sm:$0xff]
          %v2990 = vld [vmem:[#allocation6 + $0xe8] sm:$0xff]
          %v2991 = vld [vmem:[#allocation6 + $0xf0] sm:$0xff]
          %v2992 = vld [vmem:[#allocation6 + $0xf8] sm:$0xff]
          %v2993 = vld [vmem:[#allocation6 + $0x100] sm:$0xff]
          %v2994 = vld [vmem:[#allocation6 + $0x108] sm:$0xff]
          %v2995 = vld [vmem:[#allocation6 + $0x110] sm:$0xff]
          %v2996 = vld [vmem:[#allocation6 + $0x118] sm:$0xff]
          %v2997 = vld [vmem:[#allocation6 + $0x120] sm:$0xff]
          %v2998 = vld [vmem:[#allocation6 + $0x128] sm:$0xff]
          %v2999 = vld [vmem:[#allocation6 + $0x130] sm:$0xff]
          %v3000 = vld [vmem:[#allocation6 + $0x138] sm:$0xff]
          %v3001 = vld [vmem:[#allocation6 + $0x140] sm:$0xff]
          %v3002 = vld [vmem:[#allocation6 + $0x148] sm:$0xff]
          %v3003 = vld [vmem:[#allocation6 + $0x150] sm:$0xff]
          %v3004 = vld [vmem:[#allocation6 + $0x158] sm:$0xff]
          %v3005 = vld [vmem:[#allocation6 + $0x160] sm:$0xff]
          %v3006 = vld [vmem:[#allocation6 + $0x168] sm:$0xff]
          %v3007 = vld [vmem:[#allocation6 + $0x170] sm:$0xff]
          %v3008 = vld [vmem:[#allocation6 + $0x178] sm:$0xff]
          %v3009 = vld [vmem:[#allocation6 + $0x180] sm:$0xff]
          %v3010 = vld [vmem:[#allocation6 + $0x188] sm:$0xff]
          %v3011 = vld [vmem:[#allocation6 + $0x190] sm:$0xff]
          %v3012 = vld [vmem:[#allocation6 + $0x198] sm:$0xff]
          %v3013 = vld [vmem:[#allocation6 + $0x1a0] sm:$0xff]
          %v3014 = vld [vmem:[#allocation6 + $0x1a8] sm:$0xff]
          %v3015 = vld [vmem:[#allocation6 + $0x1b0] sm:$0xff]
          %v3016 = vld [vmem:[#allocation6 + $0x1b8] sm:$0xff]
          %v3017 = vld [vmem:[#allocation6 + $0x1c0] sm:$0xff]
          %v3018 = vld [vmem:[#allocation6 + $0x1c8] sm:$0xff]
          %v3019 = vld [vmem:[#allocation6 + $0x1d0] sm:$0xff]
          %v3020 = vld [vmem:[#allocation6 + $0x1d8] sm:$0xff]
          %v3021 = vld [vmem:[#allocation6 + $0x1e0] sm:$0xff]
          %v3022 = vld [vmem:[#allocation6 + $0x1e8] sm:$0xff]
          %v3023 = vld [vmem:[#allocation6 + $0x1f0] sm:$0xff]
          %v3024 = vld [vmem:[#allocation6 + $0x1f8] sm:$0xff]
          %v3025 = vld [vmem:[#allocation6 + $0x200] sm:$0xff]
          %v3026 = vld [vmem:[#allocation6 + $0x208] sm:$0xff]
          %v3027 = vld [vmem:[#allocation6 + $0x210] sm:$0xff]
          %v3028 = vld [vmem:[#allocation6 + $0x218] sm:$0xff]
          %v3029 = vld [vmem:[#allocation6 + $0x220] sm:$0xff]
          %v3030 = vld [vmem:[#allocation6 + $0x228] sm:$0xff]
          %v3031 = vld [vmem:[#allocation6 + $0x230] sm:$0xff]
          %v3032 = vld [vmem:[#allocation6 + $0x238] sm:$0xff]
          %v3033 = vld [vmem:[#allocation6 + $0x240] sm:$0xff]
          %v3034 = vld [vmem:[#allocation6 + $0x248] sm:$0xff]
          %v3035 = vld [vmem:[#allocation6 + $0x250] sm:$0xff]
          %v3036 = vld [vmem:[#allocation6 + $0x258] sm:$0xff]
          %v3037 = vld [vmem:[#allocation6 + $0x260] sm:$0xff]
          %v3038 = vld [vmem:[#allocation6 + $0x268] sm:$0xff]
          %v3039 = vld [vmem:[#allocation6 + $0x270] sm:$0xff]
          %v3040 = vld [vmem:[#allocation6 + $0x278] sm:$0xff]
          %v3041 = vld [vmem:[#allocation6 + $0x280] sm:$0xff]
          %v3042 = vld [vmem:[#allocation6 + $0x288] sm:$0xff]
          %v3043 = vld [vmem:[#allocation6 + $0x290] sm:$0xff]
          %v3044 = vld [vmem:[#allocation6 + $0x298] sm:$0xff]
          %v3045 = vld [vmem:[#allocation6 + $0x2a0] sm:$0xff]
          %v3046 = vld [vmem:[#allocation6 + $0x2a8] sm:$0xff]
          %v3047 = vld [vmem:[#allocation6 + $0x2b0] sm:$0xff]
          %v3048 = vld [vmem:[#allocation6 + $0x2b8] sm:$0xff]
          %v3049 = vld [vmem:[#allocation6 + $0x2c0] sm:$0xff]
          %v3050 = vld [vmem:[#allocation6 + $0x2c8] sm:$0xff]
          %v3051 = vld [vmem:[#allocation6 + $0x2d0] sm:$0xff]
          %v3052 = vld [vmem:[#allocation6 + $0x2d8] sm:$0xff]
          %v3053 = vld [vmem:[#allocation6 + $0x2e0] sm:$0xff]
          %v3054 = vld [vmem:[#allocation6 + $0x2e8] sm:$0xff]
          %v3055 = vld [vmem:[#allocation6 + $0x2f0] sm:$0xff]
          %v3056 = vld [vmem:[#allocation6 + $0x2f8] sm:$0xff]
          %v3057 = vld [vmem:[#allocation6 + $0x300] sm:$0xff]
          %v3058 = vld [vmem:[#allocation6 + $0x308] sm:$0xff]
          %v3059 = vld [vmem:[#allocation6 + $0x310] sm:$0xff]
          %v3060 = vld [vmem:[#allocation6 + $0x318] sm:$0xff]
          %v3061 = vld [vmem:[#allocation6 + $0x320] sm:$0xff]
          %v3062 = vld [vmem:[#allocation6 + $0x328] sm:$0xff]
          %v3063 = vld [vmem:[#allocation6 + $0x330] sm:$0xff]
          %v3064 = vld [vmem:[#allocation6 + $0x338] sm:$0xff]
          %v3065 = vld [vmem:[#allocation6 + $0x340] sm:$0xff]
          %v3066 = vld [vmem:[#allocation6 + $0x348] sm:$0xff]
          %v3067 = vld [vmem:[#allocation6 + $0x350] sm:$0xff]
          %v3068 = vld [vmem:[#allocation6 + $0x358] sm:$0xff]
          %v3069 = vld [vmem:[#allocation6 + $0x360] sm:$0xff]
          %v3070 = vld [vmem:[#allocation6 + $0x368] sm:$0xff]
          %v3071 = vld [vmem:[#allocation6 + $0x370] sm:$0xff]
          %v3072 = vld [vmem:[#allocation6 + $0x378] sm:$0xff]
          %v3073 = vld [vmem:[#allocation6 + $0x380] sm:$0xff]
          %v3074 = vld [vmem:[#allocation6 + $0x388] sm:$0xff]
          %v3075 = vld [vmem:[#allocation6 + $0x390] sm:$0xff]
          %v3076 = vld [vmem:[#allocation6 + $0x398] sm:$0xff]
          %v3077 = vld [vmem:[#allocation6 + $0x3a0] sm:$0xff]
          %v3078 = vld [vmem:[#allocation6 + $0x3a8] sm:$0xff]
          %v3079 = vld [vmem:[#allocation6 + $0x3b0] sm:$0xff]
          %v3080 = vld [vmem:[#allocation6 + $0x3b8] sm:$0xff]
          %v3081 = vld [vmem:[#allocation6 + $0x3c0] sm:$0xff]
          %v3082 = vld [vmem:[#allocation6 + $0x3c8] sm:$0xff]
          %v3083 = vld [vmem:[#allocation6 + $0x3d0] sm:$0xff]
          %v3084 = vld [vmem:[#allocation6 + $0x3d8] sm:$0xff]
          %v3085 = vld [vmem:[#allocation6 + $0x3e0] sm:$0xff]
          %v3086 = vld [vmem:[#allocation6 + $0x3e8] sm:$0xff]
          %v3087 = vld [vmem:[#allocation6 + $0x3f0] sm:$0xff]
          %v3088 = vld [vmem:[#allocation6 + $0x3f8] sm:$0xff]
          %v3089 = vld [vmem:[%s10] sm:$0x3]
          %v3091 = vlaneseq
          %v3092 = vshrl.u32 %v3091, 7
          %v3093 = vsub.s32 0, %v3092
          %v3094 = vrot.slane %v2960, %v3093
          %v3095 = vlaneseq
          %v3096 = vshrl.u32 %v3095, 7
          %v3097 = vsub.s32 1, %v3096
          %v3098 = vrot.slane %v2960, %v3097
          %v3099 = vlaneseq
          %v3100 = vshrl.u32 %v3099, 7
          %v3101 = vsub.s32 2, %v3100
          %v3102 = vrot.slane %v2960, %v3101
          %v3103 = vlaneseq
          %v3104 = vshrl.u32 %v3103, 7
          %v3105 = vsub.s32 3, %v3104
          %v3106 = vrot.slane %v2960, %v3105
          %v3112 = vlaneseq
          %v3113 = vshrl.u32 %v3112, 7
          %v3114 = vsub.s32 0, %v3113
          %v3115 = vrot.slane %v3089, %v3114
          %v3116 = vlaneseq
          %v3117 = vshrl.u32 %v3116, 7
          %v3118 = vsub.s32 1, %v3117
          %v3119 = vrot.slane %v3089, %v3118
          %3122 = vmatprep.subr.mxu0 %v2962
          %3123 = vmatpush1.msra.mxu0 %v2961
          %3124 = vmatprep.subr.mxu0 %v2964
          %3125 = vmatpush1.msra.mxu0 %v2963
          %3126 = vmatprep.subr.mxu0 %v2966
          %3127 = vmatpush1.msra.mxu0 %v2965
          %3128 = vmatprep.subr.mxu0 %v2968
          %3129 = vmatpush1.msra.mxu0 %v2967
          %3130 = vmatprep.subr.mxu0 %v2970
          %3131 = vmatpush1.msra.mxu0 %v2969
          %3132 = vmatprep.subr.mxu0 %v2972
          %3133 = vmatpush1.msra.mxu0 %v2971
          %3134 = vmatprep.subr.mxu0 %v2974
          %3135 = vmatpush1.msra.mxu0 %v2973
          %3136 = vmatprep.subr.mxu0 %v2976
          %3137 = vmatpush1.msra.mxu0 %v2975
          %3138 = vmatprep.subr.mxu0 %v2978
          %3139 = vmatpush1.msra.mxu0 %v2977
          %3140 = vmatprep.subr.mxu0 %v2980
          %3141 = vmatpush1.msra.mxu0 %v2979
          %3142 = vmatprep.subr.mxu0 %v2982
          %3143 = vmatpush1.msra.mxu0 %v2981
          %3144 = vmatprep.subr.mxu0 %v2984
          %3145 = vmatpush1.msra.mxu0 %v2983
          %3146 = vmatprep.subr.mxu0 %v2986
          %3147 = vmatpush1.msra.mxu0 %v2985
          %3148 = vmatprep.subr.mxu0 %v2988
          %3149 = vmatpush1.msra.mxu0 %v2987
          %3150 = vmatprep.subr.mxu0 %v2990
          %3151 = vmatpush1.msra.mxu0 %v2989
          %3152 = vmatprep.subr.mxu0 %v2992
          %3153 = vmatpush1.msra.mxu0 %v2991
          %3154 = vmatprep.subr.mxu0 %v2994
          %3155 = vmatpush1.msra.mxu0 %v2993
          %3156 = vmatprep.subr.mxu0 %v2996
          %3157 = vmatpush1.msra.mxu0 %v2995
          %3158 = vmatprep.subr.mxu0 %v2998
          %3159 = vmatpush1.msra.mxu0 %v2997
          %3160 = vmatprep.subr.mxu0 %v3000
          %3161 = vmatpush1.msra.mxu0 %v2999
          %3162 = vmatprep.subr.mxu0 %v3002
          %3163 = vmatpush1.msra.mxu0 %v3001
          %3164 = vmatprep.subr.mxu0 %v3004
          %3165 = vmatpush1.msra.mxu0 %v3003
          %3166 = vmatprep.subr.mxu0 %v3006
          %3167 = vmatpush1.msra.mxu0 %v3005
          %3168 = vmatprep.subr.mxu0 %v3008
          %3169 = vmatpush1.msra.mxu0 %v3007
          %3170 = vmatprep.subr.mxu0 %v3010
          %3171 = vmatpush1.msra.mxu0 %v3009
          %3172 = vmatprep.subr.mxu0 %v3012
          %3173 = vmatpush1.msra.mxu0 %v3011
          %3174 = vmatprep.subr.mxu0 %v3014
          %3175 = vmatpush1.msra.mxu0 %v3013
          %3176 = vmatprep.subr.mxu0 %v3016
          %3177 = vmatpush1.msra.mxu0 %v3015
          %3178 = vmatprep.subr.mxu0 %v3018
          %3179 = vmatpush1.msra.mxu0 %v3017
          %3180 = vmatprep.subr.mxu0 %v3020
          %3181 = vmatpush1.msra.mxu0 %v3019
          %3182 = vmatprep.subr.mxu0 %v3022
          %3183 = vmatpush1.msra.mxu0 %v3021
          %3184 = vmatprep.subr.mxu0 %v3024
          %3185 = vmatpush1.msra.mxu0 %v3023
          %3186 = vmatprep.mubr.f32.mxu0 %v3098
          %3187 = vmatmul.mubr.f32.gmra.mrb[0].mxu0 %v3094
          %v3188 = vpop.f32.mrb[0].mxu0
          %v3189 = vadd.f32 %v3115, %v3188
          %v3190 = vpop.f32.mrb[0].mxu0
          %v3191 = vadd.f32 %v3119, %v3190
          %3192 = vdwg.mxu0
          %3193 = vmatprep.subr.mxu0 %v3026
          %3194 = vmatpush1.msra.mxu0 %v3025
          %3195 = vmatprep.subr.mxu0 %v3028
          %3196 = vmatpush1.msra.mxu0 %v3027
          %3197 = vmatprep.subr.mxu0 %v3030
          %3198 = vmatpush1.msra.mxu0 %v3029
          %3199 = vmatprep.subr.mxu0 %v3032
          %3200 = vmatpush1.msra.mxu0 %v3031
          %3201 = vmatprep.subr.mxu0 %v3034
          %3202 = vmatpush1.msra.mxu0 %v3033
          %3203 = vmatprep.subr.mxu0 %v3036
          %3204 = vmatpush1.msra.mxu0 %v3035
          %3205 = vmatprep.subr.mxu0 %v3038
          %3206 = vmatpush1.msra.mxu0 %v3037
          %3207 = vmatprep.subr.mxu0 %v3040
          %3208 = vmatpush1.msra.mxu0 %v3039
          %3209 = vmatprep.subr.mxu0 %v3042
          %3210 = vmatpush1.msra.mxu0 %v3041
          %3211 = vmatprep.subr.mxu0 %v3044
          %3212 = vmatpush1.msra.mxu0 %v3043
          %3213 = vmatprep.subr.mxu0 %v3046
          %3214 = vmatpush1.msra.mxu0 %v3045
          %3215 = vmatprep.subr.mxu0 %v3048
          %3216 = vmatpush1.msra.mxu0 %v3047
          %3217 = vmatprep.subr.mxu0 %v3050
          %3218 = vmatpush1.msra.mxu0 %v3049
          %3219 = vmatprep.subr.mxu0 %v3052
          %3220 = vmatpush1.msra.mxu0 %v3051
          %3221 = vmatprep.subr.mxu0 %v3054
          %3222 = vmatpush1.msra.mxu0 %v3053
          %3223 = vmatprep.subr.mxu0 %v3056
          %3224 = vmatpush1.msra.mxu0 %v3055
          %3225 = vmatprep.subr.mxu0 %v3058
          %3226 = vmatpush1.msra.mxu0 %v3057
          %3227 = vmatprep.subr.mxu0 %v3060
          %3228 = vmatpush1.msra.mxu0 %v3059
          %3229 = vmatprep.subr.mxu0 %v3062
          %3230 = vmatpush1.msra.mxu0 %v3061
          %3231 = vmatprep.subr.mxu0 %v3064
          %3232 = vmatpush1.msra.mxu0 %v3063
          %3233 = vmatprep.subr.mxu0 %v3066
          %3234 = vmatpush1.msra.mxu0 %v3065
          %3235 = vmatprep.subr.mxu0 %v3068
          %3236 = vmatpush1.msra.mxu0 %v3067
          %3237 = vmatprep.subr.mxu0 %v3070
          %3238 = vmatpush1.msra.mxu0 %v3069
          %3239 = vmatprep.subr.mxu0 %v3072
          %3240 = vmatpush1.msra.mxu0 %v3071
          %3241 = vmatprep.subr.mxu0 %v3074
          %3242 = vmatpush1.msra.mxu0 %v3073
          %3243 = vmatprep.subr.mxu0 %v3076
          %3244 = vmatpush1.msra.mxu0 %v3075
          %3245 = vmatprep.subr.mxu0 %v3078
          %3246 = vmatpush1.msra.mxu0 %v3077
          %3247 = vmatprep.subr.mxu0 %v3080
          %3248 = vmatpush1.msra.mxu0 %v3079
          %3249 = vmatprep.subr.mxu0 %v3082
          %3250 = vmatpush1.msra.mxu0 %v3081
          %3251 = vmatprep.subr.mxu0 %v3084
          %3252 = vmatpush1.msra.mxu0 %v3083
          %3253 = vmatprep.subr.mxu0 %v3086
          %3254 = vmatpush1.msra.mxu0 %v3085
          %3255 = vmatprep.subr.mxu0 %v3088
          %3256 = vmatpush1.msra.mxu0 %v3087
          %3257 = vmatprep.mubr.f32.mxu0 %v3106
          %3258 = vmatmul.mubr.f32.gmra.mrb[0].mxu0 %v3102
          %v3259 = vpop.f32.mrb[0].mxu0
          %v3260 = vadd.f32 %v3189, %v3259
          %v3261 = vpop.f32.mrb[0].mxu0
          %v3262 = vadd.f32 %v3191, %v3261
          %3263 = vdwg.mxu0
          %v3264 = vmul.f32 %v3260, 0.01
          %v3265 = vmul.f32 %v3262, 0.01
          %v3266 = vmax.f32 %v3260, %v3264
          %v3267 = vmax.f32 %v3262, %v3265
          %v3268 = vld [vmem:[%s11] sm:$0xff]
          %v3269 = vld [vmem:[%s11 + $0x8] sm:$0xff]
          %v3270 = vld [vmem:[%s11 + $0x10] sm:$0xff]
          %v3271 = vld [vmem:[%s11 + $0x18] sm:$0xff]
          %v3272 = vld [vmem:[%s11 + $0x20] sm:$0xff]
          %v3273 = vld [vmem:[%s11 + $0x28] sm:$0xff]
          %v3274 = vld [vmem:[%s11 + $0x30] sm:$0xff]
          %v3275 = vld [vmem:[%s11 + $0x38] sm:$0xff]
          %v3276 = vld [vmem:[%s11 + $0x40] sm:$0xff]
          %v3277 = vld [vmem:[%s11 + $0x48] sm:$0xff]
          %v3278 = vld [vmem:[%s11 + $0x50] sm:$0xff]
          %v3279 = vld [vmem:[%s11 + $0x58] sm:$0xff]
          %v3280 = vld [vmem:[%s11 + $0x60] sm:$0xff]
          %v3281 = vld [vmem:[%s11 + $0x68] sm:$0xff]
          %v3282 = vld [vmem:[%s11 + $0x70] sm:$0xff]
          %v3283 = vld [vmem:[%s11 + $0x78] sm:$0xff]
          %v3284 = vld [vmem:[%s11 + $0x80] sm:$0xff]
          %v3285 = vld [vmem:[%s11 + $0x88] sm:$0xff]
          %v3286 = vld [vmem:[%s11 + $0x90] sm:$0xff]
          %v3287 = vld [vmem:[%s11 + $0x98] sm:$0xff]
          %v3288 = vld [vmem:[%s11 + $0xa0] sm:$0xff]
          %v3289 = vld [vmem:[%s11 + $0xa8] sm:$0xff]
          %v3290 = vld [vmem:[%s11 + $0xb0] sm:$0xff]
          %v3291 = vld [vmem:[%s11 + $0xb8] sm:$0xff]
          %v3292 = vld [vmem:[%s11 + $0xc0] sm:$0xff]
          %v3293 = vld [vmem:[%s11 + $0xc8] sm:$0xff]
          %v3294 = vld [vmem:[%s11 + $0xd0] sm:$0xff]
          %v3295 = vld [vmem:[%s11 + $0xd8] sm:$0xff]
          %v3296 = vld [vmem:[%s11 + $0xe0] sm:$0xff]
          %v3297 = vld [vmem:[%s11 + $0xe8] sm:$0xff]
          %v3298 = vld [vmem:[%s11 + $0xf0] sm:$0xff]
          %v3299 = vld [vmem:[%s11 + $0xf8] sm:$0xff]
          %v3300 = vld [vmem:[%s12] sm:$0x1]
          %3301 = vmatprep.subr.mxu0 0.0
          %3302 = vmatpush1.msra.mxu0 %v3268
          %3303 = vmatprep.subr.mxu0 0.0
          %3304 = vmatpush1.msra.mxu0 %v3269
          %3305 = vmatprep.subr.mxu0 0.0
          %3306 = vmatpush1.msra.mxu0 %v3270
          %3307 = vmatprep.subr.mxu0 0.0
          %3308 = vmatpush1.msra.mxu0 %v3271
          %3309 = vmatprep.subr.mxu0 0.0
          %3310 = vmatpush1.msra.mxu0 %v3272
          %3311 = vmatprep.subr.mxu0 0.0
          %3312 = vmatpush1.msra.mxu0 %v3273
          %3313 = vmatprep.subr.mxu0 0.0
          %3314 = vmatpush1.msra.mxu0 %v3274
          %3315 = vmatprep.subr.mxu0 0.0
          %3316 = vmatpush1.msra.mxu0 %v3275
          %3317 = vmatprep.subr.mxu0 0.0
          %3318 = vmatpush1.msra.mxu0 %v3276
          %3319 = vmatprep.subr.mxu0 0.0
          %3320 = vmatpush1.msra.mxu0 %v3277
          %3321 = vmatprep.subr.mxu0 0.0
          %3322 = vmatpush1.msra.mxu0 %v3278
          %3323 = vmatprep.subr.mxu0 0.0
          %3324 = vmatpush1.msra.mxu0 %v3279
          %3325 = vmatprep.subr.mxu0 0.0
          %3326 = vmatpush1.msra.mxu0 %v3280
          %3327 = vmatprep.subr.mxu0 0.0
          %3328 = vmatpush1.msra.mxu0 %v3281
          %3329 = vmatprep.subr.mxu0 0.0
          %3330 = vmatpush1.msra.mxu0 %v3282
          %3331 = vmatprep.subr.mxu0 0.0
          %3332 = vmatpush1.msra.mxu0 %v3283
          %3333 = vmatprep.subr.mxu0 0.0
          %3334 = vmatpush1.msra.mxu0 %v3284
          %3335 = vmatprep.subr.mxu0 0.0
          %3336 = vmatpush1.msra.mxu0 %v3285
          %3337 = vmatprep.subr.mxu0 0.0
          %3338 = vmatpush1.msra.mxu0 %v3286
          %3339 = vmatprep.subr.mxu0 0.0
          %3340 = vmatpush1.msra.mxu0 %v3287
          %3341 = vmatprep.subr.mxu0 0.0
          %3342 = vmatpush1.msra.mxu0 %v3288
          %3343 = vmatprep.subr.mxu0 0.0
          %3344 = vmatpush1.msra.mxu0 %v3289
          %3345 = vmatprep.subr.mxu0 0.0
          %3346 = vmatpush1.msra.mxu0 %v3290
          %3347 = vmatprep.subr.mxu0 0.0
          %3348 = vmatpush1.msra.mxu0 %v3291
          %3349 = vmatprep.subr.mxu0 0.0
          %3350 = vmatpush1.msra.mxu0 %v3292
          %3351 = vmatprep.subr.mxu0 0.0
          %3352 = vmatpush1.msra.mxu0 %v3293
          %3353 = vmatprep.subr.mxu0 0.0
          %3354 = vmatpush1.msra.mxu0 %v3294
          %3355 = vmatprep.subr.mxu0 0.0
          %3356 = vmatpush1.msra.mxu0 %v3295
          %3357 = vmatprep.subr.mxu0 0.0
          %3358 = vmatpush1.msra.mxu0 %v3296
          %3359 = vmatprep.subr.mxu0 0.0
          %3360 = vmatpush1.msra.mxu0 %v3297
          %3361 = vmatprep.subr.mxu0 0.0
          %3362 = vmatpush1.msra.mxu0 %v3298
          %3363 = vmatprep.subr.mxu0 0.0
          %3364 = vmatpush1.msra.mxu0 %v3299
          %3365 = vmatprep.mubr.f32.mxu0 %v3267
          %3366 = vmatmul.mubr.f32.gmra.mrb[0].mxu0 %v3266
          %v3367 = vpop.f32.mrb[0].mxu0
          %v3368 = vadd.f32 %v3300, %v3367
          %v3369 = vpop.f32.mrb[0].mxu0
          %3370 = vdwg.mxu0
          %v3371 = vmul.f32 %v3368, 0.01
          %v3372 = vmax.f32 %v3368, %v3371
          %v3373 = vld [vmem:[%s13] sm:$0x1]
          %v3374 = vmul.f32 %v3372, %v3373
          %vm3375 = vcmask 516096
          %v3376 = vsel %vm3375, %v3374, 0.0
          %3377 = vadd.xlane.f32.xlu0 %v3376
          %v3378 = vpop.xlane.xlu0 %3377
          %v3379 = vld [vmem:[#allocation3] sm:$0x1]
          %v3380 = vadd.f32 %v3378, %v3379
          %vm3381 = vcmask 0
          %3382 = vst.msk [vmem:[%s550] sm:$0x1] %vm3381, %v3380
        $region100: #{tpu_custom_call.1} parent=79 // pred_fallthru
          _
        %p3383 = scmp.lt.s32.totalorder %s34, 1
        %s3384 = scalar_select %p3383, %s34, 1
        %s3385 = scalar_lea.vmem %s15, %s3384
        // Predicated region
        $region101: #{tpu_custom_call.1} parent=79 // pred_check
          %p3386 = pneg %p382
        $region102: #{tpu_custom_call.1} parent=79 // pred_check_branch
          %3388 = sbr.rel (%p3386) target = $region104
        $region103: #{tpu_custom_call.1} parent=79 // pred_region
          _
        $region104: #{tpu_custom_call.1} parent=79 // pred_fallthru
          _
      $region80: #{tpu_custom_call.1} parent=5 // pred_fallthru
        _
      %p3389 = scmp.le.s32.totalorder 2, %s25
      // Predicated region
      $region105: #{tpu_custom_call.1} parent=5 // pred_check
        %p3390 = pneg %p3389
      $region106: #{tpu_custom_call.1} parent=5 // pred_check_branch
        %3392 = sbr.rel (%p3390) target = $region108
      $region107: #{tpu_custom_call.1} parent=5 // pred_region
        %s3393 = ssub.s32 %s25, 2
        // Predicated region
        $region109: #{tpu_custom_call.1} parent=107 // pred_check
          %p3394 = pneg %p388
        $region110: #{tpu_custom_call.1} parent=107 // pred_check_branch
          %3396 = sbr.rel (%p3394) target = $region112
        $region111: #{tpu_custom_call.1} parent=107 // pred_region
          %p3397 = scmp.lt.s32.totalorder %s36, 1
          %s3398 = scalar_select %p3397, %s36, 1
          %s3399 = scalar_lea.vmem %s15, %s3398
        $region112: #{tpu_custom_call.1} parent=107 // pred_fallthru
          _
      $region108: #{tpu_custom_call.1} parent=5 // pred_fallthru
        _
    $region6: #{tpu_custom_call.1} parent=1 // loop_footer
      %s29 = sadd.s32 1, %s25
    $region7: #{tpu_custom_call.1} parent=1 // loop_footer_branch
      %24 = sbr.rel target = $region3
    $region8: #{tpu_custom_call.1} parent=1 // loop_exit
      _
    %3400 = vsyncpa [#allocation5], 1
    %s3401 = scalar_lea.sflag [#allocation5], 1
    %3402 = vsyncpa %s3401, 1
    %3403 = vsyncpa [#allocation7], 1

</llo_original>
